<compile_context>
chip_gen: v7x
topology: tpu7x:2x2x1
jax: 0.10.0
libtpu: 0.0.40
codegen_flags: <defaults>
</compile_context>

<pallas_src>
import numpy as np
import jax
import jax.numpy as jnp
from jax.experimental import pallas as pl
from jax.experimental.pallas import tpu as pltpu


IMG_HW = 28
IMG_FLAT = IMG_HW * IMG_HW        # 784 pixels per image
POOL_HW = 8                       # pooled spatial size (28 -> 26 -> 8)
POOL_POS = POOL_HW * POOL_HW      # 64 pooled positions per image
N_POOL_OFF = 9                    # 3x3 pool-window offsets
FEAT = 192                        # 3 channels * 64 pooled positions (NCHW)
NUM_CLASSES = 10


# ---------------------------------------------------------------------------
# Fused kernel: conv(1->3,3x3) + maxpool(3,3) + bias + ReLU + fc + log_softmax
#   img_ref : (TILE_N, 784)    bf16 raw image rows
#   wc_ref  : (9, 784, 192)    bf16 folded conv weight (one slab / pool offset)
#   bc_ref  : (1, 192)         f32  conv bias broadcast to NCHW feature order
#   wf_ref  : (192, 10)        bf16 fc weight (transposed)
#   bf_ref  : (1, 10)          f32  fc bias
#   o_ref   : (TILE_N, 10)     f32  log-probabilities
# ---------------------------------------------------------------------------
def fused_convnet_kernel(img_ref, wc_ref, bc_ref, wf_ref, bf_ref, o_ref):
    img = img_ref[...]                                      # load once, reuse 9x

    # 3x3/3 max-pool of the conv output == elementwise max over the 9
    # pool-offset matmuls (bf16 inputs, f32 accumulation on the MXU).
    acc = jnp.dot(img, wc_ref[0], preferred_element_type=jnp.float32)
    for p in range(1, N_POOL_OFF):
        acc = jnp.maximum(
            acc, jnp.dot(img, wc_ref[p], preferred_element_type=jnp.float32))

    # Bias is identical for every pool offset and ReLU is monotone, so
    # bias-add + ReLU commute past the max.  feat is already in torch's
    # NCHW view(-1, 192) order (c*64 + h*8 + w) -- no concat / reshape needed.
    feat = jnp.maximum(acc + bc_ref[...], 0.0)              # (TILE_N, 192) f32

    logits = jnp.dot(feat.astype(jnp.bfloat16), wf_ref[...],
                     preferred_element_type=jnp.float32) + bf_ref[...]
    m = jnp.max(logits, axis=-1, keepdims=True)
    s = logits - m
    lse = jnp.log(jnp.sum(jnp.exp(s), axis=-1, keepdims=True))
    o_ref[...] = s - lse


# ---------------------------------------------------------------------------
# Host-side glue
# ---------------------------------------------------------------------------
def _build_folded_weights(conv_w, conv_b):
    """Fold im2col + pool-offset expansion into the conv weight.

    Returns W (9, 784, 192) bf16 where W[p, pix, c*64 + ph*8 + pw] is the conv
    tap hitting input pixel `pix` for channel c, pooled position (ph, pw) and
    pool-window offset p = di*3 + dj, plus the per-feature bias (1, 192) f32.
    """
    w = np.asarray(conv_w, dtype=np.float32)                # (3, 1, 3, 3)
    b = np.asarray(conv_b, dtype=np.float32)                # (3,)
    W = np.zeros((N_POOL_OFF, IMG_FLAT, FEAT), dtype=np.float32)
    for di in range(3):                  # pool-window row offset
        for dj in range(3):              # pool-window col offset
            p = di * 3 + dj
            for c in range(3):           # output channel
                for ph in range(POOL_HW):
                    for pw in range(POOL_HW):
                        col = c * POOL_POS + ph * POOL_HW + pw
                        for ki in range(3):      # conv tap row
                            for kj in range(3):  # conv tap col
                                r0 = ph * 3 + di + ki
                                c0 = pw * 3 + dj + kj
                                W[p, r0 * IMG_HW + c0, col] += w[c, 0, ki, kj]
    b_feat = np.repeat(b, POOL_POS)[None, :]                # (1, 192)
    return jnp.asarray(W, jnp.bfloat16), jnp.asarray(b_feat, jnp.float32)


def _round_up(x, m):
    return ((x + m - 1) // m) * m


def convnet_forward(x_nchw, conv_w, conv_b, fc_w, fc_b, *, tile_n=512):
    n = x_nchw.shape[0]
    # Cap the tile so the grid has >= ~4 steps whenever the batch allows it
    # (shards the "parallel" axis across both v7x TensorCores and keeps the
    # pipeline fed), while staying sublane-aligned (multiple of 8 rows).
    tile_n = max(8, min(tile_n, _round_up(pl.cdiv(n, 4), 8)))
    n_pad = _round_up(n, tile_n)
    grid = n_pad // tile_n

    # Minimal HBM traffic: raw bf16 image rows (no host-side im2col pass).
    imgs = x_nchw[:, 0, :, :].reshape(n, IMG_FLAT).astype(jnp.bfloat16)
    if n_pad != n:
        imgs = jnp.pad(imgs, ((0, n_pad - n), (0, 0)))

    W_fold, b_feat = _build_folded_weights(conv_w, conv_b)
    wf = jnp.asarray(fc_w, jnp.float32).T.astype(jnp.bfloat16)   # (192, 10)
    bf = jnp.asarray(fc_b, jnp.float32).reshape(1, NUM_CLASSES)

    flops = int(2 * n_pad * IMG_FLAT * FEAT * N_POOL_OFF
                + 2 * n_pad * FEAT * NUM_CLASSES)
    bytes_accessed = int(imgs.nbytes + W_fold.nbytes + b_feat.nbytes
                         + wf.nbytes + bf.nbytes
                         + n_pad * NUM_CLASSES * 4)

    out = pl.pallas_call(
        fused_convnet_kernel,
        out_shape=jax.ShapeDtypeStruct((n_pad, NUM_CLASSES), jnp.float32),
        grid=(grid,),
        in_specs=[
            pl.BlockSpec((tile_n, IMG_FLAT), lambda i: (i, 0)),
            pl.BlockSpec((N_POOL_OFF, IMG_FLAT, FEAT), lambda i: (0, 0, 0)),
            pl.BlockSpec((1, FEAT), lambda i: (0, 0)),
            pl.BlockSpec((FEAT, NUM_CLASSES), lambda i: (0, 0)),
            pl.BlockSpec((1, NUM_CLASSES), lambda i: (0, 0)),
        ],
        out_specs=pl.BlockSpec((tile_n, NUM_CLASSES), lambda i: (i, 0)),
        compiler_params=pltpu.CompilerParams(
            dimension_semantics=("parallel",),
            # ~8 MiB actual footprint: safe on v7x's 64 MiB and v5e/v6e's 128.
            vmem_limit_bytes=32 * 1024 * 1024,
        ),
        cost_estimate=pl.CostEstimate(
            flops=flops,
            transcendentals=int(n_pad * (NUM_CLASSES + 1)),
            bytes_accessed=bytes_accessed,
        ),
    )(imgs, W_fold, b_feat, wf, bf)

    return out[:n]


def reference_forward(x, conv_w, conv_b, fc_w, fc_b):
    conv = jax.lax.conv_general_dilated(
        x, conv_w, (1, 1), "VALID",
        dimension_numbers=("NCHW", "OIHW", "NCHW"))
    conv = conv + conv_b[None, :, None, None]
    pooled = jax.lax.reduce_window(conv, -jnp.inf, jax.lax.max,
                                   (1, 1, 3, 3), (1, 1, 3, 3), "VALID")
    act = jnp.maximum(pooled, 0.0)
    feat = act.reshape(act.shape[0], -1)
    logits = feat @ fc_w.T + fc_b
    return jax.nn.log_softmax(logits, axis=1)


if __name__ == "__main__":
    key = jax.random.PRNGKey(0)
    k1, k2, k3, k4, k5 = jax.random.split(key, 5)

    # Deterministic synthetic parameters (shapes from ConvNet.__init__).
    conv_w = jax.random.normal(k1, (3, 1, 3, 3), jnp.float32) * 0.2
    conv_b = jax.random.normal(k2, (3,), jnp.float32) * 0.1
    fc_w = jax.random.normal(k3, (10, 192), jnp.float32) * 0.05
    fc_b = jax.random.normal(k4, (10,), jnp.float32) * 0.05

    # MNIST-like input; 28x28 is required by the hard-coded view(-1, 192).
    x = jax.random.normal(k5, (2, 1, 28, 28), jnp.float32)

    out = convnet_forward(x, conv_w, conv_b, fc_w, fc_b)
    out = jax.block_until_ready(out)
    ref = reference_forward(x, conv_w, conv_b, fc_w, fc_b)
    # Tolerance accounts for the bf16 image / folded-conv-weight / fc operands
    # (all matmuls accumulate in f32; softmax path is f32).
    np.testing.assert_allclose(np.asarray(out), np.asarray(ref),
                               atol=5e-2, rtol=5e-2)
    assert out.shape == (2, 10) and out.dtype == jnp.float32

    # Exercise a multi-tile grid with batch padding (n=20 -> tile_n=8, grid=3).
    x2 = jax.random.normal(jax.random.PRNGKey(7), (20, 1, 28, 28), jnp.float32)
    out2 = jax.block_until_ready(convnet_forward(x2, conv_w, conv_b, fc_w, fc_b))
    ref2 = reference_forward(x2, conv_w, conv_b, fc_w, fc_b)
    np.testing.assert_allclose(np.asarray(out2), np.asarray(ref2),
                               atol=5e-2, rtol=5e-2)
    assert out2.shape == (20, 10)

    print("KERNEL_OK")
</pallas_src>

<mosaic_0001>
module attributes {stable_mosaic.version = 11 : i64} {
  func.func @fused_convnet_kernel(%arg0: i32, %arg1: memref<8x784xbf16, #tpu.memory_space<vmem>>, %arg2: memref<9x784x192xbf16, #tpu.memory_space<vmem>>, %arg3: memref<1x192xf32, #tpu.memory_space<vmem>>, %arg4: memref<192x10xbf16, #tpu.memory_space<vmem>>, %arg5: memref<1x10xf32, #tpu.memory_space<vmem>>, %arg6: memref<8x10xf32, #tpu.memory_space<vmem>>) attributes {dimension_semantics = [#tpu.dimension_semantics<parallel>], iteration_bounds = array<i64: 1>, scalar_prefetch = 0 : i64, scratch_operands = 0 : i64, tpu.core_type = #tpu.core_type<tc>, window_params = [{transform_indices = @transform_0, window_bounds = array<i64: 8, 784>}, {pipeline_mode = #tpu.pipeline_mode<synchronous>, transform_indices = @transform_1, window_bounds = array<i64: 9, 784, 192>}, {pipeline_mode = #tpu.pipeline_mode<synchronous>, transform_indices = @transform_2, window_bounds = array<i64: 1, 192>}, {pipeline_mode = #tpu.pipeline_mode<synchronous>, transform_indices = @transform_3, window_bounds = array<i64: 192, 10>}, {pipeline_mode = #tpu.pipeline_mode<synchronous>, transform_indices = @transform_4, window_bounds = array<i64: 1, 10>}, {transform_indices = @transform_5, window_bounds = array<i64: 8, 10>}]} {
    %c0 = arith.constant 0 : index
    %c0_0 = arith.constant 0 : index
    %0 = vector.load %arg1[%c0, %c0_0] : memref<8x784xbf16, #tpu.memory_space<vmem>>, vector<8x784xbf16>
    %c0_1 = arith.constant 0 : index
    %c0_2 = arith.constant 0 : index
    %c0_3 = arith.constant 0 : index
    %1 = vector.load %arg2[%c0_1, %c0_2, %c0_3] : memref<9x784x192xbf16, #tpu.memory_space<vmem>>, vector<1x784x192xbf16>
    %2 = vector.shape_cast %1 : vector<1x784x192xbf16> to vector<784x192xbf16>
    %cst = arith.constant dense<0.000000e+00> : vector<8x192xf32>
    %3 = tpu.matmul %0, %2, %cst {dimension_numbers = #tpu.dot_dimension_numbers<[1], [0], [0], [1], [0, 0, 1, 1], [], []>} : vector<8x784xbf16>, vector<784x192xbf16>, vector<8x192xf32> -> vector<8x192xf32>
    %c1 = arith.constant 1 : index
    %c0_4 = arith.constant 0 : index
    %c0_5 = arith.constant 0 : index
    %4 = vector.load %arg2[%c1, %c0_4, %c0_5] : memref<9x784x192xbf16, #tpu.memory_space<vmem>>, vector<1x784x192xbf16>
    %5 = vector.shape_cast %4 : vector<1x784x192xbf16> to vector<784x192xbf16>
    %cst_6 = arith.constant dense<0.000000e+00> : vector<8x192xf32>
    %6 = tpu.matmul %0, %5, %cst_6 {dimension_numbers = #tpu.dot_dimension_numbers<[1], [0], [0], [1], [0, 0, 1, 1], [], []>} : vector<8x784xbf16>, vector<784x192xbf16>, vector<8x192xf32> -> vector<8x192xf32>
    %7 = arith.maximumf %3, %6 : vector<8x192xf32>
    %c2 = arith.constant 2 : index
    %c0_7 = arith.constant 0 : index
    %c0_8 = arith.constant 0 : index
    %8 = vector.load %arg2[%c2, %c0_7, %c0_8] : memref<9x784x192xbf16, #tpu.memory_space<vmem>>, vector<1x784x192xbf16>
    %9 = vector.shape_cast %8 : vector<1x784x192xbf16> to vector<784x192xbf16>
    %cst_9 = arith.constant dense<0.000000e+00> : vector<8x192xf32>
    %10 = tpu.matmul %0, %9, %cst_9 {dimension_numbers = #tpu.dot_dimension_numbers<[1], [0], [0], [1], [0, 0, 1, 1], [], []>} : vector<8x784xbf16>, vector<784x192xbf16>, vector<8x192xf32> -> vector<8x192xf32>
    %11 = arith.maximumf %7, %10 : vector<8x192xf32>
    %c3 = arith.constant 3 : index
    %c0_10 = arith.constant 0 : index
    %c0_11 = arith.constant 0 : index
    %12 = vector.load %arg2[%c3, %c0_10, %c0_11] : memref<9x784x192xbf16, #tpu.memory_space<vmem>>, vector<1x784x192xbf16>
    %13 = vector.shape_cast %12 : vector<1x784x192xbf16> to vector<784x192xbf16>
    %cst_12 = arith.constant dense<0.000000e+00> : vector<8x192xf32>
    %14 = tpu.matmul %0, %13, %cst_12 {dimension_numbers = #tpu.dot_dimension_numbers<[1], [0], [0], [1], [0, 0, 1, 1], [], []>} : vector<8x784xbf16>, vector<784x192xbf16>, vector<8x192xf32> -> vector<8x192xf32>
    %15 = arith.maximumf %11, %14 : vector<8x192xf32>
    %c4 = arith.constant 4 : index
    %c0_13 = arith.constant 0 : index
    %c0_14 = arith.constant 0 : index
    %16 = vector.load %arg2[%c4, %c0_13, %c0_14] : memref<9x784x192xbf16, #tpu.memory_space<vmem>>, vector<1x784x192xbf16>
    %17 = vector.shape_cast %16 : vector<1x784x192xbf16> to vector<784x192xbf16>
    %cst_15 = arith.constant dense<0.000000e+00> : vector<8x192xf32>
    %18 = tpu.matmul %0, %17, %cst_15 {dimension_numbers = #tpu.dot_dimension_numbers<[1], [0], [0], [1], [0, 0, 1, 1], [], []>} : vector<8x784xbf16>, vector<784x192xbf16>, vector<8x192xf32> -> vector<8x192xf32>
    %19 = arith.maximumf %15, %18 : vector<8x192xf32>
    %c5 = arith.constant 5 : index
    %c0_16 = arith.constant 0 : index
    %c0_17 = arith.constant 0 : index
    %20 = vector.load %arg2[%c5, %c0_16, %c0_17] : memref<9x784x192xbf16, #tpu.memory_space<vmem>>, vector<1x784x192xbf16>
    %21 = vector.shape_cast %20 : vector<1x784x192xbf16> to vector<784x192xbf16>
    %cst_18 = arith.constant dense<0.000000e+00> : vector<8x192xf32>
    %22 = tpu.matmul %0, %21, %cst_18 {dimension_numbers = #tpu.dot_dimension_numbers<[1], [0], [0], [1], [0, 0, 1, 1], [], []>} : vector<8x784xbf16>, vector<784x192xbf16>, vector<8x192xf32> -> vector<8x192xf32>
    %23 = arith.maximumf %19, %22 : vector<8x192xf32>
    %c6 = arith.constant 6 : index
    %c0_19 = arith.constant 0 : index
    %c0_20 = arith.constant 0 : index
    %24 = vector.load %arg2[%c6, %c0_19, %c0_20] : memref<9x784x192xbf16, #tpu.memory_space<vmem>>, vector<1x784x192xbf16>
    %25 = vector.shape_cast %24 : vector<1x784x192xbf16> to vector<784x192xbf16>
    %cst_21 = arith.constant dense<0.000000e+00> : vector<8x192xf32>
    %26 = tpu.matmul %0, %25, %cst_21 {dimension_numbers = #tpu.dot_dimension_numbers<[1], [0], [0], [1], [0, 0, 1, 1], [], []>} : vector<8x784xbf16>, vector<784x192xbf16>, vector<8x192xf32> -> vector<8x192xf32>
    %27 = arith.maximumf %23, %26 : vector<8x192xf32>
    %c7 = arith.constant 7 : index
    %c0_22 = arith.constant 0 : index
    %c0_23 = arith.constant 0 : index
    %28 = vector.load %arg2[%c7, %c0_22, %c0_23] : memref<9x784x192xbf16, #tpu.memory_space<vmem>>, vector<1x784x192xbf16>
    %29 = vector.shape_cast %28 : vector<1x784x192xbf16> to vector<784x192xbf16>
    %cst_24 = arith.constant dense<0.000000e+00> : vector<8x192xf32>
    %30 = tpu.matmul %0, %29, %cst_24 {dimension_numbers = #tpu.dot_dimension_numbers<[1], [0], [0], [1], [0, 0, 1, 1], [], []>} : vector<8x784xbf16>, vector<784x192xbf16>, vector<8x192xf32> -> vector<8x192xf32>
    %31 = arith.maximumf %27, %30 : vector<8x192xf32>
    %c8 = arith.constant 8 : index
    %c0_25 = arith.constant 0 : index
    %c0_26 = arith.constant 0 : index
    %32 = vector.load %arg2[%c8, %c0_25, %c0_26] : memref<9x784x192xbf16, #tpu.memory_space<vmem>>, vector<1x784x192xbf16>
    %33 = vector.shape_cast %32 : vector<1x784x192xbf16> to vector<784x192xbf16>
    %cst_27 = arith.constant dense<0.000000e+00> : vector<8x192xf32>
    %34 = tpu.matmul %0, %33, %cst_27 {dimension_numbers = #tpu.dot_dimension_numbers<[1], [0], [0], [1], [0, 0, 1, 1], [], []>} : vector<8x784xbf16>, vector<784x192xbf16>, vector<8x192xf32> -> vector<8x192xf32>
    %35 = arith.maximumf %31, %34 : vector<8x192xf32>
    %c0_28 = arith.constant 0 : index
    %c0_29 = arith.constant 0 : index
    %36 = vector.load %arg3[%c0_28, %c0_29] : memref<1x192xf32, #tpu.memory_space<vmem>>, vector<1x192xf32>
    %37 = vector.broadcast %36 : vector<1x192xf32> to vector<8x192xf32>
    %38 = arith.addf %35, %37 : vector<8x192xf32>
    %cst_30 = arith.constant 0.000000e+00 : f32
    %39 = vector.broadcast %cst_30 : f32 to vector<8x192xf32>
    %40 = arith.maximumf %38, %39 : vector<8x192xf32>
    %41 = arith.truncf %40 : vector<8x192xf32> to vector<8x192xbf16>
    %c0_31 = arith.constant 0 : index
    %c0_32 = arith.constant 0 : index
    %42 = vector.load %arg4[%c0_31, %c0_32] : memref<192x10xbf16, #tpu.memory_space<vmem>>, vector<192x10xbf16>
    %cst_33 = arith.constant dense<0.000000e+00> : vector<8x10xf32>
    %43 = tpu.matmul %41, %42, %cst_33 {dimension_numbers = #tpu.dot_dimension_numbers<[1], [0], [0], [1], [0, 0, 1, 1], [], []>} : vector<8x192xbf16>, vector<192x10xbf16>, vector<8x10xf32> -> vector<8x10xf32>
    %c0_34 = arith.constant 0 : index
    %c0_35 = arith.constant 0 : index
    %44 = vector.load %arg5[%c0_34, %c0_35] : memref<1x10xf32, #tpu.memory_space<vmem>>, vector<1x10xf32>
    %45 = vector.broadcast %44 : vector<1x10xf32> to vector<8x10xf32>
    %46 = arith.addf %43, %45 : vector<8x10xf32>
    %cst_36 = arith.constant dense<0xFF800000> : vector<8xf32>
    %47 = vector.multi_reduction <maximumf>, %46, %cst_36 [1] : vector<8x10xf32> to vector<8xf32>
    %48 = vector.shape_cast %47 : vector<8xf32> to vector<8x1xf32>
    %49 = vector.broadcast %48 : vector<8x1xf32> to vector<8x10xf32>
    %50 = arith.subf %46, %49 : vector<8x10xf32>
    %51 = math.exp %50 : vector<8x10xf32>
    %cst_37 = arith.constant dense<0.000000e+00> : vector<8xf32>
    %52 = vector.multi_reduction <add>, %51, %cst_37 [1] : vector<8x10xf32> to vector<8xf32>
    %53 = vector.shape_cast %52 : vector<8xf32> to vector<8x1xf32>
    %54 = math.log %53 : vector<8x1xf32>
    %55 = vector.broadcast %54 : vector<8x1xf32> to vector<8x10xf32>
    %56 = arith.subf %50, %55 : vector<8x10xf32>
    %c0_38 = arith.constant 0 : index
    %c0_39 = arith.constant 0 : index
    %57 = vector.load %arg6[%c0_38, %c0_39] : memref<8x10xf32, #tpu.memory_space<vmem>>, vector<8x10xf32>
    tpu.vector_store %arg6[%c0_38, %c0_39], %56 {strides = array<i32>} : memref<8x10xf32, #tpu.memory_space<vmem>>, vector<8x10xf32>,
    return
  }
  func.func @transform_0(%arg0: i32) -> (i32, i32) {
    %c0_i32 = arith.constant 0 : i32
    %c0_i32_0 = arith.constant 0 : i32
    return %arg0, %c0_i32 : i32, i32
  }
  func.func @transform_1(%arg0: i32) -> (i32, i32, i32) {
    %c0_i32 = arith.constant 0 : i32
    %c0_i32_0 = arith.constant 0 : i32
    %c0_i32_1 = arith.constant 0 : i32
    %c0_i32_2 = arith.constant 0 : i32
    return %c0_i32, %c0_i32_0, %c0_i32_1 : i32, i32, i32
  }
  func.func @transform_2(%arg0: i32) -> (i32, i32) {
    %c0_i32 = arith.constant 0 : i32
    %c0_i32_0 = arith.constant 0 : i32
    %c0_i32_1 = arith.constant 0 : i32
    return %c0_i32, %c0_i32_0 : i32, i32
  }
  func.func @transform_3(%arg0: i32) -> (i32, i32) {
    %c0_i32 = arith.constant 0 : i32
    %c0_i32_0 = arith.constant 0 : i32
    %c0_i32_1 = arith.constant 0 : i32
    return %c0_i32, %c0_i32_0 : i32, i32
  }
  func.func @transform_4(%arg0: i32) -> (i32, i32) {
    %c0_i32 = arith.constant 0 : i32
    %c0_i32_0 = arith.constant 0 : i32
    %c0_i32_1 = arith.constant 0 : i32
    return %c0_i32, %c0_i32_0 : i32, i32
  }
  func.func @transform_5(%arg0: i32) -> (i32, i32) {
    %c0_i32 = arith.constant 0 : i32
    %c0_i32_0 = arith.constant 0 : i32
    return %arg0, %c0_i32 : i32, i32
  }
}

</mosaic_0001>

<llo_original>
// kernel: tpu_custom_call.1
$region0: #{tpu_custom_call.1}
  #allocation0 [shape = 'u32[]', space=smem, size = 0x4, offset = 0x4, fixed_abs, tag = 'smem constant byte address 0x4 - core index']
  #allocation1 [shape = 'u32[144,128]{1,0:T(1,128)}', space=vmem, size = 0x12000, scoped, tag = 'internal scratch']
  %s0 = inlined_call_operand.vmem [shape: bf16[8,784], index: 0, kind: input, shape index: {}]
  %s1 = inlined_call_operand.vmem [shape: bf16[9,784,192], index: 1, kind: input, shape index: {}]
  %s2 = inlined_call_operand.vmem [shape: f32[1,192], index: 2, kind: input, shape index: {}]
  %s3 = inlined_call_operand.vmem [shape: bf16[192,10], index: 3, kind: input, shape index: {}]
  %s4 = inlined_call_operand.vmem [shape: f32[1,10], index: 4, kind: input, shape index: {}]
  %s5 = inlined_call_operand.hbm [shape: f32[8,10], index: 5, kind: output, shape index: {}]
  %s6 = sld [smem:[#allocation0]]
  $region30: #{tpu_custom_call.1} parent=0
    _
  %s8 = ssub.s32 1, %s6
  %s9 = scalar_select 0, %s8, %s6
  $region1: #{tpu_custom_call.1} parent=0
    #allocation2 [shape = 'u8[4096]{0}', space=vmem, size = 0x1000, scoped, tag = 'output window, operand 0, single buffered']
    #allocation3 [shape = 's32[1]{0}', space=sflag, size = 0x4, scoped, tag = 'scoped memory for tpu_custom_call.1']
    %10 = vsyncpa [#allocation3], 0
    // Predicated region
    $region2: #{tpu_custom_call.1} parent=1 // pred_check
      _
    $region3: #{tpu_custom_call.1} parent=1 // pred_check_branch
      %12 = sbr.rel (0) target = $region5
    $region4: #{tpu_custom_call.1} parent=1 // pred_region
      _
    $region5: #{tpu_custom_call.1} parent=1 // pred_fallthru
      _
    // Predicated region
    $region6: #{tpu_custom_call.1} parent=1 // pred_check
      _
    $region7: #{tpu_custom_call.1} parent=1 // pred_check_branch
      %14 = sbr.rel (0) target = $region9
    $region8: #{tpu_custom_call.1} parent=1 // pred_region
      _
    $region9: #{tpu_custom_call.1} parent=1 // pred_fallthru
      _
    // Predicated region
    $region10: #{tpu_custom_call.1} parent=1 // pred_check
      _
    $region11: #{tpu_custom_call.1} parent=1 // pred_check_branch
      %16 = sbr.rel (0) target = $region13
    $region12: #{tpu_custom_call.1} parent=1 // pred_region
      _
    $region13: #{tpu_custom_call.1} parent=1 // pred_fallthru
      _
    // Predicated region
    $region14: #{tpu_custom_call.1} parent=1 // pred_check
      _
    $region15: #{tpu_custom_call.1} parent=1 // pred_check_branch
      %18 = sbr.rel (0) target = $region17
    $region16: #{tpu_custom_call.1} parent=1 // pred_region
      _
    $region17: #{tpu_custom_call.1} parent=1 // pred_fallthru
      _
    // Predicated region
    $region18: #{tpu_custom_call.1} parent=1 // pred_check
      _
    $region19: #{tpu_custom_call.1} parent=1 // pred_check_branch
      %20 = sbr.rel (0) target = $region21
    $region20: #{tpu_custom_call.1} parent=1 // pred_region
      _
    $region21: #{tpu_custom_call.1} parent=1 // pred_fallthru
      _
    %v22 = vld [vmem:[%s0] sm:$0xff]
    %v23 = vld [vmem:[%s0 + $0x8] sm:$0xff]
    %v24 = vld [vmem:[%s0 + $0x10] sm:$0xff]
    %v25 = vld [vmem:[%s0 + $0x18] sm:$0xf]
    %v26 = vld [vmem:[%s1] sm:$0xff]
    %v27 = vld [vmem:[%s1 + $0x8] sm:$0xff]
    %v28 = vld [vmem:[%s1 + $0x10] sm:$0xff]
    %v29 = vld [vmem:[%s1 + $0x18] sm:$0xff]
    %v30 = vld [vmem:[%s1 + $0x20] sm:$0xff]
    %v31 = vld [vmem:[%s1 + $0x28] sm:$0xff]
    %v32 = vld [vmem:[%s1 + $0x30] sm:$0xff]
    %v33 = vld [vmem:[%s1 + $0x38] sm:$0xff]
    %v34 = vld [vmem:[%s1 + $0x40] sm:$0xff]
    %v35 = vld [vmem:[%s1 + $0x48] sm:$0xff]
    %v36 = vld [vmem:[%s1 + $0x50] sm:$0xff]
    %v37 = vld [vmem:[%s1 + $0x58] sm:$0xff]
    %v38 = vld [vmem:[%s1 + $0x60] sm:$0xff]
    %v39 = vld [vmem:[%s1 + $0x68] sm:$0xff]
    %v40 = vld [vmem:[%s1 + $0x70] sm:$0xff]
    %v41 = vld [vmem:[%s1 + $0x78] sm:$0xff]
    %v42 = vld [vmem:[%s1 + $0x80] sm:$0xff]
    %v43 = vld [vmem:[%s1 + $0x88] sm:$0xff]
    %v44 = vld [vmem:[%s1 + $0x90] sm:$0xff]
    %v45 = vld [vmem:[%s1 + $0x98] sm:$0xff]
    %v46 = vld [vmem:[%s1 + $0xa0] sm:$0xff]
    %v47 = vld [vmem:[%s1 + $0xa8] sm:$0xff]
    %v48 = vld [vmem:[%s1 + $0xb0] sm:$0xff]
    %v49 = vld [vmem:[%s1 + $0xb8] sm:$0xff]
    %v50 = vld [vmem:[%s1 + $0xc0] sm:$0xff]
    %v51 = vld [vmem:[%s1 + $0xc8] sm:$0xff]
    %v52 = vld [vmem:[%s1 + $0xd0] sm:$0xff]
    %v53 = vld [vmem:[%s1 + $0xd8] sm:$0xff]
    %v54 = vld [vmem:[%s1 + $0xe0] sm:$0xff]
    %v55 = vld [vmem:[%s1 + $0xe8] sm:$0xff]
    %v56 = vld [vmem:[%s1 + $0xf0] sm:$0xff]
    %v57 = vld [vmem:[%s1 + $0xf8] sm:$0xff]
    %v58 = vld [vmem:[%s1 + $0x100] sm:$0xff]
    %v59 = vld [vmem:[%s1 + $0x108] sm:$0xff]
    %v60 = vld [vmem:[%s1 + $0x110] sm:$0xff]
    %v61 = vld [vmem:[%s1 + $0x118] sm:$0xff]
    %v62 = vld [vmem:[%s1 + $0x120] sm:$0xff]
    %v63 = vld [vmem:[%s1 + $0x128] sm:$0xff]
    %v64 = vld [vmem:[%s1 + $0x130] sm:$0xff]
    %v65 = vld [vmem:[%s1 + $0x138] sm:$0xff]
    %v66 = vld [vmem:[%s1 + $0x140] sm:$0xff]
    %v67 = vld [vmem:[%s1 + $0x148] sm:$0xff]
    %v68 = vld [vmem:[%s1 + $0x150] sm:$0xff]
    %v69 = vld [vmem:[%s1 + $0x158] sm:$0xff]
    %v70 = vld [vmem:[%s1 + $0x160] sm:$0xff]
    %v71 = vld [vmem:[%s1 + $0x168] sm:$0xff]
    %v72 = vld [vmem:[%s1 + $0x170] sm:$0xff]
    %v73 = vld [vmem:[%s1 + $0x178] sm:$0xff]
    %v74 = vld [vmem:[%s1 + $0x180] sm:$0xff]
    %v75 = vld [vmem:[%s1 + $0x188] sm:$0xff]
    %v76 = vld [vmem:[%s1 + $0x190] sm:$0xff]
    %v77 = vld [vmem:[%s1 + $0x198] sm:$0xff]
    %v78 = vld [vmem:[%s1 + $0x1a0] sm:$0xff]
    %v79 = vld [vmem:[%s1 + $0x1a8] sm:$0xff]
    %v80 = vld [vmem:[%s1 + $0x1b0] sm:$0xff]
    %v81 = vld [vmem:[%s1 + $0x1b8] sm:$0xff]
    %v82 = vld [vmem:[%s1 + $0x1c0] sm:$0xff]
    %v83 = vld [vmem:[%s1 + $0x1c8] sm:$0xff]
    %v84 = vld [vmem:[%s1 + $0x1d0] sm:$0xff]
    %v85 = vld [vmem:[%s1 + $0x1d8] sm:$0xff]
    %v86 = vld [vmem:[%s1 + $0x1e0] sm:$0xff]
    %v87 = vld [vmem:[%s1 + $0x1e8] sm:$0xff]
    %v88 = vld [vmem:[%s1 + $0x1f0] sm:$0xff]
    %v89 = vld [vmem:[%s1 + $0x1f8] sm:$0xff]
    %v90 = vld [vmem:[%s1 + $0x200] sm:$0xff]
    %v91 = vld [vmem:[%s1 + $0x208] sm:$0xff]
    %v92 = vld [vmem:[%s1 + $0x210] sm:$0xff]
    %v93 = vld [vmem:[%s1 + $0x218] sm:$0xff]
    %v94 = vld [vmem:[%s1 + $0x220] sm:$0xff]
    %v95 = vld [vmem:[%s1 + $0x228] sm:$0xff]
    %v96 = vld [vmem:[%s1 + $0x230] sm:$0xff]
    %v97 = vld [vmem:[%s1 + $0x238] sm:$0xff]
    %v98 = vld [vmem:[%s1 + $0x240] sm:$0xff]
    %v99 = vld [vmem:[%s1 + $0x248] sm:$0xff]
    %v100 = vld [vmem:[%s1 + $0x250] sm:$0xff]
    %v101 = vld [vmem:[%s1 + $0x258] sm:$0xff]
    %v102 = vld [vmem:[%s1 + $0x260] sm:$0xff]
    %v103 = vld [vmem:[%s1 + $0x268] sm:$0xff]
    %v104 = vld [vmem:[%s1 + $0x270] sm:$0xff]
    %v105 = vld [vmem:[%s1 + $0x278] sm:$0xff]
    %v106 = vld [vmem:[%s1 + $0x280] sm:$0xff]
    %v107 = vld [vmem:[%s1 + $0x288] sm:$0xff]
    %v108 = vld [vmem:[%s1 + $0x290] sm:$0xff]
    %v109 = vld [vmem:[%s1 + $0x298] sm:$0xff]
    %v110 = vld [vmem:[%s1 + $0x2a0] sm:$0xff]
    %v111 = vld [vmem:[%s1 + $0x2a8] sm:$0xff]
    %v112 = vld [vmem:[%s1 + $0x2b0] sm:$0xff]
    %v113 = vld [vmem:[%s1 + $0x2b8] sm:$0xff]
    %v114 = vld [vmem:[%s1 + $0x2c0] sm:$0xff]
    %v115 = vld [vmem:[%s1 + $0x2c8] sm:$0xff]
    %v116 = vld [vmem:[%s1 + $0x2d0] sm:$0xff]
    %v117 = vld [vmem:[%s1 + $0x2d8] sm:$0xff]
    %v118 = vld [vmem:[%s1 + $0x2e0] sm:$0xff]
    %v119 = vld [vmem:[%s1 + $0x2e8] sm:$0xff]
    %v120 = vld [vmem:[%s1 + $0x2f0] sm:$0xff]
    %v121 = vld [vmem:[%s1 + $0x2f8] sm:$0xff]
    %v122 = vld [vmem:[%s1 + $0x300] sm:$0xff]
    %v123 = vld [vmem:[%s1 + $0x308] sm:$0xff]
    %v128 = vunpack.c.l.b16 %v22
    %v129 = vunpack.c.h.b16 %v22
    %v130 = vunpack.c.l.b16 %v23
    %v131 = vunpack.c.h.b16 %v23
    %v132 = vunpack.c.l.b16 %v24
    %v133 = vunpack.c.h.b16 %v24
    %v134 = vunpack.c.l.b16 %v25
    %v135 = vpack.c.b16 %v128, %v128
    %v136 = vpack.c.b16 %v129, %v129
    %v137 = vpack.c.b16 %v130, %v130
    %v138 = vpack.c.b16 %v131, %v131
    %v139 = vpack.c.b16 %v132, %v132
    %v140 = vpack.c.b16 %v133, %v133
    %v141 = vpack.c.b16 %v134, %v134
    %v246 = vunpack.c.l.b16 %v26
    %v247 = vunpack.c.h.b16 %v26
    %v248 = vunpack.c.l.b16 %v27
    %v249 = vunpack.c.h.b16 %v27
    %v250 = vunpack.c.l.b16 %v28
    %v251 = vunpack.c.h.b16 %v28
    %v252 = vunpack.c.l.b16 %v29
    %v253 = vunpack.c.h.b16 %v29
    %v254 = vunpack.c.l.b16 %v30
    %v255 = vunpack.c.h.b16 %v30
    %v256 = vunpack.c.l.b16 %v31
    %v257 = vunpack.c.h.b16 %v31
    %v258 = vunpack.c.l.b16 %v32
    %v259 = vunpack.c.h.b16 %v32
    %v260 = vunpack.c.l.b16 %v33
    %v261 = vunpack.c.h.b16 %v33
    %v262 = vunpack.c.l.b16 %v34
    %v263 = vunpack.c.h.b16 %v34
    %v264 = vunpack.c.l.b16 %v35
    %v265 = vunpack.c.h.b16 %v35
    %v266 = vunpack.c.l.b16 %v36
    %v267 = vunpack.c.h.b16 %v36
    %v268 = vunpack.c.l.b16 %v37
    %v269 = vunpack.c.h.b16 %v37
    %v270 = vunpack.c.l.b16 %v38
    %v271 = vunpack.c.h.b16 %v38
    %v272 = vunpack.c.l.b16 %v39
    %v273 = vunpack.c.h.b16 %v39
    %v274 = vunpack.c.l.b16 %v40
    %v275 = vunpack.c.h.b16 %v40
    %v276 = vunpack.c.l.b16 %v41
    %v277 = vunpack.c.h.b16 %v41
    %v278 = vunpack.c.l.b16 %v42
    %v279 = vunpack.c.h.b16 %v42
    %v280 = vunpack.c.l.b16 %v43
    %v281 = vunpack.c.h.b16 %v43
    %v282 = vunpack.c.l.b16 %v44
    %v283 = vunpack.c.h.b16 %v44
    %v284 = vunpack.c.l.b16 %v45
    %v285 = vunpack.c.h.b16 %v45
    %v286 = vunpack.c.l.b16 %v46
    %v287 = vunpack.c.h.b16 %v46
    %v288 = vunpack.c.l.b16 %v47
    %v289 = vunpack.c.h.b16 %v47
    %v290 = vunpack.c.l.b16 %v48
    %v291 = vunpack.c.h.b16 %v48
    %v292 = vunpack.c.l.b16 %v49
    %v293 = vunpack.c.h.b16 %v49
    %v294 = vunpack.c.l.b16 %v50
    %v295 = vunpack.c.h.b16 %v50
    %v296 = vunpack.c.l.b16 %v51
    %v297 = vunpack.c.h.b16 %v51
    %v298 = vunpack.c.l.b16 %v52
    %v299 = vunpack.c.h.b16 %v52
    %v300 = vunpack.c.l.b16 %v53
    %v301 = vunpack.c.h.b16 %v53
    %v302 = vunpack.c.l.b16 %v54
    %v303 = vunpack.c.h.b16 %v54
    %v304 = vunpack.c.l.b16 %v55
    %v305 = vunpack.c.h.b16 %v55
    %v306 = vunpack.c.l.b16 %v56
    %v307 = vunpack.c.h.b16 %v56
    %v308 = vunpack.c.l.b16 %v57
    %v309 = vunpack.c.h.b16 %v57
    %v310 = vunpack.c.l.b16 %v58
    %v311 = vunpack.c.h.b16 %v58
    %v312 = vunpack.c.l.b16 %v59
    %v313 = vunpack.c.h.b16 %v59
    %v314 = vunpack.c.l.b16 %v60
    %v315 = vunpack.c.h.b16 %v60
    %v316 = vunpack.c.l.b16 %v61
    %v317 = vunpack.c.h.b16 %v61
    %v318 = vunpack.c.l.b16 %v62
    %v319 = vunpack.c.h.b16 %v62
    %v320 = vunpack.c.l.b16 %v63
    %v321 = vunpack.c.h.b16 %v63
    %v322 = vunpack.c.l.b16 %v64
    %v323 = vunpack.c.h.b16 %v64
    %v324 = vunpack.c.l.b16 %v65
    %v325 = vunpack.c.h.b16 %v65
    %v326 = vunpack.c.l.b16 %v66
    %v327 = vunpack.c.h.b16 %v66
    %v328 = vunpack.c.l.b16 %v67
    %v329 = vunpack.c.h.b16 %v67
    %v330 = vunpack.c.l.b16 %v68
    %v331 = vunpack.c.h.b16 %v68
    %v332 = vunpack.c.l.b16 %v69
    %v333 = vunpack.c.h.b16 %v69
    %v334 = vunpack.c.l.b16 %v70
    %v335 = vunpack.c.h.b16 %v70
    %v336 = vunpack.c.l.b16 %v71
    %v337 = vunpack.c.h.b16 %v71
    %v338 = vunpack.c.l.b16 %v72
    %v339 = vunpack.c.h.b16 %v72
    %v340 = vunpack.c.l.b16 %v73
    %v341 = vunpack.c.h.b16 %v73
    %v342 = vunpack.c.l.b16 %v74
    %v343 = vunpack.c.h.b16 %v74
    %v344 = vunpack.c.l.b16 %v75
    %v345 = vunpack.c.h.b16 %v75
    %v346 = vunpack.c.l.b16 %v76
    %v347 = vunpack.c.h.b16 %v76
    %v348 = vunpack.c.l.b16 %v77
    %v349 = vunpack.c.h.b16 %v77
    %v350 = vunpack.c.l.b16 %v78
    %v351 = vunpack.c.h.b16 %v78
    %v352 = vunpack.c.l.b16 %v79
    %v353 = vunpack.c.h.b16 %v79
    %v354 = vunpack.c.l.b16 %v80
    %v355 = vunpack.c.h.b16 %v80
    %v356 = vunpack.c.l.b16 %v81
    %v357 = vunpack.c.h.b16 %v81
    %v358 = vunpack.c.l.b16 %v82
    %v359 = vunpack.c.h.b16 %v82
    %v360 = vunpack.c.l.b16 %v83
    %v361 = vunpack.c.h.b16 %v83
    %v362 = vunpack.c.l.b16 %v84
    %v363 = vunpack.c.h.b16 %v84
    %v364 = vunpack.c.l.b16 %v85
    %v365 = vunpack.c.h.b16 %v85
    %v366 = vunpack.c.l.b16 %v86
    %v367 = vunpack.c.h.b16 %v86
    %v368 = vunpack.c.l.b16 %v87
    %v369 = vunpack.c.h.b16 %v87
    %v370 = vunpack.c.l.b16 %v88
    %v371 = vunpack.c.h.b16 %v88
    %v372 = vunpack.c.l.b16 %v89
    %v373 = vunpack.c.h.b16 %v89
    %v374 = vunpack.c.l.b16 %v90
    %v375 = vunpack.c.h.b16 %v90
    %v376 = vunpack.c.l.b16 %v91
    %v377 = vunpack.c.h.b16 %v91
    %v378 = vunpack.c.l.b16 %v92
    %v379 = vunpack.c.h.b16 %v92
    %v380 = vunpack.c.l.b16 %v93
    %v381 = vunpack.c.h.b16 %v93
    %v382 = vunpack.c.l.b16 %v94
    %v383 = vunpack.c.h.b16 %v94
    %v384 = vunpack.c.l.b16 %v95
    %v385 = vunpack.c.h.b16 %v95
    %v386 = vunpack.c.l.b16 %v96
    %v387 = vunpack.c.h.b16 %v96
    %v388 = vunpack.c.l.b16 %v97
    %v389 = vunpack.c.h.b16 %v97
    %v390 = vunpack.c.l.b16 %v98
    %v391 = vunpack.c.h.b16 %v98
    %v392 = vunpack.c.l.b16 %v99
    %v393 = vunpack.c.h.b16 %v99
    %v394 = vunpack.c.l.b16 %v100
    %v395 = vunpack.c.h.b16 %v100
    %v396 = vunpack.c.l.b16 %v101
    %v397 = vunpack.c.h.b16 %v101
    %v398 = vunpack.c.l.b16 %v102
    %v399 = vunpack.c.h.b16 %v102
    %v400 = vunpack.c.l.b16 %v103
    %v401 = vunpack.c.h.b16 %v103
    %v402 = vunpack.c.l.b16 %v104
    %v403 = vunpack.c.h.b16 %v104
    %v404 = vunpack.c.l.b16 %v105
    %v405 = vunpack.c.h.b16 %v105
    %v406 = vunpack.c.l.b16 %v106
    %v407 = vunpack.c.h.b16 %v106
    %v408 = vunpack.c.l.b16 %v107
    %v409 = vunpack.c.h.b16 %v107
    %v410 = vunpack.c.l.b16 %v108
    %v411 = vunpack.c.h.b16 %v108
    %v412 = vunpack.c.l.b16 %v109
    %v413 = vunpack.c.h.b16 %v109
    %v414 = vunpack.c.l.b16 %v110
    %v415 = vunpack.c.h.b16 %v110
    %v416 = vunpack.c.l.b16 %v111
    %v417 = vunpack.c.h.b16 %v111
    %v418 = vunpack.c.l.b16 %v112
    %v419 = vunpack.c.h.b16 %v112
    %v420 = vunpack.c.l.b16 %v113
    %v421 = vunpack.c.h.b16 %v113
    %v422 = vunpack.c.l.b16 %v114
    %v423 = vunpack.c.h.b16 %v114
    %v424 = vunpack.c.l.b16 %v115
    %v425 = vunpack.c.h.b16 %v115
    %v426 = vunpack.c.l.b16 %v116
    %v427 = vunpack.c.h.b16 %v116
    %v428 = vunpack.c.l.b16 %v117
    %v429 = vunpack.c.h.b16 %v117
    %v430 = vunpack.c.l.b16 %v118
    %v431 = vunpack.c.h.b16 %v118
    %v432 = vunpack.c.l.b16 %v119
    %v433 = vunpack.c.h.b16 %v119
    %v434 = vunpack.c.l.b16 %v120
    %v435 = vunpack.c.h.b16 %v120
    %v436 = vunpack.c.l.b16 %v121
    %v437 = vunpack.c.h.b16 %v121
    %v438 = vunpack.c.l.b16 %v122
    %v439 = vunpack.c.h.b16 %v122
    %v440 = vunpack.c.l.b16 %v123
    %v441 = vunpack.c.h.b16 %v123
    %v442 = vpack.c.b16 %v248, %v246
    %v443 = vpack.c.b16 %v249, %v247
    %v444 = vpack.c.b16 %v252, %v250
    %v445 = vpack.c.b16 %v253, %v251
    %v446 = vpack.c.b16 %v256, %v254
    %v447 = vpack.c.b16 %v257, %v255
    %v448 = vpack.c.b16 %v260, %v258
    %v449 = vpack.c.b16 %v261, %v259
    %v450 = vpack.c.b16 %v264, %v262
    %v451 = vpack.c.b16 %v265, %v263
    %v452 = vpack.c.b16 %v268, %v266
    %v453 = vpack.c.b16 %v269, %v267
    %v454 = vpack.c.b16 %v272, %v270
    %v455 = vpack.c.b16 %v273, %v271
    %v456 = vpack.c.b16 %v276, %v274
    %v457 = vpack.c.b16 %v277, %v275
    %v458 = vpack.c.b16 %v280, %v278
    %v459 = vpack.c.b16 %v281, %v279
    %v460 = vpack.c.b16 %v284, %v282
    %v461 = vpack.c.b16 %v285, %v283
    %v462 = vpack.c.b16 %v288, %v286
    %v463 = vpack.c.b16 %v289, %v287
    %v464 = vpack.c.b16 %v292, %v290
    %v465 = vpack.c.b16 %v293, %v291
    %v466 = vpack.c.b16 %v296, %v294
    %v467 = vpack.c.b16 %v297, %v295
    %v468 = vpack.c.b16 %v300, %v298
    %v469 = vpack.c.b16 %v301, %v299
    %v470 = vpack.c.b16 %v304, %v302
    %v471 = vpack.c.b16 %v305, %v303
    %v472 = vpack.c.b16 %v308, %v306
    %v473 = vpack.c.b16 %v309, %v307
    %v474 = vpack.c.b16 %v312, %v310
    %v475 = vpack.c.b16 %v313, %v311
    %v476 = vpack.c.b16 %v316, %v314
    %v477 = vpack.c.b16 %v317, %v315
    %v478 = vpack.c.b16 %v320, %v318
    %v479 = vpack.c.b16 %v321, %v319
    %v480 = vpack.c.b16 %v324, %v322
    %v481 = vpack.c.b16 %v325, %v323
    %v482 = vpack.c.b16 %v328, %v326
    %v483 = vpack.c.b16 %v329, %v327
    %v484 = vpack.c.b16 %v332, %v330
    %v485 = vpack.c.b16 %v333, %v331
    %v486 = vpack.c.b16 %v336, %v334
    %v487 = vpack.c.b16 %v337, %v335
    %v488 = vpack.c.b16 %v340, %v338
    %v489 = vpack.c.b16 %v341, %v339
    %v490 = vpack.c.b16 %v344, %v342
    %v491 = vpack.c.b16 %v345, %v343
    %v492 = vpack.c.b16 %v348, %v346
    %v493 = vpack.c.b16 %v349, %v347
    %v494 = vpack.c.b16 %v352, %v350
    %v495 = vpack.c.b16 %v353, %v351
    %v496 = vpack.c.b16 %v356, %v354
    %v497 = vpack.c.b16 %v357, %v355
    %v498 = vpack.c.b16 %v360, %v358
    %v499 = vpack.c.b16 %v361, %v359
    %v500 = vpack.c.b16 %v364, %v362
    %v501 = vpack.c.b16 %v365, %v363
    %v502 = vpack.c.b16 %v368, %v366
    %v503 = vpack.c.b16 %v369, %v367
    %v504 = vpack.c.b16 %v372, %v370
    %v505 = vpack.c.b16 %v373, %v371
    %v506 = vpack.c.b16 %v376, %v374
    %v507 = vpack.c.b16 %v377, %v375
    %v508 = vpack.c.b16 %v380, %v378
    %v509 = vpack.c.b16 %v381, %v379
    %v510 = vpack.c.b16 %v384, %v382
    %v511 = vpack.c.b16 %v385, %v383
    %v512 = vpack.c.b16 %v388, %v386
    %v513 = vpack.c.b16 %v389, %v387
    %v514 = vpack.c.b16 %v392, %v390
    %v515 = vpack.c.b16 %v393, %v391
    %v516 = vpack.c.b16 %v396, %v394
    %v517 = vpack.c.b16 %v397, %v395
    %v518 = vpack.c.b16 %v400, %v398
    %v519 = vpack.c.b16 %v401, %v399
    %v520 = vpack.c.b16 %v404, %v402
    %v521 = vpack.c.b16 %v405, %v403
    %v522 = vpack.c.b16 %v408, %v406
    %v523 = vpack.c.b16 %v409, %v407
    %v524 = vpack.c.b16 %v412, %v410
    %v525 = vpack.c.b16 %v413, %v411
    %v526 = vpack.c.b16 %v416, %v414
    %v527 = vpack.c.b16 %v417, %v415
    %v528 = vpack.c.b16 %v420, %v418
    %v529 = vpack.c.b16 %v421, %v419
    %v530 = vpack.c.b16 %v424, %v422
    %v531 = vpack.c.b16 %v425, %v423
    %v532 = vpack.c.b16 %v428, %v426
    %v533 = vpack.c.b16 %v429, %v427
    %v534 = vpack.c.b16 %v432, %v430
    %v535 = vpack.c.b16 %v433, %v431
    %v536 = vpack.c.b16 %v436, %v434
    %v537 = vpack.c.b16 %v437, %v435
    %v538 = vpack.c.b16 %v440, %v438
    %v539 = vpack.c.b16 %v441, %v439
    %vm638 = vcmask 130048
    %v640 = vsel %vm638, %v141, 0
    %642 = vmatprep.subr.bf16.mxu0 %v443
    %643 = vmatpush1.bf16.msra.mxu0 %v442
    %644 = vmatprep.subr.bf16.mxu0 %v445
    %645 = vmatpush1.bf16.msra.mxu0 %v444
    %646 = vmatprep.subr.bf16.mxu0 %v447
    %647 = vmatpush1.bf16.msra.mxu0 %v446
    %648 = vmatprep.subr.bf16.mxu0 %v449
    %649 = vmatpush1.bf16.msra.mxu0 %v448
    %650 = vmatprep.subr.bf16.mxu0 %v451
    %651 = vmatpush1.bf16.msra.mxu0 %v450
    %652 = vmatprep.subr.bf16.mxu0 %v453
    %653 = vmatpush1.bf16.msra.mxu0 %v452
    %654 = vmatprep.subr.bf16.mxu0 %v455
    %655 = vmatpush1.bf16.msra.mxu0 %v454
    %656 = vmatprep.subr.bf16.mxu0 %v457
    %657 = vmatpush1.bf16.msra.mxu0 %v456
    %658 = vmatprep.subr.bf16.mxu0 %v459
    %659 = vmatpush1.bf16.msra.mxu0 %v458
    %660 = vmatprep.subr.bf16.mxu0 %v461
    %661 = vmatpush1.bf16.msra.mxu0 %v460
    %662 = vmatprep.subr.bf16.mxu0 %v463
    %663 = vmatpush1.bf16.msra.mxu0 %v462
    %664 = vmatprep.subr.bf16.mxu0 %v465
    %665 = vmatpush1.bf16.msra.mxu0 %v464
    %666 = vmatprep.subr.bf16.mxu0 %v467
    %667 = vmatpush1.bf16.msra.mxu0 %v466
    %668 = vmatprep.subr.bf16.mxu0 %v469
    %669 = vmatpush1.bf16.msra.mxu0 %v468
    %670 = vmatprep.subr.bf16.mxu0 %v471
    %671 = vmatpush1.bf16.msra.mxu0 %v470
    %672 = vmatprep.subr.bf16.mxu0 %v473
    %673 = vmatpush1.bf16.msra.mxu0 %v472
    %674 = vmatprep.mubr.bf16.mxu0 %v136
    %675 = vmatmul.mubr.bf16.gmra.mrb[0].mxu0 %v135
    %v676 = vpop.f32.mrb[0].mxu0
    %v677 = vadd.f32 0.0, %v676
    %v678 = vpop.f32.mrb[0].mxu0
    %v679 = vadd.f32 0.0, %v678
    %v680 = vpop.f32.mrb[0].mxu0
    %v681 = vpop.f32.mrb[0].mxu0
    %682 = vdwg.mxu0
    %683 = vmatprep.subr.bf16.mxu0 %v475
    %684 = vmatpush1.bf16.msra.mxu0 %v474
    %685 = vmatprep.subr.bf16.mxu0 %v477
    %686 = vmatpush1.bf16.msra.mxu0 %v476
    %687 = vmatprep.subr.bf16.mxu0 %v479
    %688 = vmatpush1.bf16.msra.mxu0 %v478
    %689 = vmatprep.subr.bf16.mxu0 %v481
    %690 = vmatpush1.bf16.msra.mxu0 %v480
    %691 = vmatprep.subr.bf16.mxu0 %v483
    %692 = vmatpush1.bf16.msra.mxu0 %v482
    %693 = vmatprep.subr.bf16.mxu0 %v485
    %694 = vmatpush1.bf16.msra.mxu0 %v484
    %695 = vmatprep.subr.bf16.mxu0 %v487
    %696 = vmatpush1.bf16.msra.mxu0 %v486
    %697 = vmatprep.subr.bf16.mxu0 %v489
    %698 = vmatpush1.bf16.msra.mxu0 %v488
    %699 = vmatprep.subr.bf16.mxu0 %v491
    %700 = vmatpush1.bf16.msra.mxu0 %v490
    %701 = vmatprep.subr.bf16.mxu0 %v493
    %702 = vmatpush1.bf16.msra.mxu0 %v492
    %703 = vmatprep.subr.bf16.mxu0 %v495
    %704 = vmatpush1.bf16.msra.mxu0 %v494
    %705 = vmatprep.subr.bf16.mxu0 %v497
    %706 = vmatpush1.bf16.msra.mxu0 %v496
    %707 = vmatprep.subr.bf16.mxu0 %v499
    %708 = vmatpush1.bf16.msra.mxu0 %v498
    %709 = vmatprep.subr.bf16.mxu0 %v501
    %710 = vmatpush1.bf16.msra.mxu0 %v500
    %711 = vmatprep.subr.bf16.mxu0 %v503
    %712 = vmatpush1.bf16.msra.mxu0 %v502
    %713 = vmatprep.subr.bf16.mxu0 %v505
    %714 = vmatpush1.bf16.msra.mxu0 %v504
    %715 = vmatprep.mubr.bf16.mxu0 %v138
    %716 = vmatmul.mubr.bf16.gmra.mrb[0].mxu0 %v137
    %v717 = vpop.f32.mrb[0].mxu0
    %v718 = vadd.f32 %v677, %v717
    %v719 = vpop.f32.mrb[0].mxu0
    %v720 = vadd.f32 %v679, %v719
    %v721 = vpop.f32.mrb[0].mxu0
    %v722 = vpop.f32.mrb[0].mxu0
    %723 = vdwg.mxu0
    %724 = vmatprep.subr.bf16.mxu0 %v507
    %725 = vmatpush1.bf16.msra.mxu0 %v506
    %726 = vmatprep.subr.bf16.mxu0 %v509
    %727 = vmatpush1.bf16.msra.mxu0 %v508
    %728 = vmatprep.subr.bf16.mxu0 %v511
    %729 = vmatpush1.bf16.msra.mxu0 %v510
    %730 = vmatprep.subr.bf16.mxu0 %v513
    %731 = vmatpush1.bf16.msra.mxu0 %v512
    %732 = vmatprep.subr.bf16.mxu0 %v515
    %733 = vmatpush1.bf16.msra.mxu0 %v514
    %734 = vmatprep.subr.bf16.mxu0 %v517
    %735 = vmatpush1.bf16.msra.mxu0 %v516
    %736 = vmatprep.subr.bf16.mxu0 %v519
    %737 = vmatpush1.bf16.msra.mxu0 %v518
    %738 = vmatprep.subr.bf16.mxu0 %v521
    %739 = vmatpush1.bf16.msra.mxu0 %v520
    %740 = vmatprep.subr.bf16.mxu0 %v523
    %741 = vmatpush1.bf16.msra.mxu0 %v522
    %742 = vmatprep.subr.bf16.mxu0 %v525
    %743 = vmatpush1.bf16.msra.mxu0 %v524
    %744 = vmatprep.subr.bf16.mxu0 %v527
    %745 = vmatpush1.bf16.msra.mxu0 %v526
    %746 = vmatprep.subr.bf16.mxu0 %v529
    %747 = vmatpush1.bf16.msra.mxu0 %v528
    %748 = vmatprep.subr.bf16.mxu0 %v531
    %749 = vmatpush1.bf16.msra.mxu0 %v530
    %750 = vmatprep.subr.bf16.mxu0 %v533
    %751 = vmatpush1.bf16.msra.mxu0 %v532
    %752 = vmatprep.subr.bf16.mxu0 %v535
    %753 = vmatpush1.bf16.msra.mxu0 %v534
    %754 = vmatprep.subr.bf16.mxu0 %v537
    %755 = vmatpush1.bf16.msra.mxu0 %v536
    %756 = vmatprep.mubr.bf16.mxu0 %v140
    %757 = vmatmul.mubr.bf16.gmra.mrb[0].mxu0 %v139
    %v758 = vpop.f32.mrb[0].mxu0
    %v759 = vadd.f32 %v718, %v758
    %v760 = vpop.f32.mrb[0].mxu0
    %v761 = vadd.f32 %v720, %v760
    %v762 = vpop.f32.mrb[0].mxu0
    %v763 = vpop.f32.mrb[0].mxu0
    %764 = vdwg.mxu0
    %765 = vmatprep.subr.bf16.mxu0 %v539
    %766 = vmatpush1.bf16.msra.mxu0 %v538
    %767 = vmatprep.subr.bf16.mxu0 0
    %768 = vmatpush1.bf16.msra.mxu0 0
    %769 = vmatprep.subr.bf16.mxu0 0
    %770 = vmatpush1.bf16.msra.mxu0 0
    %771 = vmatprep.subr.bf16.mxu0 0
    %772 = vmatpush1.bf16.msra.mxu0 0
    %773 = vmatprep.subr.bf16.mxu0 0
    %774 = vmatpush1.bf16.msra.mxu0 0
    %775 = vmatprep.subr.bf16.mxu0 0
    %776 = vmatpush1.bf16.msra.mxu0 0
    %777 = vmatprep.subr.bf16.mxu0 0
    %778 = vmatpush1.bf16.msra.mxu0 0
    %779 = vmatprep.subr.bf16.mxu0 0
    %780 = vmatpush1.bf16.msra.mxu0 0
    %781 = vmatprep.subr.bf16.mxu0 0
    %782 = vmatpush1.bf16.msra.mxu0 0
    %783 = vmatprep.subr.bf16.mxu0 0
    %784 = vmatpush1.bf16.msra.mxu0 0
    %785 = vmatprep.subr.bf16.mxu0 0
    %786 = vmatpush1.bf16.msra.mxu0 0
    %787 = vmatprep.subr.bf16.mxu0 0
    %788 = vmatpush1.bf16.msra.mxu0 0
    %789 = vmatprep.subr.bf16.mxu0 0
    %790 = vmatpush1.bf16.msra.mxu0 0
    %791 = vmatprep.subr.bf16.mxu0 0
    %792 = vmatpush1.bf16.msra.mxu0 0
    %793 = vmatprep.subr.bf16.mxu0 0
    %794 = vmatpush1.bf16.msra.mxu0 0
    %795 = vmatprep.subr.bf16.mxu0 0
    %796 = vmatpush1.bf16.msra.mxu0 0
    %797 = vmatprep.mubr.bf16.mxu0 0
    %798 = vmatmul.mubr.bf16.gmra.mrb[0].mxu0 %v640
    %v799 = vpop.f32.mrb[0].mxu0
    %v800 = vadd.f32 %v759, %v799
    %v801 = vpop.f32.mrb[0].mxu0
    %v802 = vadd.f32 %v761, %v801
    %v803 = vpop.f32.mrb[0].mxu0
    %v804 = vpop.f32.mrb[0].mxu0
    %805 = vdwg.mxu0
    %s806 = scalar_lea.vmem %s1, 784
    %v807 = vld [vmem:[%s806] sm:$0xff]
    %v808 = vld [vmem:[%s806 + $0x8] sm:$0xff]
    %v809 = vld [vmem:[%s806 + $0x10] sm:$0xff]
    %v810 = vld [vmem:[%s806 + $0x18] sm:$0xff]
    %v811 = vld [vmem:[%s806 + $0x20] sm:$0xff]
    %v812 = vld [vmem:[%s806 + $0x28] sm:$0xff]
    %v813 = vld [vmem:[%s806 + $0x30] sm:$0xff]
    %v814 = vld [vmem:[%s806 + $0x38] sm:$0xff]
    %v815 = vld [vmem:[%s806 + $0x40] sm:$0xff]
    %v816 = vld [vmem:[%s806 + $0x48] sm:$0xff]
    %v817 = vld [vmem:[%s806 + $0x50] sm:$0xff]
    %v818 = vld [vmem:[%s806 + $0x58] sm:$0xff]
    %v819 = vld [vmem:[%s806 + $0x60] sm:$0xff]
    %v820 = vld [vmem:[%s806 + $0x68] sm:$0xff]
    %v821 = vld [vmem:[%s806 + $0x70] sm:$0xff]
    %v822 = vld [vmem:[%s806 + $0x78] sm:$0xff]
    %v823 = vld [vmem:[%s806 + $0x80] sm:$0xff]
    %v824 = vld [vmem:[%s806 + $0x88] sm:$0xff]
    %v825 = vld [vmem:[%s806 + $0x90] sm:$0xff]
    %v826 = vld [vmem:[%s806 + $0x98] sm:$0xff]
    %v827 = vld [vmem:[%s806 + $0xa0] sm:$0xff]
    %v828 = vld [vmem:[%s806 + $0xa8] sm:$0xff]
    %v829 = vld [vmem:[%s806 + $0xb0] sm:$0xff]
    %v830 = vld [vmem:[%s806 + $0xb8] sm:$0xff]
    %v831 = vld [vmem:[%s806 + $0xc0] sm:$0xff]
    %v832 = vld [vmem:[%s806 + $0xc8] sm:$0xff]
    %v833 = vld [vmem:[%s806 + $0xd0] sm:$0xff]
    %v834 = vld [vmem:[%s806 + $0xd8] sm:$0xff]
    %v835 = vld [vmem:[%s806 + $0xe0] sm:$0xff]
    %v836 = vld [vmem:[%s806 + $0xe8] sm:$0xff]
    %v837 = vld [vmem:[%s806 + $0xf0] sm:$0xff]
    %v838 = vld [vmem:[%s806 + $0xf8] sm:$0xff]
    %v839 = vld [vmem:[%s806 + $0x100] sm:$0xff]
    %v840 = vld [vmem:[%s806 + $0x108] sm:$0xff]
    %v841 = vld [vmem:[%s806 + $0x110] sm:$0xff]
    %v842 = vld [vmem:[%s806 + $0x118] sm:$0xff]
    %v843 = vld [vmem:[%s806 + $0x120] sm:$0xff]
    %v844 = vld [vmem:[%s806 + $0x128] sm:$0xff]
    %v845 = vld [vmem:[%s806 + $0x130] sm:$0xff]
    %v846 = vld [vmem:[%s806 + $0x138] sm:$0xff]
    %v847 = vld [vmem:[%s806 + $0x140] sm:$0xff]
    %v848 = vld [vmem:[%s806 + $0x148] sm:$0xff]
    %v849 = vld [vmem:[%s806 + $0x150] sm:$0xff]
    %v850 = vld [vmem:[%s806 + $0x158] sm:$0xff]
    %v851 = vld [vmem:[%s806 + $0x160] sm:$0xff]
    %v852 = vld [vmem:[%s806 + $0x168] sm:$0xff]
    %v853 = vld [vmem:[%s806 + $0x170] sm:$0xff]
    %v854 = vld [vmem:[%s806 + $0x178] sm:$0xff]
    %v855 = vld [vmem:[%s806 + $0x180] sm:$0xff]
    %v856 = vld [vmem:[%s806 + $0x188] sm:$0xff]
    %v857 = vld [vmem:[%s806 + $0x190] sm:$0xff]
    %v858 = vld [vmem:[%s806 + $0x198] sm:$0xff]
    %v859 = vld [vmem:[%s806 + $0x1a0] sm:$0xff]
    %v860 = vld [vmem:[%s806 + $0x1a8] sm:$0xff]
    %v861 = vld [vmem:[%s806 + $0x1b0] sm:$0xff]
    %v862 = vld [vmem:[%s806 + $0x1b8] sm:$0xff]
    %v863 = vld [vmem:[%s806 + $0x1c0] sm:$0xff]
    %v864 = vld [vmem:[%s806 + $0x1c8] sm:$0xff]
    %v865 = vld [vmem:[%s806 + $0x1d0] sm:$0xff]
    %v866 = vld [vmem:[%s806 + $0x1d8] sm:$0xff]
    %v867 = vld [vmem:[%s806 + $0x1e0] sm:$0xff]
    %v868 = vld [vmem:[%s806 + $0x1e8] sm:$0xff]
    %v869 = vld [vmem:[%s806 + $0x1f0] sm:$0xff]
    %v870 = vld [vmem:[%s806 + $0x1f8] sm:$0xff]
    %v871 = vld [vmem:[%s806 + $0x200] sm:$0xff]
    %v872 = vld [vmem:[%s806 + $0x208] sm:$0xff]
    %v873 = vld [vmem:[%s806 + $0x210] sm:$0xff]
    %v874 = vld [vmem:[%s806 + $0x218] sm:$0xff]
    %v875 = vld [vmem:[%s806 + $0x220] sm:$0xff]
    %v876 = vld [vmem:[%s806 + $0x228] sm:$0xff]
    %v877 = vld [vmem:[%s806 + $0x230] sm:$0xff]
    %v878 = vld [vmem:[%s806 + $0x238] sm:$0xff]
    %v879 = vld [vmem:[%s806 + $0x240] sm:$0xff]
    %v880 = vld [vmem:[%s806 + $0x248] sm:$0xff]
    %v881 = vld [vmem:[%s806 + $0x250] sm:$0xff]
    %v882 = vld [vmem:[%s806 + $0x258] sm:$0xff]
    %v883 = vld [vmem:[%s806 + $0x260] sm:$0xff]
    %v884 = vld [vmem:[%s806 + $0x268] sm:$0xff]
    %v885 = vld [vmem:[%s806 + $0x270] sm:$0xff]
    %v886 = vld [vmem:[%s806 + $0x278] sm:$0xff]
    %v887 = vld [vmem:[%s806 + $0x280] sm:$0xff]
    %v888 = vld [vmem:[%s806 + $0x288] sm:$0xff]
    %v889 = vld [vmem:[%s806 + $0x290] sm:$0xff]
    %v890 = vld [vmem:[%s806 + $0x298] sm:$0xff]
    %v891 = vld [vmem:[%s806 + $0x2a0] sm:$0xff]
    %v892 = vld [vmem:[%s806 + $0x2a8] sm:$0xff]
    %v893 = vld [vmem:[%s806 + $0x2b0] sm:$0xff]
    %v894 = vld [vmem:[%s806 + $0x2b8] sm:$0xff]
    %v895 = vld [vmem:[%s806 + $0x2c0] sm:$0xff]
    %v896 = vld [vmem:[%s806 + $0x2c8] sm:$0xff]
    %v897 = vld [vmem:[%s806 + $0x2d0] sm:$0xff]
    %v898 = vld [vmem:[%s806 + $0x2d8] sm:$0xff]
    %v899 = vld [vmem:[%s806 + $0x2e0] sm:$0xff]
    %v900 = vld [vmem:[%s806 + $0x2e8] sm:$0xff]
    %v901 = vld [vmem:[%s806 + $0x2f0] sm:$0xff]
    %v902 = vld [vmem:[%s806 + $0x2f8] sm:$0xff]
    %v903 = vld [vmem:[%s806 + $0x300] sm:$0xff]
    %v904 = vld [vmem:[%s806 + $0x308] sm:$0xff]
    %v1003 = vunpack.c.l.b16 %v807
    %v1004 = vunpack.c.h.b16 %v807
    %v1005 = vunpack.c.l.b16 %v808
    %v1006 = vunpack.c.h.b16 %v808
    %v1007 = vunpack.c.l.b16 %v809
    %v1008 = vunpack.c.h.b16 %v809
    %v1009 = vunpack.c.l.b16 %v810
    %v1010 = vunpack.c.h.b16 %v810
    %v1011 = vunpack.c.l.b16 %v811
    %v1012 = vunpack.c.h.b16 %v811
    %v1013 = vunpack.c.l.b16 %v812
    %v1014 = vunpack.c.h.b16 %v812
    %v1015 = vunpack.c.l.b16 %v813
    %v1016 = vunpack.c.h.b16 %v813
    %v1017 = vunpack.c.l.b16 %v814
    %v1018 = vunpack.c.h.b16 %v814
    %v1019 = vunpack.c.l.b16 %v815
    %v1020 = vunpack.c.h.b16 %v815
    %v1021 = vunpack.c.l.b16 %v816
    %v1022 = vunpack.c.h.b16 %v816
    %v1023 = vunpack.c.l.b16 %v817
    %v1024 = vunpack.c.h.b16 %v817
    %v1025 = vunpack.c.l.b16 %v818
    %v1026 = vunpack.c.h.b16 %v818
    %v1027 = vunpack.c.l.b16 %v819
    %v1028 = vunpack.c.h.b16 %v819
    %v1029 = vunpack.c.l.b16 %v820
    %v1030 = vunpack.c.h.b16 %v820
    %v1031 = vunpack.c.l.b16 %v821
    %v1032 = vunpack.c.h.b16 %v821
    %v1033 = vunpack.c.l.b16 %v822
    %v1034 = vunpack.c.h.b16 %v822
    %v1035 = vunpack.c.l.b16 %v823
    %v1036 = vunpack.c.h.b16 %v823
    %v1037 = vunpack.c.l.b16 %v824
    %v1038 = vunpack.c.h.b16 %v824
    %v1039 = vunpack.c.l.b16 %v825
    %v1040 = vunpack.c.h.b16 %v825
    %v1041 = vunpack.c.l.b16 %v826
    %v1042 = vunpack.c.h.b16 %v826
    %v1043 = vunpack.c.l.b16 %v827
    %v1044 = vunpack.c.h.b16 %v827
    %v1045 = vunpack.c.l.b16 %v828
    %v1046 = vunpack.c.h.b16 %v828
    %v1047 = vunpack.c.l.b16 %v829
    %v1048 = vunpack.c.h.b16 %v829
    %v1049 = vunpack.c.l.b16 %v830
    %v1050 = vunpack.c.h.b16 %v830
    %v1051 = vunpack.c.l.b16 %v831
    %v1052 = vunpack.c.h.b16 %v831
    %v1053 = vunpack.c.l.b16 %v832
    %v1054 = vunpack.c.h.b16 %v832
    %v1055 = vunpack.c.l.b16 %v833
    %v1056 = vunpack.c.h.b16 %v833
    %v1057 = vunpack.c.l.b16 %v834
    %v1058 = vunpack.c.h.b16 %v834
    %v1059 = vunpack.c.l.b16 %v835
    %v1060 = vunpack.c.h.b16 %v835
    %v1061 = vunpack.c.l.b16 %v836
    %v1062 = vunpack.c.h.b16 %v836
    %v1063 = vunpack.c.l.b16 %v837
    %v1064 = vunpack.c.h.b16 %v837
    %v1065 = vunpack.c.l.b16 %v838
    %v1066 = vunpack.c.h.b16 %v838
    %v1067 = vunpack.c.l.b16 %v839
    %v1068 = vunpack.c.h.b16 %v839
    %v1069 = vunpack.c.l.b16 %v840
    %v1070 = vunpack.c.h.b16 %v840
    %v1071 = vunpack.c.l.b16 %v841
    %v1072 = vunpack.c.h.b16 %v841
    %v1073 = vunpack.c.l.b16 %v842
    %v1074 = vunpack.c.h.b16 %v842
    %v1075 = vunpack.c.l.b16 %v843
    %v1076 = vunpack.c.h.b16 %v843
    %v1077 = vunpack.c.l.b16 %v844
    %v1078 = vunpack.c.h.b16 %v844
    %v1079 = vunpack.c.l.b16 %v845
    %v1080 = vunpack.c.h.b16 %v845
    %v1081 = vunpack.c.l.b16 %v846
    %v1082 = vunpack.c.h.b16 %v846
    %v1083 = vunpack.c.l.b16 %v847
    %v1084 = vunpack.c.h.b16 %v847
    %v1085 = vunpack.c.l.b16 %v848
    %v1086 = vunpack.c.h.b16 %v848
    %v1087 = vunpack.c.l.b16 %v849
    %v1088 = vunpack.c.h.b16 %v849
    %v1089 = vunpack.c.l.b16 %v850
    %v1090 = vunpack.c.h.b16 %v850
    %v1091 = vunpack.c.l.b16 %v851
    %v1092 = vunpack.c.h.b16 %v851
    %v1093 = vunpack.c.l.b16 %v852
    %v1094 = vunpack.c.h.b16 %v852
    %v1095 = vunpack.c.l.b16 %v853
    %v1096 = vunpack.c.h.b16 %v853
    %v1097 = vunpack.c.l.b16 %v854
    %v1098 = vunpack.c.h.b16 %v854
    %v1099 = vunpack.c.l.b16 %v855
    %v1100 = vunpack.c.h.b16 %v855
    %v1101 = vunpack.c.l.b16 %v856
    %v1102 = vunpack.c.h.b16 %v856
    %v1103 = vunpack.c.l.b16 %v857
    %v1104 = vunpack.c.h.b16 %v857
    %v1105 = vunpack.c.l.b16 %v858
    %v1106 = vunpack.c.h.b16 %v858
    %v1107 = vunpack.c.l.b16 %v859
    %v1108 = vunpack.c.h.b16 %v859
    %v1109 = vunpack.c.l.b16 %v860
    %v1110 = vunpack.c.h.b16 %v860
    %v1111 = vunpack.c.l.b16 %v861
    %v1112 = vunpack.c.h.b16 %v861
    %v1113 = vunpack.c.l.b16 %v862
    %v1114 = vunpack.c.h.b16 %v862
    %v1115 = vunpack.c.l.b16 %v863
    %v1116 = vunpack.c.h.b16 %v863
    %v1117 = vunpack.c.l.b16 %v864
    %v1118 = vunpack.c.h.b16 %v864
    %v1119 = vunpack.c.l.b16 %v865
    %v1120 = vunpack.c.h.b16 %v865
    %v1121 = vunpack.c.l.b16 %v866
    %v1122 = vunpack.c.h.b16 %v866
    %v1123 = vunpack.c.l.b16 %v867
    %v1124 = vunpack.c.h.b16 %v867
    %v1125 = vunpack.c.l.b16 %v868
    %v1126 = vunpack.c.h.b16 %v868
    %v1127 = vunpack.c.l.b16 %v869
    %v1128 = vunpack.c.h.b16 %v869
    %v1129 = vunpack.c.l.b16 %v870
    %v1130 = vunpack.c.h.b16 %v870
    %v1131 = vunpack.c.l.b16 %v871
    %v1132 = vunpack.c.h.b16 %v871
    %v1133 = vunpack.c.l.b16 %v872
    %v1134 = vunpack.c.h.b16 %v872
    %v1135 = vunpack.c.l.b16 %v873
    %v1136 = vunpack.c.h.b16 %v873
    %v1137 = vunpack.c.l.b16 %v874
    %v1138 = vunpack.c.h.b16 %v874
    %v1139 = vunpack.c.l.b16 %v875
    %v1140 = vunpack.c.h.b16 %v875
    %v1141 = vunpack.c.l.b16 %v876
    %v1142 = vunpack.c.h.b16 %v876
    %v1143 = vunpack.c.l.b16 %v877
    %v1144 = vunpack.c.h.b16 %v877
    %v1145 = vunpack.c.l.b16 %v878
    %v1146 = vunpack.c.h.b16 %v878
    %v1147 = vunpack.c.l.b16 %v879
    %v1148 = vunpack.c.h.b16 %v879
    %v1149 = vunpack.c.l.b16 %v880
    %v1150 = vunpack.c.h.b16 %v880
    %v1151 = vunpack.c.l.b16 %v881
    %v1152 = vunpack.c.h.b16 %v881
    %v1153 = vunpack.c.l.b16 %v882
    %v1154 = vunpack.c.h.b16 %v882
    %v1155 = vunpack.c.l.b16 %v883
    %v1156 = vunpack.c.h.b16 %v883
    %v1157 = vunpack.c.l.b16 %v884
    %v1158 = vunpack.c.h.b16 %v884
    %v1159 = vunpack.c.l.b16 %v885
    %v1160 = vunpack.c.h.b16 %v885
    %v1161 = vunpack.c.l.b16 %v886
    %v1162 = vunpack.c.h.b16 %v886
    %v1163 = vunpack.c.l.b16 %v887
    %v1164 = vunpack.c.h.b16 %v887
    %v1165 = vunpack.c.l.b16 %v888
    %v1166 = vunpack.c.h.b16 %v888
    %v1167 = vunpack.c.l.b16 %v889
    %v1168 = vunpack.c.h.b16 %v889
    %v1169 = vunpack.c.l.b16 %v890
    %v1170 = vunpack.c.h.b16 %v890
    %v1171 = vunpack.c.l.b16 %v891
    %v1172 = vunpack.c.h.b16 %v891
    %v1173 = vunpack.c.l.b16 %v892
    %v1174 = vunpack.c.h.b16 %v892
    %v1175 = vunpack.c.l.b16 %v893
    %v1176 = vunpack.c.h.b16 %v893
    %v1177 = vunpack.c.l.b16 %v894
    %v1178 = vunpack.c.h.b16 %v894
    %v1179 = vunpack.c.l.b16 %v895
    %v1180 = vunpack.c.h.b16 %v895
    %v1181 = vunpack.c.l.b16 %v896
    %v1182 = vunpack.c.h.b16 %v896
    %v1183 = vunpack.c.l.b16 %v897
    %v1184 = vunpack.c.h.b16 %v897
    %v1185 = vunpack.c.l.b16 %v898
    %v1186 = vunpack.c.h.b16 %v898
    %v1187 = vunpack.c.l.b16 %v899
    %v1188 = vunpack.c.h.b16 %v899
    %v1189 = vunpack.c.l.b16 %v900
    %v1190 = vunpack.c.h.b16 %v900
    %v1191 = vunpack.c.l.b16 %v901
    %v1192 = vunpack.c.h.b16 %v901
    %v1193 = vunpack.c.l.b16 %v902
    %v1194 = vunpack.c.h.b16 %v902
    %v1195 = vunpack.c.l.b16 %v903
    %v1196 = vunpack.c.h.b16 %v903
    %v1197 = vunpack.c.l.b16 %v904
    %v1198 = vunpack.c.h.b16 %v904
    %v1199 = vpack.c.b16 %v1005, %v1003
    %v1200 = vpack.c.b16 %v1006, %v1004
    %v1201 = vpack.c.b16 %v1009, %v1007
    %v1202 = vpack.c.b16 %v1010, %v1008
    %v1203 = vpack.c.b16 %v1013, %v1011
    %v1204 = vpack.c.b16 %v1014, %v1012
    %v1205 = vpack.c.b16 %v1017, %v1015
    %v1206 = vpack.c.b16 %v1018, %v1016
    %v1207 = vpack.c.b16 %v1021, %v1019
    %v1208 = vpack.c.b16 %v1022, %v1020
    %v1209 = vpack.c.b16 %v1025, %v1023
    %v1210 = vpack.c.b16 %v1026, %v1024
    %v1211 = vpack.c.b16 %v1029, %v1027
    %v1212 = vpack.c.b16 %v1030, %v1028
    %v1213 = vpack.c.b16 %v1033, %v1031
    %v1214 = vpack.c.b16 %v1034, %v1032
    %v1215 = vpack.c.b16 %v1037, %v1035
    %v1216 = vpack.c.b16 %v1038, %v1036
    %v1217 = vpack.c.b16 %v1041, %v1039
    %v1218 = vpack.c.b16 %v1042, %v1040
    %v1219 = vpack.c.b16 %v1045, %v1043
    %v1220 = vpack.c.b16 %v1046, %v1044
    %v1221 = vpack.c.b16 %v1049, %v1047
    %v1222 = vpack.c.b16 %v1050, %v1048
    %v1223 = vpack.c.b16 %v1053, %v1051
    %v1224 = vpack.c.b16 %v1054, %v1052
    %v1225 = vpack.c.b16 %v1057, %v1055
    %v1226 = vpack.c.b16 %v1058, %v1056
    %v1227 = vpack.c.b16 %v1061, %v1059
    %v1228 = vpack.c.b16 %v1062, %v1060
    %v1229 = vpack.c.b16 %v1065, %v1063
    %v1230 = vpack.c.b16 %v1066, %v1064
    %v1231 = vpack.c.b16 %v1069, %v1067
    %v1232 = vpack.c.b16 %v1070, %v1068
    %v1233 = vpack.c.b16 %v1073, %v1071
    %v1234 = vpack.c.b16 %v1074, %v1072
    %v1235 = vpack.c.b16 %v1077, %v1075
    %v1236 = vpack.c.b16 %v1078, %v1076
    %v1237 = vpack.c.b16 %v1081, %v1079
    %v1238 = vpack.c.b16 %v1082, %v1080
    %v1239 = vpack.c.b16 %v1085, %v1083
    %v1240 = vpack.c.b16 %v1086, %v1084
    %v1241 = vpack.c.b16 %v1089, %v1087
    %v1242 = vpack.c.b16 %v1090, %v1088
    %v1243 = vpack.c.b16 %v1093, %v1091
    %v1244 = vpack.c.b16 %v1094, %v1092
    %v1245 = vpack.c.b16 %v1097, %v1095
    %v1246 = vpack.c.b16 %v1098, %v1096
    %v1247 = vpack.c.b16 %v1101, %v1099
    %v1248 = vpack.c.b16 %v1102, %v1100
    %v1249 = vpack.c.b16 %v1105, %v1103
    %v1250 = vpack.c.b16 %v1106, %v1104
    %v1251 = vpack.c.b16 %v1109, %v1107
    %v1252 = vpack.c.b16 %v1110, %v1108
    %v1253 = vpack.c.b16 %v1113, %v1111
    %v1254 = vpack.c.b16 %v1114, %v1112
    %v1255 = vpack.c.b16 %v1117, %v1115
    %v1256 = vpack.c.b16 %v1118, %v1116
    %v1257 = vpack.c.b16 %v1121, %v1119
    %v1258 = vpack.c.b16 %v1122, %v1120
    %v1259 = vpack.c.b16 %v1125, %v1123
    %v1260 = vpack.c.b16 %v1126, %v1124
    %v1261 = vpack.c.b16 %v1129, %v1127
    %v1262 = vpack.c.b16 %v1130, %v1128
    %v1263 = vpack.c.b16 %v1133, %v1131
    %v1264 = vpack.c.b16 %v1134, %v1132
    %v1265 = vpack.c.b16 %v1137, %v1135
    %v1266 = vpack.c.b16 %v1138, %v1136
    %v1267 = vpack.c.b16 %v1141, %v1139
    %v1268 = vpack.c.b16 %v1142, %v1140
    %v1269 = vpack.c.b16 %v1145, %v1143
    %v1270 = vpack.c.b16 %v1146, %v1144
    %v1271 = vpack.c.b16 %v1149, %v1147
    %v1272 = vpack.c.b16 %v1150, %v1148
    %v1273 = vpack.c.b16 %v1153, %v1151
    %v1274 = vpack.c.b16 %v1154, %v1152
    %v1275 = vpack.c.b16 %v1157, %v1155
    %v1276 = vpack.c.b16 %v1158, %v1156
    %v1277 = vpack.c.b16 %v1161, %v1159
    %v1278 = vpack.c.b16 %v1162, %v1160
    %v1279 = vpack.c.b16 %v1165, %v1163
    %v1280 = vpack.c.b16 %v1166, %v1164
    %v1281 = vpack.c.b16 %v1169, %v1167
    %v1282 = vpack.c.b16 %v1170, %v1168
    %v1283 = vpack.c.b16 %v1173, %v1171
    %v1284 = vpack.c.b16 %v1174, %v1172
    %v1285 = vpack.c.b16 %v1177, %v1175
    %v1286 = vpack.c.b16 %v1178, %v1176
    %v1287 = vpack.c.b16 %v1181, %v1179
    %v1288 = vpack.c.b16 %v1182, %v1180
    %v1289 = vpack.c.b16 %v1185, %v1183
    %v1290 = vpack.c.b16 %v1186, %v1184
    %v1291 = vpack.c.b16 %v1189, %v1187
    %v1292 = vpack.c.b16 %v1190, %v1188
    %v1293 = vpack.c.b16 %v1193, %v1191
    %v1294 = vpack.c.b16 %v1194, %v1192
    %v1295 = vpack.c.b16 %v1197, %v1195
    %v1296 = vpack.c.b16 %v1198, %v1196
    %1395 = vmatprep.subr.bf16.mxu0 %v1200
    %1396 = vmatpush1.bf16.msra.mxu0 %v1199
    %1397 = vmatprep.subr.bf16.mxu0 %v1202
    %1398 = vmatpush1.bf16.msra.mxu0 %v1201
    %1399 = vmatprep.subr.bf16.mxu0 %v1204
    %1400 = vmatpush1.bf16.msra.mxu0 %v1203
    %1401 = vmatprep.subr.bf16.mxu0 %v1206
    %1402 = vmatpush1.bf16.msra.mxu0 %v1205
    %1403 = vmatprep.subr.bf16.mxu0 %v1208
    %1404 = vmatpush1.bf16.msra.mxu0 %v1207
    %1405 = vmatprep.subr.bf16.mxu0 %v1210
    %1406 = vmatpush1.bf16.msra.mxu0 %v1209
    %1407 = vmatprep.subr.bf16.mxu0 %v1212
    %1408 = vmatpush1.bf16.msra.mxu0 %v1211
    %1409 = vmatprep.subr.bf16.mxu0 %v1214
    %1410 = vmatpush1.bf16.msra.mxu0 %v1213
    %1411 = vmatprep.subr.bf16.mxu0 %v1216
    %1412 = vmatpush1.bf16.msra.mxu0 %v1215
    %1413 = vmatprep.subr.bf16.mxu0 %v1218
    %1414 = vmatpush1.bf16.msra.mxu0 %v1217
    %1415 = vmatprep.subr.bf16.mxu0 %v1220
    %1416 = vmatpush1.bf16.msra.mxu0 %v1219
    %1417 = vmatprep.subr.bf16.mxu0 %v1222
    %1418 = vmatpush1.bf16.msra.mxu0 %v1221
    %1419 = vmatprep.subr.bf16.mxu0 %v1224
    %1420 = vmatpush1.bf16.msra.mxu0 %v1223
    %1421 = vmatprep.subr.bf16.mxu0 %v1226
    %1422 = vmatpush1.bf16.msra.mxu0 %v1225
    %1423 = vmatprep.subr.bf16.mxu0 %v1228
    %1424 = vmatpush1.bf16.msra.mxu0 %v1227
    %1425 = vmatprep.subr.bf16.mxu0 %v1230
    %1426 = vmatpush1.bf16.msra.mxu0 %v1229
    %1427 = vmatprep.mubr.bf16.mxu0 %v136
    %1428 = vmatmul.mubr.bf16.gmra.mrb[0].mxu0 %v135
    %v1429 = vpop.f32.mrb[0].mxu0
    %v1430 = vadd.f32 0.0, %v1429
    %v1431 = vpop.f32.mrb[0].mxu0
    %v1432 = vadd.f32 0.0, %v1431
    %v1433 = vpop.f32.mrb[0].mxu0
    %v1434 = vpop.f32.mrb[0].mxu0
    %1435 = vdwg.mxu0
    %1436 = vmatprep.subr.bf16.mxu0 %v1232
    %1437 = vmatpush1.bf16.msra.mxu0 %v1231
    %1438 = vmatprep.subr.bf16.mxu0 %v1234
    %1439 = vmatpush1.bf16.msra.mxu0 %v1233
    %1440 = vmatprep.subr.bf16.mxu0 %v1236
    %1441 = vmatpush1.bf16.msra.mxu0 %v1235
    %1442 = vmatprep.subr.bf16.mxu0 %v1238
    %1443 = vmatpush1.bf16.msra.mxu0 %v1237
    %1444 = vmatprep.subr.bf16.mxu0 %v1240
    %1445 = vmatpush1.bf16.msra.mxu0 %v1239
    %1446 = vmatprep.subr.bf16.mxu0 %v1242
    %1447 = vmatpush1.bf16.msra.mxu0 %v1241
    %1448 = vmatprep.subr.bf16.mxu0 %v1244
    %1449 = vmatpush1.bf16.msra.mxu0 %v1243
    %1450 = vmatprep.subr.bf16.mxu0 %v1246
    %1451 = vmatpush1.bf16.msra.mxu0 %v1245
    %1452 = vmatprep.subr.bf16.mxu0 %v1248
    %1453 = vmatpush1.bf16.msra.mxu0 %v1247
    %1454 = vmatprep.subr.bf16.mxu0 %v1250
    %1455 = vmatpush1.bf16.msra.mxu0 %v1249
    %1456 = vmatprep.subr.bf16.mxu0 %v1252
    %1457 = vmatpush1.bf16.msra.mxu0 %v1251
    %1458 = vmatprep.subr.bf16.mxu0 %v1254
    %1459 = vmatpush1.bf16.msra.mxu0 %v1253
    %1460 = vmatprep.subr.bf16.mxu0 %v1256
    %1461 = vmatpush1.bf16.msra.mxu0 %v1255
    %1462 = vmatprep.subr.bf16.mxu0 %v1258
    %1463 = vmatpush1.bf16.msra.mxu0 %v1257
    %1464 = vmatprep.subr.bf16.mxu0 %v1260
    %1465 = vmatpush1.bf16.msra.mxu0 %v1259
    %1466 = vmatprep.subr.bf16.mxu0 %v1262
    %1467 = vmatpush1.bf16.msra.mxu0 %v1261
    %1468 = vmatprep.mubr.bf16.mxu0 %v138
    %1469 = vmatmul.mubr.bf16.gmra.mrb[0].mxu0 %v137
    %v1470 = vpop.f32.mrb[0].mxu0
    %v1471 = vadd.f32 %v1430, %v1470
    %v1472 = vpop.f32.mrb[0].mxu0
    %v1473 = vadd.f32 %v1432, %v1472
    %v1474 = vpop.f32.mrb[0].mxu0
    %v1475 = vpop.f32.mrb[0].mxu0
    %1476 = vdwg.mxu0
    %1477 = vmatprep.subr.bf16.mxu0 %v1264
    %1478 = vmatpush1.bf16.msra.mxu0 %v1263
    %1479 = vmatprep.subr.bf16.mxu0 %v1266
    %1480 = vmatpush1.bf16.msra.mxu0 %v1265
    %1481 = vmatprep.subr.bf16.mxu0 %v1268
    %1482 = vmatpush1.bf16.msra.mxu0 %v1267
    %1483 = vmatprep.subr.bf16.mxu0 %v1270
    %1484 = vmatpush1.bf16.msra.mxu0 %v1269
    %1485 = vmatprep.subr.bf16.mxu0 %v1272
    %1486 = vmatpush1.bf16.msra.mxu0 %v1271
    %1487 = vmatprep.subr.bf16.mxu0 %v1274
    %1488 = vmatpush1.bf16.msra.mxu0 %v1273
    %1489 = vmatprep.subr.bf16.mxu0 %v1276
    %1490 = vmatpush1.bf16.msra.mxu0 %v1275
    %1491 = vmatprep.subr.bf16.mxu0 %v1278
    %1492 = vmatpush1.bf16.msra.mxu0 %v1277
    %1493 = vmatprep.subr.bf16.mxu0 %v1280
    %1494 = vmatpush1.bf16.msra.mxu0 %v1279
    %1495 = vmatprep.subr.bf16.mxu0 %v1282
    %1496 = vmatpush1.bf16.msra.mxu0 %v1281
    %1497 = vmatprep.subr.bf16.mxu0 %v1284
    %1498 = vmatpush1.bf16.msra.mxu0 %v1283
    %1499 = vmatprep.subr.bf16.mxu0 %v1286
    %1500 = vmatpush1.bf16.msra.mxu0 %v1285
    %1501 = vmatprep.subr.bf16.mxu0 %v1288
    %1502 = vmatpush1.bf16.msra.mxu0 %v1287
    %1503 = vmatprep.subr.bf16.mxu0 %v1290
    %1504 = vmatpush1.bf16.msra.mxu0 %v1289
    %1505 = vmatprep.subr.bf16.mxu0 %v1292
    %1506 = vmatpush1.bf16.msra.mxu0 %v1291
    %1507 = vmatprep.subr.bf16.mxu0 %v1294
    %1508 = vmatpush1.bf16.msra.mxu0 %v1293
    %1509 = vmatprep.mubr.bf16.mxu0 %v140
    %1510 = vmatmul.mubr.bf16.gmra.mrb[0].mxu0 %v139
    %v1511 = vpop.f32.mrb[0].mxu0
    %v1512 = vadd.f32 %v1471, %v1511
    %v1513 = vpop.f32.mrb[0].mxu0
    %v1514 = vadd.f32 %v1473, %v1513
    %v1515 = vpop.f32.mrb[0].mxu0
    %v1516 = vpop.f32.mrb[0].mxu0
    %1517 = vdwg.mxu0
    %1518 = vmatprep.subr.bf16.mxu0 %v1296
    %1519 = vmatpush1.bf16.msra.mxu0 %v1295
    %1520 = vmatprep.subr.bf16.mxu0 0
    %1521 = vmatpush1.bf16.msra.mxu0 0
    %1522 = vmatprep.subr.bf16.mxu0 0
    %1523 = vmatpush1.bf16.msra.mxu0 0
    %1524 = vmatprep.subr.bf16.mxu0 0
    %1525 = vmatpush1.bf16.msra.mxu0 0
    %1526 = vmatprep.subr.bf16.mxu0 0
    %1527 = vmatpush1.bf16.msra.mxu0 0
    %1528 = vmatprep.subr.bf16.mxu0 0
    %1529 = vmatpush1.bf16.msra.mxu0 0
    %1530 = vmatprep.subr.bf16.mxu0 0
    %1531 = vmatpush1.bf16.msra.mxu0 0
    %1532 = vmatprep.subr.bf16.mxu0 0
    %1533 = vmatpush1.bf16.msra.mxu0 0
    %1534 = vmatprep.subr.bf16.mxu0 0
    %1535 = vmatpush1.bf16.msra.mxu0 0
    %1536 = vmatprep.subr.bf16.mxu0 0
    %1537 = vmatpush1.bf16.msra.mxu0 0
    %1538 = vmatprep.subr.bf16.mxu0 0
    %1539 = vmatpush1.bf16.msra.mxu0 0
    %1540 = vmatprep.subr.bf16.mxu0 0
    %1541 = vmatpush1.bf16.msra.mxu0 0
    %1542 = vmatprep.subr.bf16.mxu0 0
    %1543 = vmatpush1.bf16.msra.mxu0 0
    %1544 = vmatprep.subr.bf16.mxu0 0
    %1545 = vmatpush1.bf16.msra.mxu0 0
    %1546 = vmatprep.subr.bf16.mxu0 0
    %1547 = vmatpush1.bf16.msra.mxu0 0
    %1548 = vmatprep.subr.bf16.mxu0 0
    %1549 = vmatpush1.bf16.msra.mxu0 0
    %1550 = vmatprep.mubr.bf16.mxu0 0
    %1551 = vmatmul.mubr.bf16.gmra.mrb[0].mxu0 %v640
    %v1552 = vpop.f32.mrb[0].mxu0
    %v1553 = vadd.f32 %v1512, %v1552
    %v1554 = vpop.f32.mrb[0].mxu0
    %v1555 = vadd.f32 %v1514, %v1554
    %v1556 = vpop.f32.mrb[0].mxu0
    %v1557 = vpop.f32.mrb[0].mxu0
    %1558 = vdwg.mxu0
    %v1559 = vmax.f32 %v800, %v1553
    %v1560 = vmax.f32 %v802, %v1555
    %s1561 = scalar_lea.vmem %s1, 1568
    %v1562 = vld [vmem:[%s1561] sm:$0xff]
    %v1563 = vld [vmem:[%s1561 + $0x8] sm:$0xff]
    %v1564 = vld [vmem:[%s1561 + $0x10] sm:$0xff]
    %v1565 = vld [vmem:[%s1561 + $0x18] sm:$0xff]
    %v1566 = vld [vmem:[%s1561 + $0x20] sm:$0xff]
    %v1567 = vld [vmem:[%s1561 + $0x28] sm:$0xff]
    %v1568 = vld [vmem:[%s1561 + $0x30] sm:$0xff]
    %v1569 = vld [vmem:[%s1561 + $0x38] sm:$0xff]
    %v1570 = vld [vmem:[%s1561 + $0x40] sm:$0xff]
    %v1571 = vld [vmem:[%s1561 + $0x48] sm:$0xff]
    %v1572 = vld [vmem:[%s1561 + $0x50] sm:$0xff]
    %v1573 = vld [vmem:[%s1561 + $0x58] sm:$0xff]
    %v1574 = vld [vmem:[%s1561 + $0x60] sm:$0xff]
    %v1575 = vld [vmem:[%s1561 + $0x68] sm:$0xff]
    %v1576 = vld [vmem:[%s1561 + $0x70] sm:$0xff]
    %v1577 = vld [vmem:[%s1561 + $0x78] sm:$0xff]
    %v1578 = vld [vmem:[%s1561 + $0x80] sm:$0xff]
    %v1579 = vld [vmem:[%s1561 + $0x88] sm:$0xff]
    %v1580 = vld [vmem:[%s1561 + $0x90] sm:$0xff]
    %v1581 = vld [vmem:[%s1561 + $0x98] sm:$0xff]
    %v1582 = vld [vmem:[%s1561 + $0xa0] sm:$0xff]
    %v1583 = vld [vmem:[%s1561 + $0xa8] sm:$0xff]
    %v1584 = vld [vmem:[%s1561 + $0xb0] sm:$0xff]
    %v1585 = vld [vmem:[%s1561 + $0xb8] sm:$0xff]
    %v1586 = vld [vmem:[%s1561 + $0xc0] sm:$0xff]
    %v1587 = vld [vmem:[%s1561 + $0xc8] sm:$0xff]
    %v1588 = vld [vmem:[%s1561 + $0xd0] sm:$0xff]
    %v1589 = vld [vmem:[%s1561 + $0xd8] sm:$0xff]
    %v1590 = vld [vmem:[%s1561 + $0xe0] sm:$0xff]
    %v1591 = vld [vmem:[%s1561 + $0xe8] sm:$0xff]
    %v1592 = vld [vmem:[%s1561 + $0xf0] sm:$0xff]
    %v1593 = vld [vmem:[%s1561 + $0xf8] sm:$0xff]
    %v1594 = vld [vmem:[%s1561 + $0x100] sm:$0xff]
    %v1595 = vld [vmem:[%s1561 + $0x108] sm:$0xff]
    %v1596 = vld [vmem:[%s1561 + $0x110] sm:$0xff]
    %v1597 = vld [vmem:[%s1561 + $0x118] sm:$0xff]
    %v1598 = vld [vmem:[%s1561 + $0x120] sm:$0xff]
    %v1599 = vld [vmem:[%s1561 + $0x128] sm:$0xff]
    %v1600 = vld [vmem:[%s1561 + $0x130] sm:$0xff]
    %v1601 = vld [vmem:[%s1561 + $0x138] sm:$0xff]
    %v1602 = vld [vmem:[%s1561 + $0x140] sm:$0xff]
    %v1603 = vld [vmem:[%s1561 + $0x148] sm:$0xff]
    %v1604 = vld [vmem:[%s1561 + $0x150] sm:$0xff]
    %v1605 = vld [vmem:[%s1561 + $0x158] sm:$0xff]
    %v1606 = vld [vmem:[%s1561 + $0x160] sm:$0xff]
    %v1607 = vld [vmem:[%s1561 + $0x168] sm:$0xff]
    %v1608 = vld [vmem:[%s1561 + $0x170] sm:$0xff]
    %v1609 = vld [vmem:[%s1561 + $0x178] sm:$0xff]
    %v1610 = vld [vmem:[%s1561 + $0x180] sm:$0xff]
    %v1611 = vld [vmem:[%s1561 + $0x188] sm:$0xff]
    %v1612 = vld [vmem:[%s1561 + $0x190] sm:$0xff]
    %v1613 = vld [vmem:[%s1561 + $0x198] sm:$0xff]
    %v1614 = vld [vmem:[%s1561 + $0x1a0] sm:$0xff]
    %v1615 = vld [vmem:[%s1561 + $0x1a8] sm:$0xff]
    %v1616 = vld [vmem:[%s1561 + $0x1b0] sm:$0xff]
    %v1617 = vld [vmem:[%s1561 + $0x1b8] sm:$0xff]
    %v1618 = vld [vmem:[%s1561 + $0x1c0] sm:$0xff]
    %v1619 = vld [vmem:[%s1561 + $0x1c8] sm:$0xff]
    %v1620 = vld [vmem:[%s1561 + $0x1d0] sm:$0xff]
    %v1621 = vld [vmem:[%s1561 + $0x1d8] sm:$0xff]
    %v1622 = vld [vmem:[%s1561 + $0x1e0] sm:$0xff]
    %v1623 = vld [vmem:[%s1561 + $0x1e8] sm:$0xff]
    %v1624 = vld [vmem:[%s1561 + $0x1f0] sm:$0xff]
    %v1625 = vld [vmem:[%s1561 + $0x1f8] sm:$0xff]
    %v1626 = vld [vmem:[%s1561 + $0x200] sm:$0xff]
    %v1627 = vld [vmem:[%s1561 + $0x208] sm:$0xff]
    %v1628 = vld [vmem:[%s1561 + $0x210] sm:$0xff]
    %v1629 = vld [vmem:[%s1561 + $0x218] sm:$0xff]
    %v1630 = vld [vmem:[%s1561 + $0x220] sm:$0xff]
    %v1631 = vld [vmem:[%s1561 + $0x228] sm:$0xff]
    %v1632 = vld [vmem:[%s1561 + $0x230] sm:$0xff]
    %v1633 = vld [vmem:[%s1561 + $0x238] sm:$0xff]
    %v1634 = vld [vmem:[%s1561 + $0x240] sm:$0xff]
    %v1635 = vld [vmem:[%s1561 + $0x248] sm:$0xff]
    %v1636 = vld [vmem:[%s1561 + $0x250] sm:$0xff]
    %v1637 = vld [vmem:[%s1561 + $0x258] sm:$0xff]
    %v1638 = vld [vmem:[%s1561 + $0x260] sm:$0xff]
    %v1639 = vld [vmem:[%s1561 + $0x268] sm:$0xff]
    %v1640 = vld [vmem:[%s1561 + $0x270] sm:$0xff]
    %v1641 = vld [vmem:[%s1561 + $0x278] sm:$0xff]
    %v1642 = vld [vmem:[%s1561 + $0x280] sm:$0xff]
    %v1643 = vld [vmem:[%s1561 + $0x288] sm:$0xff]
    %v1644 = vld [vmem:[%s1561 + $0x290] sm:$0xff]
    %v1645 = vld [vmem:[%s1561 + $0x298] sm:$0xff]
    %v1646 = vld [vmem:[%s1561 + $0x2a0] sm:$0xff]
    %v1647 = vld [vmem:[%s1561 + $0x2a8] sm:$0xff]
    %v1648 = vld [vmem:[%s1561 + $0x2b0] sm:$0xff]
    %v1649 = vld [vmem:[%s1561 + $0x2b8] sm:$0xff]
    %v1650 = vld [vmem:[%s1561 + $0x2c0] sm:$0xff]
    %v1651 = vld [vmem:[%s1561 + $0x2c8] sm:$0xff]
    %v1652 = vld [vmem:[%s1561 + $0x2d0] sm:$0xff]
    %v1653 = vld [vmem:[%s1561 + $0x2d8] sm:$0xff]
    %v1654 = vld [vmem:[%s1561 + $0x2e0] sm:$0xff]
    %v1655 = vld [vmem:[%s1561 + $0x2e8] sm:$0xff]
    %v1656 = vld [vmem:[%s1561 + $0x2f0] sm:$0xff]
    %v1657 = vld [vmem:[%s1561 + $0x2f8] sm:$0xff]
    %v1658 = vld [vmem:[%s1561 + $0x300] sm:$0xff]
    %v1659 = vld [vmem:[%s1561 + $0x308] sm:$0xff]
    %v1758 = vunpack.c.l.b16 %v1562
    %v1759 = vunpack.c.h.b16 %v1562
    %v1760 = vunpack.c.l.b16 %v1563
    %v1761 = vunpack.c.h.b16 %v1563
    %v1762 = vunpack.c.l.b16 %v1564
    %v1763 = vunpack.c.h.b16 %v1564
    %v1764 = vunpack.c.l.b16 %v1565
    %v1765 = vunpack.c.h.b16 %v1565
    %v1766 = vunpack.c.l.b16 %v1566
    %v1767 = vunpack.c.h.b16 %v1566
    %v1768 = vunpack.c.l.b16 %v1567
    %v1769 = vunpack.c.h.b16 %v1567
    %v1770 = vunpack.c.l.b16 %v1568
    %v1771 = vunpack.c.h.b16 %v1568
    %v1772 = vunpack.c.l.b16 %v1569
    %v1773 = vunpack.c.h.b16 %v1569
    %v1774 = vunpack.c.l.b16 %v1570
    %v1775 = vunpack.c.h.b16 %v1570
    %v1776 = vunpack.c.l.b16 %v1571
    %v1777 = vunpack.c.h.b16 %v1571
    %v1778 = vunpack.c.l.b16 %v1572
    %v1779 = vunpack.c.h.b16 %v1572
    %v1780 = vunpack.c.l.b16 %v1573
    %v1781 = vunpack.c.h.b16 %v1573
    %v1782 = vunpack.c.l.b16 %v1574
    %v1783 = vunpack.c.h.b16 %v1574
    %v1784 = vunpack.c.l.b16 %v1575
    %v1785 = vunpack.c.h.b16 %v1575
    %v1786 = vunpack.c.l.b16 %v1576
    %v1787 = vunpack.c.h.b16 %v1576
    %v1788 = vunpack.c.l.b16 %v1577
    %v1789 = vunpack.c.h.b16 %v1577
    %v1790 = vunpack.c.l.b16 %v1578
    %v1791 = vunpack.c.h.b16 %v1578
    %v1792 = vunpack.c.l.b16 %v1579
    %v1793 = vunpack.c.h.b16 %v1579
    %v1794 = vunpack.c.l.b16 %v1580
    %v1795 = vunpack.c.h.b16 %v1580
    %v1796 = vunpack.c.l.b16 %v1581
    %v1797 = vunpack.c.h.b16 %v1581
    %v1798 = vunpack.c.l.b16 %v1582
    %v1799 = vunpack.c.h.b16 %v1582
    %v1800 = vunpack.c.l.b16 %v1583
    %v1801 = vunpack.c.h.b16 %v1583
    %v1802 = vunpack.c.l.b16 %v1584
    %v1803 = vunpack.c.h.b16 %v1584
    %v1804 = vunpack.c.l.b16 %v1585
    %v1805 = vunpack.c.h.b16 %v1585
    %v1806 = vunpack.c.l.b16 %v1586
    %v1807 = vunpack.c.h.b16 %v1586
    %v1808 = vunpack.c.l.b16 %v1587
    %v1809 = vunpack.c.h.b16 %v1587
    %v1810 = vunpack.c.l.b16 %v1588
    %v1811 = vunpack.c.h.b16 %v1588
    %v1812 = vunpack.c.l.b16 %v1589
    %v1813 = vunpack.c.h.b16 %v1589
    %v1814 = vunpack.c.l.b16 %v1590
    %v1815 = vunpack.c.h.b16 %v1590
    %v1816 = vunpack.c.l.b16 %v1591
    %v1817 = vunpack.c.h.b16 %v1591
    %v1818 = vunpack.c.l.b16 %v1592
    %v1819 = vunpack.c.h.b16 %v1592
    %v1820 = vunpack.c.l.b16 %v1593
    %v1821 = vunpack.c.h.b16 %v1593
    %v1822 = vunpack.c.l.b16 %v1594
    %v1823 = vunpack.c.h.b16 %v1594
    %v1824 = vunpack.c.l.b16 %v1595
    %v1825 = vunpack.c.h.b16 %v1595
    %v1826 = vunpack.c.l.b16 %v1596
    %v1827 = vunpack.c.h.b16 %v1596
    %v1828 = vunpack.c.l.b16 %v1597
    %v1829 = vunpack.c.h.b16 %v1597
    %v1830 = vunpack.c.l.b16 %v1598
    %v1831 = vunpack.c.h.b16 %v1598
    %v1832 = vunpack.c.l.b16 %v1599
    %v1833 = vunpack.c.h.b16 %v1599
    %v1834 = vunpack.c.l.b16 %v1600
    %v1835 = vunpack.c.h.b16 %v1600
    %v1836 = vunpack.c.l.b16 %v1601
    %v1837 = vunpack.c.h.b16 %v1601
    %v1838 = vunpack.c.l.b16 %v1602
    %v1839 = vunpack.c.h.b16 %v1602
    %v1840 = vunpack.c.l.b16 %v1603
    %v1841 = vunpack.c.h.b16 %v1603
    %v1842 = vunpack.c.l.b16 %v1604
    %v1843 = vunpack.c.h.b16 %v1604
    %v1844 = vunpack.c.l.b16 %v1605
    %v1845 = vunpack.c.h.b16 %v1605
    %v1846 = vunpack.c.l.b16 %v1606
    %v1847 = vunpack.c.h.b16 %v1606
    %v1848 = vunpack.c.l.b16 %v1607
    %v1849 = vunpack.c.h.b16 %v1607
    %v1850 = vunpack.c.l.b16 %v1608
    %v1851 = vunpack.c.h.b16 %v1608
    %v1852 = vunpack.c.l.b16 %v1609
    %v1853 = vunpack.c.h.b16 %v1609
    %v1854 = vunpack.c.l.b16 %v1610
    %v1855 = vunpack.c.h.b16 %v1610
    %v1856 = vunpack.c.l.b16 %v1611
    %v1857 = vunpack.c.h.b16 %v1611
    %v1858 = vunpack.c.l.b16 %v1612
    %v1859 = vunpack.c.h.b16 %v1612
    %v1860 = vunpack.c.l.b16 %v1613
    %v1861 = vunpack.c.h.b16 %v1613
    %v1862 = vunpack.c.l.b16 %v1614
    %v1863 = vunpack.c.h.b16 %v1614
    %v1864 = vunpack.c.l.b16 %v1615
    %v1865 = vunpack.c.h.b16 %v1615
    %v1866 = vunpack.c.l.b16 %v1616
    %v1867 = vunpack.c.h.b16 %v1616
    %v1868 = vunpack.c.l.b16 %v1617
    %v1869 = vunpack.c.h.b16 %v1617
    %v1870 = vunpack.c.l.b16 %v1618
    %v1871 = vunpack.c.h.b16 %v1618
    %v1872 = vunpack.c.l.b16 %v1619
    %v1873 = vunpack.c.h.b16 %v1619
    %v1874 = vunpack.c.l.b16 %v1620
    %v1875 = vunpack.c.h.b16 %v1620
    %v1876 = vunpack.c.l.b16 %v1621
    %v1877 = vunpack.c.h.b16 %v1621
    %v1878 = vunpack.c.l.b16 %v1622
    %v1879 = vunpack.c.h.b16 %v1622
    %v1880 = vunpack.c.l.b16 %v1623
    %v1881 = vunpack.c.h.b16 %v1623
    %v1882 = vunpack.c.l.b16 %v1624
    %v1883 = vunpack.c.h.b16 %v1624
    %v1884 = vunpack.c.l.b16 %v1625
    %v1885 = vunpack.c.h.b16 %v1625
    %v1886 = vunpack.c.l.b16 %v1626
    %v1887 = vunpack.c.h.b16 %v1626
    %v1888 = vunpack.c.l.b16 %v1627
    %v1889 = vunpack.c.h.b16 %v1627
    %v1890 = vunpack.c.l.b16 %v1628
    %v1891 = vunpack.c.h.b16 %v1628
    %v1892 = vunpack.c.l.b16 %v1629
    %v1893 = vunpack.c.h.b16 %v1629
    %v1894 = vunpack.c.l.b16 %v1630
    %v1895 = vunpack.c.h.b16 %v1630
    %v1896 = vunpack.c.l.b16 %v1631
    %v1897 = vunpack.c.h.b16 %v1631
    %v1898 = vunpack.c.l.b16 %v1632
    %v1899 = vunpack.c.h.b16 %v1632
    %v1900 = vunpack.c.l.b16 %v1633
    %v1901 = vunpack.c.h.b16 %v1633
    %v1902 = vunpack.c.l.b16 %v1634
    %v1903 = vunpack.c.h.b16 %v1634
    %v1904 = vunpack.c.l.b16 %v1635
    %v1905 = vunpack.c.h.b16 %v1635
    %v1906 = vunpack.c.l.b16 %v1636
    %v1907 = vunpack.c.h.b16 %v1636
    %v1908 = vunpack.c.l.b16 %v1637
    %v1909 = vunpack.c.h.b16 %v1637
    %v1910 = vunpack.c.l.b16 %v1638
    %v1911 = vunpack.c.h.b16 %v1638
    %v1912 = vunpack.c.l.b16 %v1639
    %v1913 = vunpack.c.h.b16 %v1639
    %v1914 = vunpack.c.l.b16 %v1640
    %v1915 = vunpack.c.h.b16 %v1640
    %v1916 = vunpack.c.l.b16 %v1641
    %v1917 = vunpack.c.h.b16 %v1641
    %v1918 = vunpack.c.l.b16 %v1642
    %v1919 = vunpack.c.h.b16 %v1642
    %v1920 = vunpack.c.l.b16 %v1643
    %v1921 = vunpack.c.h.b16 %v1643
    %v1922 = vunpack.c.l.b16 %v1644
    %v1923 = vunpack.c.h.b16 %v1644
    %v1924 = vunpack.c.l.b16 %v1645
    %v1925 = vunpack.c.h.b16 %v1645
    %v1926 = vunpack.c.l.b16 %v1646
    %v1927 = vunpack.c.h.b16 %v1646
    %v1928 = vunpack.c.l.b16 %v1647
    %v1929 = vunpack.c.h.b16 %v1647
    %v1930 = vunpack.c.l.b16 %v1648
    %v1931 = vunpack.c.h.b16 %v1648
    %v1932 = vunpack.c.l.b16 %v1649
    %v1933 = vunpack.c.h.b16 %v1649
    %v1934 = vunpack.c.l.b16 %v1650
    %v1935 = vunpack.c.h.b16 %v1650
    %v1936 = vunpack.c.l.b16 %v1651
    %v1937 = vunpack.c.h.b16 %v1651
    %v1938 = vunpack.c.l.b16 %v1652
    %v1939 = vunpack.c.h.b16 %v1652
    %v1940 = vunpack.c.l.b16 %v1653
    %v1941 = vunpack.c.h.b16 %v1653
    %v1942 = vunpack.c.l.b16 %v1654
    %v1943 = vunpack.c.h.b16 %v1654
    %v1944 = vunpack.c.l.b16 %v1655
    %v1945 = vunpack.c.h.b16 %v1655
    %v1946 = vunpack.c.l.b16 %v1656
    %v1947 = vunpack.c.h.b16 %v1656
    %v1948 = vunpack.c.l.b16 %v1657
    %v1949 = vunpack.c.h.b16 %v1657
    %v1950 = vunpack.c.l.b16 %v1658
    %v1951 = vunpack.c.h.b16 %v1658
    %v1952 = vunpack.c.l.b16 %v1659
    %v1953 = vunpack.c.h.b16 %v1659
    %v1954 = vpack.c.b16 %v1760, %v1758
    %v1955 = vpack.c.b16 %v1761, %v1759
    %v1956 = vpack.c.b16 %v1764, %v1762
    %v1957 = vpack.c.b16 %v1765, %v1763
    %v1958 = vpack.c.b16 %v1768, %v1766
    %v1959 = vpack.c.b16 %v1769, %v1767
    %v1960 = vpack.c.b16 %v1772, %v1770
    %v1961 = vpack.c.b16 %v1773, %v1771
    %v1962 = vpack.c.b16 %v1776, %v1774
    %v1963 = vpack.c.b16 %v1777, %v1775
    %v1964 = vpack.c.b16 %v1780, %v1778
    %v1965 = vpack.c.b16 %v1781, %v1779
    %v1966 = vpack.c.b16 %v1784, %v1782
    %v1967 = vpack.c.b16 %v1785, %v1783
    %v1968 = vpack.c.b16 %v1788, %v1786
    %v1969 = vpack.c.b16 %v1789, %v1787
    %v1970 = vpack.c.b16 %v1792, %v1790
    %v1971 = vpack.c.b16 %v1793, %v1791
    %v1972 = vpack.c.b16 %v1796, %v1794
    %v1973 = vpack.c.b16 %v1797, %v1795
    %v1974 = vpack.c.b16 %v1800, %v1798
    %v1975 = vpack.c.b16 %v1801, %v1799
    %v1976 = vpack.c.b16 %v1804, %v1802
    %v1977 = vpack.c.b16 %v1805, %v1803
    %v1978 = vpack.c.b16 %v1808, %v1806
    %v1979 = vpack.c.b16 %v1809, %v1807
    %v1980 = vpack.c.b16 %v1812, %v1810
    %v1981 = vpack.c.b16 %v1813, %v1811
    %v1982 = vpack.c.b16 %v1816, %v1814
    %v1983 = vpack.c.b16 %v1817, %v1815
    %v1984 = vpack.c.b16 %v1820, %v1818
    %v1985 = vpack.c.b16 %v1821, %v1819
    %v1986 = vpack.c.b16 %v1824, %v1822
    %v1987 = vpack.c.b16 %v1825, %v1823
    %v1988 = vpack.c.b16 %v1828, %v1826
    %v1989 = vpack.c.b16 %v1829, %v1827
    %v1990 = vpack.c.b16 %v1832, %v1830
    %v1991 = vpack.c.b16 %v1833, %v1831
    %v1992 = vpack.c.b16 %v1836, %v1834
    %v1993 = vpack.c.b16 %v1837, %v1835
    %v1994 = vpack.c.b16 %v1840, %v1838
    %v1995 = vpack.c.b16 %v1841, %v1839
    %v1996 = vpack.c.b16 %v1844, %v1842
    %v1997 = vpack.c.b16 %v1845, %v1843
    %v1998 = vpack.c.b16 %v1848, %v1846
    %v1999 = vpack.c.b16 %v1849, %v1847
    %v2000 = vpack.c.b16 %v1852, %v1850
    %v2001 = vpack.c.b16 %v1853, %v1851
    %v2002 = vpack.c.b16 %v1856, %v1854
    %v2003 = vpack.c.b16 %v1857, %v1855
    %v2004 = vpack.c.b16 %v1860, %v1858
    %v2005 = vpack.c.b16 %v1861, %v1859
    %v2006 = vpack.c.b16 %v1864, %v1862
    %v2007 = vpack.c.b16 %v1865, %v1863
    %v2008 = vpack.c.b16 %v1868, %v1866
    %v2009 = vpack.c.b16 %v1869, %v1867
    %v2010 = vpack.c.b16 %v1872, %v1870
    %v2011 = vpack.c.b16 %v1873, %v1871
    %v2012 = vpack.c.b16 %v1876, %v1874
    %v2013 = vpack.c.b16 %v1877, %v1875
    %v2014 = vpack.c.b16 %v1880, %v1878
    %v2015 = vpack.c.b16 %v1881, %v1879
    %v2016 = vpack.c.b16 %v1884, %v1882
    %v2017 = vpack.c.b16 %v1885, %v1883
    %v2018 = vpack.c.b16 %v1888, %v1886
    %v2019 = vpack.c.b16 %v1889, %v1887
    %v2020 = vpack.c.b16 %v1892, %v1890
    %v2021 = vpack.c.b16 %v1893, %v1891
    %v2022 = vpack.c.b16 %v1896, %v1894
    %v2023 = vpack.c.b16 %v1897, %v1895
    %v2024 = vpack.c.b16 %v1900, %v1898
    %v2025 = vpack.c.b16 %v1901, %v1899
    %v2026 = vpack.c.b16 %v1904, %v1902
    %v2027 = vpack.c.b16 %v1905, %v1903
    %v2028 = vpack.c.b16 %v1908, %v1906
    %v2029 = vpack.c.b16 %v1909, %v1907
    %v2030 = vpack.c.b16 %v1912, %v1910
    %v2031 = vpack.c.b16 %v1913, %v1911
    %v2032 = vpack.c.b16 %v1916, %v1914
    %v2033 = vpack.c.b16 %v1917, %v1915
    %v2034 = vpack.c.b16 %v1920, %v1918
    %v2035 = vpack.c.b16 %v1921, %v1919
    %v2036 = vpack.c.b16 %v1924, %v1922
    %v2037 = vpack.c.b16 %v1925, %v1923
    %v2038 = vpack.c.b16 %v1928, %v1926
    %v2039 = vpack.c.b16 %v1929, %v1927
    %v2040 = vpack.c.b16 %v1932, %v1930
    %v2041 = vpack.c.b16 %v1933, %v1931
    %v2042 = vpack.c.b16 %v1936, %v1934
    %v2043 = vpack.c.b16 %v1937, %v1935
    %v2044 = vpack.c.b16 %v1940, %v1938
    %v2045 = vpack.c.b16 %v1941, %v1939
    %v2046 = vpack.c.b16 %v1944, %v1942
    %v2047 = vpack.c.b16 %v1945, %v1943
    %v2048 = vpack.c.b16 %v1948, %v1946
    %v2049 = vpack.c.b16 %v1949, %v1947
    %v2050 = vpack.c.b16 %v1952, %v1950
    %v2051 = vpack.c.b16 %v1953, %v1951
    %2150 = vmatprep.subr.bf16.mxu0 %v1955
    %2151 = vmatpush1.bf16.msra.mxu0 %v1954
    %2152 = vmatprep.subr.bf16.mxu0 %v1957
    %2153 = vmatpush1.bf16.msra.mxu0 %v1956
    %2154 = vmatprep.subr.bf16.mxu0 %v1959
    %2155 = vmatpush1.bf16.msra.mxu0 %v1958
    %2156 = vmatprep.subr.bf16.mxu0 %v1961
    %2157 = vmatpush1.bf16.msra.mxu0 %v1960
    %2158 = vmatprep.subr.bf16.mxu0 %v1963
    %2159 = vmatpush1.bf16.msra.mxu0 %v1962
    %2160 = vmatprep.subr.bf16.mxu0 %v1965
    %2161 = vmatpush1.bf16.msra.mxu0 %v1964
    %2162 = vmatprep.subr.bf16.mxu0 %v1967
    %2163 = vmatpush1.bf16.msra.mxu0 %v1966
    %2164 = vmatprep.subr.bf16.mxu0 %v1969
    %2165 = vmatpush1.bf16.msra.mxu0 %v1968
    %2166 = vmatprep.subr.bf16.mxu0 %v1971
    %2167 = vmatpush1.bf16.msra.mxu0 %v1970
    %2168 = vmatprep.subr.bf16.mxu0 %v1973
    %2169 = vmatpush1.bf16.msra.mxu0 %v1972
    %2170 = vmatprep.subr.bf16.mxu0 %v1975
    %2171 = vmatpush1.bf16.msra.mxu0 %v1974
    %2172 = vmatprep.subr.bf16.mxu0 %v1977
    %2173 = vmatpush1.bf16.msra.mxu0 %v1976
    %2174 = vmatprep.subr.bf16.mxu0 %v1979
    %2175 = vmatpush1.bf16.msra.mxu0 %v1978
    %2176 = vmatprep.subr.bf16.mxu0 %v1981
    %2177 = vmatpush1.bf16.msra.mxu0 %v1980
    %2178 = vmatprep.subr.bf16.mxu0 %v1983
    %2179 = vmatpush1.bf16.msra.mxu0 %v1982
    %2180 = vmatprep.subr.bf16.mxu0 %v1985
    %2181 = vmatpush1.bf16.msra.mxu0 %v1984
    %2182 = vmatprep.mubr.bf16.mxu0 %v136
    %2183 = vmatmul.mubr.bf16.gmra.mrb[0].mxu0 %v135
    %v2184 = vpop.f32.mrb[0].mxu0
    %v2185 = vadd.f32 0.0, %v2184
    %v2186 = vpop.f32.mrb[0].mxu0
    %v2187 = vadd.f32 0.0, %v2186
    %v2188 = vpop.f32.mrb[0].mxu0
    %v2189 = vpop.f32.mrb[0].mxu0
    %2190 = vdwg.mxu0
    %2191 = vmatprep.subr.bf16.mxu0 %v1987
    %2192 = vmatpush1.bf16.msra.mxu0 %v1986
    %2193 = vmatprep.subr.bf16.mxu0 %v1989
    %2194 = vmatpush1.bf16.msra.mxu0 %v1988
    %2195 = vmatprep.subr.bf16.mxu0 %v1991
    %2196 = vmatpush1.bf16.msra.mxu0 %v1990
    %2197 = vmatprep.subr.bf16.mxu0 %v1993
    %2198 = vmatpush1.bf16.msra.mxu0 %v1992
    %2199 = vmatprep.subr.bf16.mxu0 %v1995
    %2200 = vmatpush1.bf16.msra.mxu0 %v1994
    %2201 = vmatprep.subr.bf16.mxu0 %v1997
    %2202 = vmatpush1.bf16.msra.mxu0 %v1996
    %2203 = vmatprep.subr.bf16.mxu0 %v1999
    %2204 = vmatpush1.bf16.msra.mxu0 %v1998
    %2205 = vmatprep.subr.bf16.mxu0 %v2001
    %2206 = vmatpush1.bf16.msra.mxu0 %v2000
    %2207 = vmatprep.subr.bf16.mxu0 %v2003
    %2208 = vmatpush1.bf16.msra.mxu0 %v2002
    %2209 = vmatprep.subr.bf16.mxu0 %v2005
    %2210 = vmatpush1.bf16.msra.mxu0 %v2004
    %2211 = vmatprep.subr.bf16.mxu0 %v2007
    %2212 = vmatpush1.bf16.msra.mxu0 %v2006
    %2213 = vmatprep.subr.bf16.mxu0 %v2009
    %2214 = vmatpush1.bf16.msra.mxu0 %v2008
    %2215 = vmatprep.subr.bf16.mxu0 %v2011
    %2216 = vmatpush1.bf16.msra.mxu0 %v2010
    %2217 = vmatprep.subr.bf16.mxu0 %v2013
    %2218 = vmatpush1.bf16.msra.mxu0 %v2012
    %2219 = vmatprep.subr.bf16.mxu0 %v2015
    %2220 = vmatpush1.bf16.msra.mxu0 %v2014
    %2221 = vmatprep.subr.bf16.mxu0 %v2017
    %2222 = vmatpush1.bf16.msra.mxu0 %v2016
    %2223 = vmatprep.mubr.bf16.mxu0 %v138
    %2224 = vmatmul.mubr.bf16.gmra.mrb[0].mxu0 %v137
    %v2225 = vpop.f32.mrb[0].mxu0
    %v2226 = vadd.f32 %v2185, %v2225
    %v2227 = vpop.f32.mrb[0].mxu0
    %v2228 = vadd.f32 %v2187, %v2227
    %v2229 = vpop.f32.mrb[0].mxu0
    %v2230 = vpop.f32.mrb[0].mxu0
    %2231 = vdwg.mxu0
    %2232 = vmatprep.subr.bf16.mxu0 %v2019
    %2233 = vmatpush1.bf16.msra.mxu0 %v2018
    %2234 = vmatprep.subr.bf16.mxu0 %v2021
    %2235 = vmatpush1.bf16.msra.mxu0 %v2020
    %2236 = vmatprep.subr.bf16.mxu0 %v2023
    %2237 = vmatpush1.bf16.msra.mxu0 %v2022
    %2238 = vmatprep.subr.bf16.mxu0 %v2025
    %2239 = vmatpush1.bf16.msra.mxu0 %v2024
    %2240 = vmatprep.subr.bf16.mxu0 %v2027
    %2241 = vmatpush1.bf16.msra.mxu0 %v2026
    %2242 = vmatprep.subr.bf16.mxu0 %v2029
    %2243 = vmatpush1.bf16.msra.mxu0 %v2028
    %2244 = vmatprep.subr.bf16.mxu0 %v2031
    %2245 = vmatpush1.bf16.msra.mxu0 %v2030
    %2246 = vmatprep.subr.bf16.mxu0 %v2033
    %2247 = vmatpush1.bf16.msra.mxu0 %v2032
    %2248 = vmatprep.subr.bf16.mxu0 %v2035
    %2249 = vmatpush1.bf16.msra.mxu0 %v2034
    %2250 = vmatprep.subr.bf16.mxu0 %v2037
    %2251 = vmatpush1.bf16.msra.mxu0 %v2036
    %2252 = vmatprep.subr.bf16.mxu0 %v2039
    %2253 = vmatpush1.bf16.msra.mxu0 %v2038
    %2254 = vmatprep.subr.bf16.mxu0 %v2041
    %2255 = vmatpush1.bf16.msra.mxu0 %v2040
    %2256 = vmatprep.subr.bf16.mxu0 %v2043
    %2257 = vmatpush1.bf16.msra.mxu0 %v2042
    %2258 = vmatprep.subr.bf16.mxu0 %v2045
    %2259 = vmatpush1.bf16.msra.mxu0 %v2044
    %2260 = vmatprep.subr.bf16.mxu0 %v2047
    %2261 = vmatpush1.bf16.msra.mxu0 %v2046
    %2262 = vmatprep.subr.bf16.mxu0 %v2049
    %2263 = vmatpush1.bf16.msra.mxu0 %v2048
    %2264 = vmatprep.mubr.bf16.mxu0 %v140
    %2265 = vmatmul.mubr.bf16.gmra.mrb[0].mxu0 %v139
    %v2266 = vpop.f32.mrb[0].mxu0
    %v2267 = vadd.f32 %v2226, %v2266
    %v2268 = vpop.f32.mrb[0].mxu0
    %v2269 = vadd.f32 %v2228, %v2268
    %v2270 = vpop.f32.mrb[0].mxu0
    %v2271 = vpop.f32.mrb[0].mxu0
    %2272 = vdwg.mxu0
    %2273 = vmatprep.subr.bf16.mxu0 %v2051
    %2274 = vmatpush1.bf16.msra.mxu0 %v2050
    %2275 = vmatprep.subr.bf16.mxu0 0
    %2276 = vmatpush1.bf16.msra.mxu0 0
    %2277 = vmatprep.subr.bf16.mxu0 0
    %2278 = vmatpush1.bf16.msra.mxu0 0
    %2279 = vmatprep.subr.bf16.mxu0 0
    %2280 = vmatpush1.bf16.msra.mxu0 0
    %2281 = vmatprep.subr.bf16.mxu0 0
    %2282 = vmatpush1.bf16.msra.mxu0 0
    %2283 = vmatprep.subr.bf16.mxu0 0
    %2284 = vmatpush1.bf16.msra.mxu0 0
    %2285 = vmatprep.subr.bf16.mxu0 0
    %2286 = vmatpush1.bf16.msra.mxu0 0
    %2287 = vmatprep.subr.bf16.mxu0 0
    %2288 = vmatpush1.bf16.msra.mxu0 0
    %2289 = vmatprep.subr.bf16.mxu0 0
    %2290 = vmatpush1.bf16.msra.mxu0 0
    %2291 = vmatprep.subr.bf16.mxu0 0
    %2292 = vmatpush1.bf16.msra.mxu0 0
    %2293 = vmatprep.subr.bf16.mxu0 0
    %2294 = vmatpush1.bf16.msra.mxu0 0
    %2295 = vmatprep.subr.bf16.mxu0 0
    %2296 = vmatpush1.bf16.msra.mxu0 0
    %2297 = vmatprep.subr.bf16.mxu0 0
    %2298 = vmatpush1.bf16.msra.mxu0 0
    %2299 = vmatprep.subr.bf16.mxu0 0
    %2300 = vmatpush1.bf16.msra.mxu0 0
    %2301 = vmatprep.subr.bf16.mxu0 0
    %2302 = vmatpush1.bf16.msra.mxu0 0
    %2303 = vmatprep.subr.bf16.mxu0 0
    %2304 = vmatpush1.bf16.msra.mxu0 0
    %2305 = vmatprep.mubr.bf16.mxu0 0
    %2306 = vmatmul.mubr.bf16.gmra.mrb[0].mxu0 %v640
    %v2307 = vpop.f32.mrb[0].mxu0
    %v2308 = vadd.f32 %v2267, %v2307
    %v2309 = vpop.f32.mrb[0].mxu0
    %v2310 = vadd.f32 %v2269, %v2309
    %v2311 = vpop.f32.mrb[0].mxu0
    %v2312 = vpop.f32.mrb[0].mxu0
    %2313 = vdwg.mxu0
    %v2314 = vmax.f32 %v1559, %v2308
    %v2315 = vmax.f32 %v1560, %v2310
    %s2316 = scalar_lea.vmem %s1, 2352
    %v2317 = vld [vmem:[%s2316] sm:$0xff]
    %v2318 = vld [vmem:[%s2316 + $0x8] sm:$0xff]
    %v2319 = vld [vmem:[%s2316 + $0x10] sm:$0xff]
    %v2320 = vld [vmem:[%s2316 + $0x18] sm:$0xff]
    %v2321 = vld [vmem:[%s2316 + $0x20] sm:$0xff]
    %v2322 = vld [vmem:[%s2316 + $0x28] sm:$0xff]
    %v2323 = vld [vmem:[%s2316 + $0x30] sm:$0xff]
    %v2324 = vld [vmem:[%s2316 + $0x38] sm:$0xff]
    %v2325 = vld [vmem:[%s2316 + $0x40] sm:$0xff]
    %v2326 = vld [vmem:[%s2316 + $0x48] sm:$0xff]
    %v2327 = vld [vmem:[%s2316 + $0x50] sm:$0xff]
    %v2328 = vld [vmem:[%s2316 + $0x58] sm:$0xff]
    %v2329 = vld [vmem:[%s2316 + $0x60] sm:$0xff]
    %v2330 = vld [vmem:[%s2316 + $0x68] sm:$0xff]
    %v2331 = vld [vmem:[%s2316 + $0x70] sm:$0xff]
    %v2332 = vld [vmem:[%s2316 + $0x78] sm:$0xff]
    %v2333 = vld [vmem:[%s2316 + $0x80] sm:$0xff]
    %v2334 = vld [vmem:[%s2316 + $0x88] sm:$0xff]
    %v2335 = vld [vmem:[%s2316 + $0x90] sm:$0xff]
    %v2336 = vld [vmem:[%s2316 + $0x98] sm:$0xff]
    %v2337 = vld [vmem:[%s2316 + $0xa0] sm:$0xff]
    %v2338 = vld [vmem:[%s2316 + $0xa8] sm:$0xff]
    %v2339 = vld [vmem:[%s2316 + $0xb0] sm:$0xff]
    %v2340 = vld [vmem:[%s2316 + $0xb8] sm:$0xff]
    %v2341 = vld [vmem:[%s2316 + $0xc0] sm:$0xff]
    %v2342 = vld [vmem:[%s2316 + $0xc8] sm:$0xff]
    %v2343 = vld [vmem:[%s2316 + $0xd0] sm:$0xff]
    %v2344 = vld [vmem:[%s2316 + $0xd8] sm:$0xff]
    %v2345 = vld [vmem:[%s2316 + $0xe0] sm:$0xff]
    %v2346 = vld [vmem:[%s2316 + $0xe8] sm:$0xff]
    %v2347 = vld [vmem:[%s2316 + $0xf0] sm:$0xff]
    %v2348 = vld [vmem:[%s2316 + $0xf8] sm:$0xff]
    %v2349 = vld [vmem:[%s2316 + $0x100] sm:$0xff]
    %v2350 = vld [vmem:[%s2316 + $0x108] sm:$0xff]
    %v2351 = vld [vmem:[%s2316 + $0x110] sm:$0xff]
    %v2352 = vld [vmem:[%s2316 + $0x118] sm:$0xff]
    %v2353 = vld [vmem:[%s2316 + $0x120] sm:$0xff]
    %v2354 = vld [vmem:[%s2316 + $0x128] sm:$0xff]
    %v2355 = vld [vmem:[%s2316 + $0x130] sm:$0xff]
    %v2356 = vld [vmem:[%s2316 + $0x138] sm:$0xff]
    %v2357 = vld [vmem:[%s2316 + $0x140] sm:$0xff]
    %v2358 = vld [vmem:[%s2316 + $0x148] sm:$0xff]
    %v2359 = vld [vmem:[%s2316 + $0x150] sm:$0xff]
    %v2360 = vld [vmem:[%s2316 + $0x158] sm:$0xff]
    %v2361 = vld [vmem:[%s2316 + $0x160] sm:$0xff]
    %v2362 = vld [vmem:[%s2316 + $0x168] sm:$0xff]
    %v2363 = vld [vmem:[%s2316 + $0x170] sm:$0xff]
    %v2364 = vld [vmem:[%s2316 + $0x178] sm:$0xff]
    %v2365 = vld [vmem:[%s2316 + $0x180] sm:$0xff]
    %v2366 = vld [vmem:[%s2316 + $0x188] sm:$0xff]
    %v2367 = vld [vmem:[%s2316 + $0x190] sm:$0xff]
    %v2368 = vld [vmem:[%s2316 + $0x198] sm:$0xff]
    %v2369 = vld [vmem:[%s2316 + $0x1a0] sm:$0xff]
    %v2370 = vld [vmem:[%s2316 + $0x1a8] sm:$0xff]
    %v2371 = vld [vmem:[%s2316 + $0x1b0] sm:$0xff]
    %v2372 = vld [vmem:[%s2316 + $0x1b8] sm:$0xff]
    %v2373 = vld [vmem:[%s2316 + $0x1c0] sm:$0xff]
    %v2374 = vld [vmem:[%s2316 + $0x1c8] sm:$0xff]
    %v2375 = vld [vmem:[%s2316 + $0x1d0] sm:$0xff]
    %v2376 = vld [vmem:[%s2316 + $0x1d8] sm:$0xff]
    %v2377 = vld [vmem:[%s2316 + $0x1e0] sm:$0xff]
    %v2378 = vld [vmem:[%s2316 + $0x1e8] sm:$0xff]
    %v2379 = vld [vmem:[%s2316 + $0x1f0] sm:$0xff]
    %v2380 = vld [vmem:[%s2316 + $0x1f8] sm:$0xff]
    %v2381 = vld [vmem:[%s2316 + $0x200] sm:$0xff]
    %v2382 = vld [vmem:[%s2316 + $0x208] sm:$0xff]
    %v2383 = vld [vmem:[%s2316 + $0x210] sm:$0xff]
    %v2384 = vld [vmem:[%s2316 + $0x218] sm:$0xff]
    %v2385 = vld [vmem:[%s2316 + $0x220] sm:$0xff]
    %v2386 = vld [vmem:[%s2316 + $0x228] sm:$0xff]
    %v2387 = vld [vmem:[%s2316 + $0x230] sm:$0xff]
    %v2388 = vld [vmem:[%s2316 + $0x238] sm:$0xff]
    %v2389 = vld [vmem:[%s2316 + $0x240] sm:$0xff]
    %v2390 = vld [vmem:[%s2316 + $0x248] sm:$0xff]
    %v2391 = vld [vmem:[%s2316 + $0x250] sm:$0xff]
    %v2392 = vld [vmem:[%s2316 + $0x258] sm:$0xff]
    %v2393 = vld [vmem:[%s2316 + $0x260] sm:$0xff]
    %v2394 = vld [vmem:[%s2316 + $0x268] sm:$0xff]
    %v2395 = vld [vmem:[%s2316 + $0x270] sm:$0xff]
    %v2396 = vld [vmem:[%s2316 + $0x278] sm:$0xff]
    %v2397 = vld [vmem:[%s2316 + $0x280] sm:$0xff]
    %v2398 = vld [vmem:[%s2316 + $0x288] sm:$0xff]
    %v2399 = vld [vmem:[%s2316 + $0x290] sm:$0xff]
    %v2400 = vld [vmem:[%s2316 + $0x298] sm:$0xff]
    %v2401 = vld [vmem:[%s2316 + $0x2a0] sm:$0xff]
    %v2402 = vld [vmem:[%s2316 + $0x2a8] sm:$0xff]
    %v2403 = vld [vmem:[%s2316 + $0x2b0] sm:$0xff]
    %v2404 = vld [vmem:[%s2316 + $0x2b8] sm:$0xff]
    %v2405 = vld [vmem:[%s2316 + $0x2c0] sm:$0xff]
    %v2406 = vld [vmem:[%s2316 + $0x2c8] sm:$0xff]
    %v2407 = vld [vmem:[%s2316 + $0x2d0] sm:$0xff]
    %v2408 = vld [vmem:[%s2316 + $0x2d8] sm:$0xff]
    %v2409 = vld [vmem:[%s2316 + $0x2e0] sm:$0xff]
    %v2410 = vld [vmem:[%s2316 + $0x2e8] sm:$0xff]
    %v2411 = vld [vmem:[%s2316 + $0x2f0] sm:$0xff]
    %v2412 = vld [vmem:[%s2316 + $0x2f8] sm:$0xff]
    %v2413 = vld [vmem:[%s2316 + $0x300] sm:$0xff]
    %v2414 = vld [vmem:[%s2316 + $0x308] sm:$0xff]
    %v2513 = vunpack.c.l.b16 %v2317
    %v2514 = vunpack.c.h.b16 %v2317
    %v2515 = vunpack.c.l.b16 %v2318
    %v2516 = vunpack.c.h.b16 %v2318
    %v2517 = vunpack.c.l.b16 %v2319
    %v2518 = vunpack.c.h.b16 %v2319
    %v2519 = vunpack.c.l.b16 %v2320
    %v2520 = vunpack.c.h.b16 %v2320
    %v2521 = vunpack.c.l.b16 %v2321
    %v2522 = vunpack.c.h.b16 %v2321
    %v2523 = vunpack.c.l.b16 %v2322
    %v2524 = vunpack.c.h.b16 %v2322
    %v2525 = vunpack.c.l.b16 %v2323
    %v2526 = vunpack.c.h.b16 %v2323
    %v2527 = vunpack.c.l.b16 %v2324
    %v2528 = vunpack.c.h.b16 %v2324
    %v2529 = vunpack.c.l.b16 %v2325
    %v2530 = vunpack.c.h.b16 %v2325
    %v2531 = vunpack.c.l.b16 %v2326
    %v2532 = vunpack.c.h.b16 %v2326
    %v2533 = vunpack.c.l.b16 %v2327
    %v2534 = vunpack.c.h.b16 %v2327
    %v2535 = vunpack.c.l.b16 %v2328
    %v2536 = vunpack.c.h.b16 %v2328
    %v2537 = vunpack.c.l.b16 %v2329
    %v2538 = vunpack.c.h.b16 %v2329
    %v2539 = vunpack.c.l.b16 %v2330
    %v2540 = vunpack.c.h.b16 %v2330
    %v2541 = vunpack.c.l.b16 %v2331
    %v2542 = vunpack.c.h.b16 %v2331
    %v2543 = vunpack.c.l.b16 %v2332
    %v2544 = vunpack.c.h.b16 %v2332
    %v2545 = vunpack.c.l.b16 %v2333
    %v2546 = vunpack.c.h.b16 %v2333
    %v2547 = vunpack.c.l.b16 %v2334
    %v2548 = vunpack.c.h.b16 %v2334
    %v2549 = vunpack.c.l.b16 %v2335
    %v2550 = vunpack.c.h.b16 %v2335
    %v2551 = vunpack.c.l.b16 %v2336
    %v2552 = vunpack.c.h.b16 %v2336
    %v2553 = vunpack.c.l.b16 %v2337
    %v2554 = vunpack.c.h.b16 %v2337
    %v2555 = vunpack.c.l.b16 %v2338
    %v2556 = vunpack.c.h.b16 %v2338
    %v2557 = vunpack.c.l.b16 %v2339
    %v2558 = vunpack.c.h.b16 %v2339
    %v2559 = vunpack.c.l.b16 %v2340
    %v2560 = vunpack.c.h.b16 %v2340
    %v2561 = vunpack.c.l.b16 %v2341
    %v2562 = vunpack.c.h.b16 %v2341
    %v2563 = vunpack.c.l.b16 %v2342
    %v2564 = vunpack.c.h.b16 %v2342
    %v2565 = vunpack.c.l.b16 %v2343
    %v2566 = vunpack.c.h.b16 %v2343
    %v2567 = vunpack.c.l.b16 %v2344
    %v2568 = vunpack.c.h.b16 %v2344
    %v2569 = vunpack.c.l.b16 %v2345
    %v2570 = vunpack.c.h.b16 %v2345
    %v2571 = vunpack.c.l.b16 %v2346
    %v2572 = vunpack.c.h.b16 %v2346
    %v2573 = vunpack.c.l.b16 %v2347
    %v2574 = vunpack.c.h.b16 %v2347
    %v2575 = vunpack.c.l.b16 %v2348
    %v2576 = vunpack.c.h.b16 %v2348
    %v2577 = vunpack.c.l.b16 %v2349
    %v2578 = vunpack.c.h.b16 %v2349
    %v2579 = vunpack.c.l.b16 %v2350
    %v2580 = vunpack.c.h.b16 %v2350
    %v2581 = vunpack.c.l.b16 %v2351
    %v2582 = vunpack.c.h.b16 %v2351
    %v2583 = vunpack.c.l.b16 %v2352
    %v2584 = vunpack.c.h.b16 %v2352
    %v2585 = vunpack.c.l.b16 %v2353
    %v2586 = vunpack.c.h.b16 %v2353
    %v2587 = vunpack.c.l.b16 %v2354
    %v2588 = vunpack.c.h.b16 %v2354
    %v2589 = vunpack.c.l.b16 %v2355
    %v2590 = vunpack.c.h.b16 %v2355
    %v2591 = vunpack.c.l.b16 %v2356
    %v2592 = vunpack.c.h.b16 %v2356
    %v2593 = vunpack.c.l.b16 %v2357
    %v2594 = vunpack.c.h.b16 %v2357
    %v2595 = vunpack.c.l.b16 %v2358
    %v2596 = vunpack.c.h.b16 %v2358
    %v2597 = vunpack.c.l.b16 %v2359
    %v2598 = vunpack.c.h.b16 %v2359
    %v2599 = vunpack.c.l.b16 %v2360
    %v2600 = vunpack.c.h.b16 %v2360
    %v2601 = vunpack.c.l.b16 %v2361
    %v2602 = vunpack.c.h.b16 %v2361
    %v2603 = vunpack.c.l.b16 %v2362
    %v2604 = vunpack.c.h.b16 %v2362
    %v2605 = vunpack.c.l.b16 %v2363
    %v2606 = vunpack.c.h.b16 %v2363
    %v2607 = vunpack.c.l.b16 %v2364
    %v2608 = vunpack.c.h.b16 %v2364
    %v2609 = vunpack.c.l.b16 %v2365
    %v2610 = vunpack.c.h.b16 %v2365
    %v2611 = vunpack.c.l.b16 %v2366
    %v2612 = vunpack.c.h.b16 %v2366
    %v2613 = vunpack.c.l.b16 %v2367
    %v2614 = vunpack.c.h.b16 %v2367
    %v2615 = vunpack.c.l.b16 %v2368
    %v2616 = vunpack.c.h.b16 %v2368
    %v2617 = vunpack.c.l.b16 %v2369
    %v2618 = vunpack.c.h.b16 %v2369
    %v2619 = vunpack.c.l.b16 %v2370
    %v2620 = vunpack.c.h.b16 %v2370
    %v2621 = vunpack.c.l.b16 %v2371
    %v2622 = vunpack.c.h.b16 %v2371
    %v2623 = vunpack.c.l.b16 %v2372
    %v2624 = vunpack.c.h.b16 %v2372
    %v2625 = vunpack.c.l.b16 %v2373
    %v2626 = vunpack.c.h.b16 %v2373
    %v2627 = vunpack.c.l.b16 %v2374
    %v2628 = vunpack.c.h.b16 %v2374
    %v2629 = vunpack.c.l.b16 %v2375
    %v2630 = vunpack.c.h.b16 %v2375
    %v2631 = vunpack.c.l.b16 %v2376
    %v2632 = vunpack.c.h.b16 %v2376
    %v2633 = vunpack.c.l.b16 %v2377
    %v2634 = vunpack.c.h.b16 %v2377
    %v2635 = vunpack.c.l.b16 %v2378
    %v2636 = vunpack.c.h.b16 %v2378
    %v2637 = vunpack.c.l.b16 %v2379
    %v2638 = vunpack.c.h.b16 %v2379
    %v2639 = vunpack.c.l.b16 %v2380
    %v2640 = vunpack.c.h.b16 %v2380
    %v2641 = vunpack.c.l.b16 %v2381
    %v2642 = vunpack.c.h.b16 %v2381
    %v2643 = vunpack.c.l.b16 %v2382
    %v2644 = vunpack.c.h.b16 %v2382
    %v2645 = vunpack.c.l.b16 %v2383
    %v2646 = vunpack.c.h.b16 %v2383
    %v2647 = vunpack.c.l.b16 %v2384
    %v2648 = vunpack.c.h.b16 %v2384
    %v2649 = vunpack.c.l.b16 %v2385
    %v2650 = vunpack.c.h.b16 %v2385
    %v2651 = vunpack.c.l.b16 %v2386
    %v2652 = vunpack.c.h.b16 %v2386
    %v2653 = vunpack.c.l.b16 %v2387
    %v2654 = vunpack.c.h.b16 %v2387
    %v2655 = vunpack.c.l.b16 %v2388
    %v2656 = vunpack.c.h.b16 %v2388
    %v2657 = vunpack.c.l.b16 %v2389
    %v2658 = vunpack.c.h.b16 %v2389
    %v2659 = vunpack.c.l.b16 %v2390
    %v2660 = vunpack.c.h.b16 %v2390
    %v2661 = vunpack.c.l.b16 %v2391
    %v2662 = vunpack.c.h.b16 %v2391
    %v2663 = vunpack.c.l.b16 %v2392
    %v2664 = vunpack.c.h.b16 %v2392
    %v2665 = vunpack.c.l.b16 %v2393
    %v2666 = vunpack.c.h.b16 %v2393
    %v2667 = vunpack.c.l.b16 %v2394
    %v2668 = vunpack.c.h.b16 %v2394
    %v2669 = vunpack.c.l.b16 %v2395
    %v2670 = vunpack.c.h.b16 %v2395
    %v2671 = vunpack.c.l.b16 %v2396
    %v2672 = vunpack.c.h.b16 %v2396
    %v2673 = vunpack.c.l.b16 %v2397
    %v2674 = vunpack.c.h.b16 %v2397
    %v2675 = vunpack.c.l.b16 %v2398
    %v2676 = vunpack.c.h.b16 %v2398
    %v2677 = vunpack.c.l.b16 %v2399
    %v2678 = vunpack.c.h.b16 %v2399
    %v2679 = vunpack.c.l.b16 %v2400
    %v2680 = vunpack.c.h.b16 %v2400
    %v2681 = vunpack.c.l.b16 %v2401
    %v2682 = vunpack.c.h.b16 %v2401
    %v2683 = vunpack.c.l.b16 %v2402
    %v2684 = vunpack.c.h.b16 %v2402
    %v2685 = vunpack.c.l.b16 %v2403
    %v2686 = vunpack.c.h.b16 %v2403
    %v2687 = vunpack.c.l.b16 %v2404
    %v2688 = vunpack.c.h.b16 %v2404
    %v2689 = vunpack.c.l.b16 %v2405
    %v2690 = vunpack.c.h.b16 %v2405
    %v2691 = vunpack.c.l.b16 %v2406
    %v2692 = vunpack.c.h.b16 %v2406
    %v2693 = vunpack.c.l.b16 %v2407
    %v2694 = vunpack.c.h.b16 %v2407
    %v2695 = vunpack.c.l.b16 %v2408
    %v2696 = vunpack.c.h.b16 %v2408
    %v2697 = vunpack.c.l.b16 %v2409
    %v2698 = vunpack.c.h.b16 %v2409
    %v2699 = vunpack.c.l.b16 %v2410
    %v2700 = vunpack.c.h.b16 %v2410
    %v2701 = vunpack.c.l.b16 %v2411
    %v2702 = vunpack.c.h.b16 %v2411
    %v2703 = vunpack.c.l.b16 %v2412
    %v2704 = vunpack.c.h.b16 %v2412
    %v2705 = vunpack.c.l.b16 %v2413
    %v2706 = vunpack.c.h.b16 %v2413
    %v2707 = vunpack.c.l.b16 %v2414
    %v2708 = vunpack.c.h.b16 %v2414
    %v2709 = vpack.c.b16 %v2515, %v2513
    %v2710 = vpack.c.b16 %v2516, %v2514
    %v2711 = vpack.c.b16 %v2519, %v2517
    %v2712 = vpack.c.b16 %v2520, %v2518
    %v2713 = vpack.c.b16 %v2523, %v2521
    %v2714 = vpack.c.b16 %v2524, %v2522
    %v2715 = vpack.c.b16 %v2527, %v2525
    %v2716 = vpack.c.b16 %v2528, %v2526
    %v2717 = vpack.c.b16 %v2531, %v2529
    %v2718 = vpack.c.b16 %v2532, %v2530
    %v2719 = vpack.c.b16 %v2535, %v2533
    %v2720 = vpack.c.b16 %v2536, %v2534
    %v2721 = vpack.c.b16 %v2539, %v2537
    %v2722 = vpack.c.b16 %v2540, %v2538
    %v2723 = vpack.c.b16 %v2543, %v2541
    %v2724 = vpack.c.b16 %v2544, %v2542
    %v2725 = vpack.c.b16 %v2547, %v2545
    %v2726 = vpack.c.b16 %v2548, %v2546
    %v2727 = vpack.c.b16 %v2551, %v2549
    %v2728 = vpack.c.b16 %v2552, %v2550
    %v2729 = vpack.c.b16 %v2555, %v2553
    %v2730 = vpack.c.b16 %v2556, %v2554
    %v2731 = vpack.c.b16 %v2559, %v2557
    %v2732 = vpack.c.b16 %v2560, %v2558
    %v2733 = vpack.c.b16 %v2563, %v2561
    %v2734 = vpack.c.b16 %v2564, %v2562
    %v2735 = vpack.c.b16 %v2567, %v2565
    %v2736 = vpack.c.b16 %v2568, %v2566
    %v2737 = vpack.c.b16 %v2571, %v2569
    %v2738 = vpack.c.b16 %v2572, %v2570
    %v2739 = vpack.c.b16 %v2575, %v2573
    %v2740 = vpack.c.b16 %v2576, %v2574
    %v2741 = vpack.c.b16 %v2579, %v2577
    %v2742 = vpack.c.b16 %v2580, %v2578
    %v2743 = vpack.c.b16 %v2583, %v2581
    %v2744 = vpack.c.b16 %v2584, %v2582
    %v2745 = vpack.c.b16 %v2587, %v2585
    %v2746 = vpack.c.b16 %v2588, %v2586
    %v2747 = vpack.c.b16 %v2591, %v2589
    %v2748 = vpack.c.b16 %v2592, %v2590
    %v2749 = vpack.c.b16 %v2595, %v2593
    %v2750 = vpack.c.b16 %v2596, %v2594
    %v2751 = vpack.c.b16 %v2599, %v2597
    %v2752 = vpack.c.b16 %v2600, %v2598
    %v2753 = vpack.c.b16 %v2603, %v2601
    %v2754 = vpack.c.b16 %v2604, %v2602
    %v2755 = vpack.c.b16 %v2607, %v2605
    %v2756 = vpack.c.b16 %v2608, %v2606
    %v2757 = vpack.c.b16 %v2611, %v2609
    %v2758 = vpack.c.b16 %v2612, %v2610
    %v2759 = vpack.c.b16 %v2615, %v2613
    %v2760 = vpack.c.b16 %v2616, %v2614
    %v2761 = vpack.c.b16 %v2619, %v2617
    %v2762 = vpack.c.b16 %v2620, %v2618
    %v2763 = vpack.c.b16 %v2623, %v2621
    %v2764 = vpack.c.b16 %v2624, %v2622
    %v2765 = vpack.c.b16 %v2627, %v2625
    %v2766 = vpack.c.b16 %v2628, %v2626
    %v2767 = vpack.c.b16 %v2631, %v2629
    %v2768 = vpack.c.b16 %v2632, %v2630
    %v2769 = vpack.c.b16 %v2635, %v2633
    %v2770 = vpack.c.b16 %v2636, %v2634
    %v2771 = vpack.c.b16 %v2639, %v2637
    %v2772 = vpack.c.b16 %v2640, %v2638
    %v2773 = vpack.c.b16 %v2643, %v2641
    %v2774 = vpack.c.b16 %v2644, %v2642
    %v2775 = vpack.c.b16 %v2647, %v2645
    %v2776 = vpack.c.b16 %v2648, %v2646
    %v2777 = vpack.c.b16 %v2651, %v2649
    %v2778 = vpack.c.b16 %v2652, %v2650
    %v2779 = vpack.c.b16 %v2655, %v2653
    %v2780 = vpack.c.b16 %v2656, %v2654
    %v2781 = vpack.c.b16 %v2659, %v2657
    %v2782 = vpack.c.b16 %v2660, %v2658
    %v2783 = vpack.c.b16 %v2663, %v2661
    %v2784 = vpack.c.b16 %v2664, %v2662
    %v2785 = vpack.c.b16 %v2667, %v2665
    %v2786 = vpack.c.b16 %v2668, %v2666
    %v2787 = vpack.c.b16 %v2671, %v2669
    %v2788 = vpack.c.b16 %v2672, %v2670
    %v2789 = vpack.c.b16 %v2675, %v2673
    %v2790 = vpack.c.b16 %v2676, %v2674
    %v2791 = vpack.c.b16 %v2679, %v2677
    %v2792 = vpack.c.b16 %v2680, %v2678
    %v2793 = vpack.c.b16 %v2683, %v2681
    %v2794 = vpack.c.b16 %v2684, %v2682
    %v2795 = vpack.c.b16 %v2687, %v2685
    %v2796 = vpack.c.b16 %v2688, %v2686
    %v2797 = vpack.c.b16 %v2691, %v2689
    %v2798 = vpack.c.b16 %v2692, %v2690
    %v2799 = vpack.c.b16 %v2695, %v2693
    %v2800 = vpack.c.b16 %v2696, %v2694
    %v2801 = vpack.c.b16 %v2699, %v2697
    %v2802 = vpack.c.b16 %v2700, %v2698
    %v2803 = vpack.c.b16 %v2703, %v2701
    %v2804 = vpack.c.b16 %v2704, %v2702
    %v2805 = vpack.c.b16 %v2707, %v2705
    %v2806 = vpack.c.b16 %v2708, %v2706
    %2905 = vmatprep.subr.bf16.mxu0 %v2710
    %2906 = vmatpush1.bf16.msra.mxu0 %v2709
    %2907 = vmatprep.subr.bf16.mxu0 %v2712
    %2908 = vmatpush1.bf16.msra.mxu0 %v2711
    %2909 = vmatprep.subr.bf16.mxu0 %v2714
    %2910 = vmatpush1.bf16.msra.mxu0 %v2713
    %2911 = vmatprep.subr.bf16.mxu0 %v2716
    %2912 = vmatpush1.bf16.msra.mxu0 %v2715
    %2913 = vmatprep.subr.bf16.mxu0 %v2718
    %2914 = vmatpush1.bf16.msra.mxu0 %v2717
    %2915 = vmatprep.subr.bf16.mxu0 %v2720
    %2916 = vmatpush1.bf16.msra.mxu0 %v2719
    %2917 = vmatprep.subr.bf16.mxu0 %v2722
    %2918 = vmatpush1.bf16.msra.mxu0 %v2721
    %2919 = vmatprep.subr.bf16.mxu0 %v2724
    %2920 = vmatpush1.bf16.msra.mxu0 %v2723
    %2921 = vmatprep.subr.bf16.mxu0 %v2726
    %2922 = vmatpush1.bf16.msra.mxu0 %v2725
    %2923 = vmatprep.subr.bf16.mxu0 %v2728
    %2924 = vmatpush1.bf16.msra.mxu0 %v2727
    %2925 = vmatprep.subr.bf16.mxu0 %v2730
    %2926 = vmatpush1.bf16.msra.mxu0 %v2729
    %2927 = vmatprep.subr.bf16.mxu0 %v2732
    %2928 = vmatpush1.bf16.msra.mxu0 %v2731
    %2929 = vmatprep.subr.bf16.mxu0 %v2734
    %2930 = vmatpush1.bf16.msra.mxu0 %v2733
    %2931 = vmatprep.subr.bf16.mxu0 %v2736
    %2932 = vmatpush1.bf16.msra.mxu0 %v2735
    %2933 = vmatprep.subr.bf16.mxu0 %v2738
    %2934 = vmatpush1.bf16.msra.mxu0 %v2737
    %2935 = vmatprep.subr.bf16.mxu0 %v2740
    %2936 = vmatpush1.bf16.msra.mxu0 %v2739
    %2937 = vmatprep.mubr.bf16.mxu0 %v136
    %2938 = vmatmul.mubr.bf16.gmra.mrb[0].mxu0 %v135
    %v2939 = vpop.f32.mrb[0].mxu0
    %v2940 = vadd.f32 0.0, %v2939
    %v2941 = vpop.f32.mrb[0].mxu0
    %v2942 = vadd.f32 0.0, %v2941
    %v2943 = vpop.f32.mrb[0].mxu0
    %v2944 = vpop.f32.mrb[0].mxu0
    %2945 = vdwg.mxu0
    %2946 = vmatprep.subr.bf16.mxu0 %v2742
    %2947 = vmatpush1.bf16.msra.mxu0 %v2741
    %2948 = vmatprep.subr.bf16.mxu0 %v2744
    %2949 = vmatpush1.bf16.msra.mxu0 %v2743
    %2950 = vmatprep.subr.bf16.mxu0 %v2746
    %2951 = vmatpush1.bf16.msra.mxu0 %v2745
    %2952 = vmatprep.subr.bf16.mxu0 %v2748
    %2953 = vmatpush1.bf16.msra.mxu0 %v2747
    %2954 = vmatprep.subr.bf16.mxu0 %v2750
    %2955 = vmatpush1.bf16.msra.mxu0 %v2749
    %2956 = vmatprep.subr.bf16.mxu0 %v2752
    %2957 = vmatpush1.bf16.msra.mxu0 %v2751
    %2958 = vmatprep.subr.bf16.mxu0 %v2754
    %2959 = vmatpush1.bf16.msra.mxu0 %v2753
    %2960 = vmatprep.subr.bf16.mxu0 %v2756
    %2961 = vmatpush1.bf16.msra.mxu0 %v2755
    %2962 = vmatprep.subr.bf16.mxu0 %v2758
    %2963 = vmatpush1.bf16.msra.mxu0 %v2757
    %2964 = vmatprep.subr.bf16.mxu0 %v2760
    %2965 = vmatpush1.bf16.msra.mxu0 %v2759
    %2966 = vmatprep.subr.bf16.mxu0 %v2762
    %2967 = vmatpush1.bf16.msra.mxu0 %v2761
    %2968 = vmatprep.subr.bf16.mxu0 %v2764
    %2969 = vmatpush1.bf16.msra.mxu0 %v2763
    %2970 = vmatprep.subr.bf16.mxu0 %v2766
    %2971 = vmatpush1.bf16.msra.mxu0 %v2765
    %2972 = vmatprep.subr.bf16.mxu0 %v2768
    %2973 = vmatpush1.bf16.msra.mxu0 %v2767
    %2974 = vmatprep.subr.bf16.mxu0 %v2770
    %2975 = vmatpush1.bf16.msra.mxu0 %v2769
    %2976 = vmatprep.subr.bf16.mxu0 %v2772
    %2977 = vmatpush1.bf16.msra.mxu0 %v2771
    %2978 = vmatprep.mubr.bf16.mxu0 %v138
    %2979 = vmatmul.mubr.bf16.gmra.mrb[0].mxu0 %v137
    %v2980 = vpop.f32.mrb[0].mxu0
    %v2981 = vadd.f32 %v2940, %v2980
    %v2982 = vpop.f32.mrb[0].mxu0
    %v2983 = vadd.f32 %v2942, %v2982
    %v2984 = vpop.f32.mrb[0].mxu0
    %v2985 = vpop.f32.mrb[0].mxu0
    %2986 = vdwg.mxu0
    %2987 = vmatprep.subr.bf16.mxu0 %v2774
    %2988 = vmatpush1.bf16.msra.mxu0 %v2773
    %2989 = vmatprep.subr.bf16.mxu0 %v2776
    %2990 = vmatpush1.bf16.msra.mxu0 %v2775
    %2991 = vmatprep.subr.bf16.mxu0 %v2778
    %2992 = vmatpush1.bf16.msra.mxu0 %v2777
    %2993 = vmatprep.subr.bf16.mxu0 %v2780
    %2994 = vmatpush1.bf16.msra.mxu0 %v2779
    %2995 = vmatprep.subr.bf16.mxu0 %v2782
    %2996 = vmatpush1.bf16.msra.mxu0 %v2781
    %2997 = vmatprep.subr.bf16.mxu0 %v2784
    %2998 = vmatpush1.bf16.msra.mxu0 %v2783
    %2999 = vmatprep.subr.bf16.mxu0 %v2786
    %3000 = vmatpush1.bf16.msra.mxu0 %v2785
    %3001 = vmatprep.subr.bf16.mxu0 %v2788
    %3002 = vmatpush1.bf16.msra.mxu0 %v2787
    %3003 = vmatprep.subr.bf16.mxu0 %v2790
    %3004 = vmatpush1.bf16.msra.mxu0 %v2789
    %3005 = vmatprep.subr.bf16.mxu0 %v2792
    %3006 = vmatpush1.bf16.msra.mxu0 %v2791
    %3007 = vmatprep.subr.bf16.mxu0 %v2794
    %3008 = vmatpush1.bf16.msra.mxu0 %v2793
    %3009 = vmatprep.subr.bf16.mxu0 %v2796
    %3010 = vmatpush1.bf16.msra.mxu0 %v2795
    %3011 = vmatprep.subr.bf16.mxu0 %v2798
    %3012 = vmatpush1.bf16.msra.mxu0 %v2797
    %3013 = vmatprep.subr.bf16.mxu0 %v2800
    %3014 = vmatpush1.bf16.msra.mxu0 %v2799
    %3015 = vmatprep.subr.bf16.mxu0 %v2802
    %3016 = vmatpush1.bf16.msra.mxu0 %v2801
    %3017 = vmatprep.subr.bf16.mxu0 %v2804
    %3018 = vmatpush1.bf16.msra.mxu0 %v2803
    %3019 = vmatprep.mubr.bf16.mxu0 %v140
    %3020 = vmatmul.mubr.bf16.gmra.mrb[0].mxu0 %v139
    %v3021 = vpop.f32.mrb[0].mxu0
    %v3022 = vadd.f32 %v2981, %v3021
    %v3023 = vpop.f32.mrb[0].mxu0
    %v3024 = vadd.f32 %v2983, %v3023
    %v3025 = vpop.f32.mrb[0].mxu0
    %v3026 = vpop.f32.mrb[0].mxu0
    %3027 = vdwg.mxu0
    %3028 = vmatprep.subr.bf16.mxu0 %v2806
    %3029 = vmatpush1.bf16.msra.mxu0 %v2805
    %3030 = vmatprep.subr.bf16.mxu0 0
    %3031 = vmatpush1.bf16.msra.mxu0 0
    %3032 = vmatprep.subr.bf16.mxu0 0
    %3033 = vmatpush1.bf16.msra.mxu0 0
    %3034 = vmatprep.subr.bf16.mxu0 0
    %3035 = vmatpush1.bf16.msra.mxu0 0
    %3036 = vmatprep.subr.bf16.mxu0 0
    %3037 = vmatpush1.bf16.msra.mxu0 0
    %3038 = vmatprep.subr.bf16.mxu0 0
    %3039 = vmatpush1.bf16.msra.mxu0 0
    %3040 = vmatprep.subr.bf16.mxu0 0
    %3041 = vmatpush1.bf16.msra.mxu0 0
    %3042 = vmatprep.subr.bf16.mxu0 0
    %3043 = vmatpush1.bf16.msra.mxu0 0
    %3044 = vmatprep.subr.bf16.mxu0 0
    %3045 = vmatpush1.bf16.msra.mxu0 0
    %3046 = vmatprep.subr.bf16.mxu0 0
    %3047 = vmatpush1.bf16.msra.mxu0 0
    %3048 = vmatprep.subr.bf16.mxu0 0
    %3049 = vmatpush1.bf16.msra.mxu0 0
    %3050 = vmatprep.subr.bf16.mxu0 0
    %3051 = vmatpush1.bf16.msra.mxu0 0
    %3052 = vmatprep.subr.bf16.mxu0 0
    %3053 = vmatpush1.bf16.msra.mxu0 0
    %3054 = vmatprep.subr.bf16.mxu0 0
    %3055 = vmatpush1.bf16.msra.mxu0 0
    %3056 = vmatprep.subr.bf16.mxu0 0
    %3057 = vmatpush1.bf16.msra.mxu0 0
    %3058 = vmatprep.subr.bf16.mxu0 0
    %3059 = vmatpush1.bf16.msra.mxu0 0
    %3060 = vmatprep.mubr.bf16.mxu0 0
    %3061 = vmatmul.mubr.bf16.gmra.mrb[0].mxu0 %v640
    %v3062 = vpop.f32.mrb[0].mxu0
    %v3063 = vadd.f32 %v3022, %v3062
    %v3064 = vpop.f32.mrb[0].mxu0
    %v3065 = vadd.f32 %v3024, %v3064
    %v3066 = vpop.f32.mrb[0].mxu0
    %v3067 = vpop.f32.mrb[0].mxu0
    %3068 = vdwg.mxu0
    %v3069 = vmax.f32 %v2314, %v3063
    %v3070 = vmax.f32 %v2315, %v3065
    %s3071 = scalar_lea.vmem %s1, 3136
    %v3072 = vld [vmem:[%s3071] sm:$0xff]
    %v3073 = vld [vmem:[%s3071 + $0x8] sm:$0xff]
    %v3074 = vld [vmem:[%s3071 + $0x10] sm:$0xff]
    %v3075 = vld [vmem:[%s3071 + $0x18] sm:$0xff]
    %v3076 = vld [vmem:[%s3071 + $0x20] sm:$0xff]
    %v3077 = vld [vmem:[%s3071 + $0x28] sm:$0xff]
    %v3078 = vld [vmem:[%s3071 + $0x30] sm:$0xff]
    %v3079 = vld [vmem:[%s3071 + $0x38] sm:$0xff]
    %v3080 = vld [vmem:[%s3071 + $0x40] sm:$0xff]
    %v3081 = vld [vmem:[%s3071 + $0x48] sm:$0xff]
    %v3082 = vld [vmem:[%s3071 + $0x50] sm:$0xff]
    %v3083 = vld [vmem:[%s3071 + $0x58] sm:$0xff]
    %v3084 = vld [vmem:[%s3071 + $0x60] sm:$0xff]
    %v3085 = vld [vmem:[%s3071 + $0x68] sm:$0xff]
    %v3086 = vld [vmem:[%s3071 + $0x70] sm:$0xff]
    %v3087 = vld [vmem:[%s3071 + $0x78] sm:$0xff]
    %v3088 = vld [vmem:[%s3071 + $0x80] sm:$0xff]
    %v3089 = vld [vmem:[%s3071 + $0x88] sm:$0xff]
    %v3090 = vld [vmem:[%s3071 + $0x90] sm:$0xff]
    %v3091 = vld [vmem:[%s3071 + $0x98] sm:$0xff]
    %v3092 = vld [vmem:[%s3071 + $0xa0] sm:$0xff]
    %v3093 = vld [vmem:[%s3071 + $0xa8] sm:$0xff]
    %v3094 = vld [vmem:[%s3071 + $0xb0] sm:$0xff]
    %v3095 = vld [vmem:[%s3071 + $0xb8] sm:$0xff]
    %v3096 = vld [vmem:[%s3071 + $0xc0] sm:$0xff]
    %v3097 = vld [vmem:[%s3071 + $0xc8] sm:$0xff]
    %v3098 = vld [vmem:[%s3071 + $0xd0] sm:$0xff]
    %v3099 = vld [vmem:[%s3071 + $0xd8] sm:$0xff]
    %v3100 = vld [vmem:[%s3071 + $0xe0] sm:$0xff]
    %v3101 = vld [vmem:[%s3071 + $0xe8] sm:$0xff]
    %v3102 = vld [vmem:[%s3071 + $0xf0] sm:$0xff]
    %v3103 = vld [vmem:[%s3071 + $0xf8] sm:$0xff]
    %v3104 = vld [vmem:[%s3071 + $0x100] sm:$0xff]
    %v3105 = vld [vmem:[%s3071 + $0x108] sm:$0xff]
    %v3106 = vld [vmem:[%s3071 + $0x110] sm:$0xff]
    %v3107 = vld [vmem:[%s3071 + $0x118] sm:$0xff]
    %v3108 = vld [vmem:[%s3071 + $0x120] sm:$0xff]
    %v3109 = vld [vmem:[%s3071 + $0x128] sm:$0xff]
    %v3110 = vld [vmem:[%s3071 + $0x130] sm:$0xff]
    %v3111 = vld [vmem:[%s3071 + $0x138] sm:$0xff]
    %v3112 = vld [vmem:[%s3071 + $0x140] sm:$0xff]
    %v3113 = vld [vmem:[%s3071 + $0x148] sm:$0xff]
    %v3114 = vld [vmem:[%s3071 + $0x150] sm:$0xff]
    %v3115 = vld [vmem:[%s3071 + $0x158] sm:$0xff]
    %v3116 = vld [vmem:[%s3071 + $0x160] sm:$0xff]
    %v3117 = vld [vmem:[%s3071 + $0x168] sm:$0xff]
    %v3118 = vld [vmem:[%s3071 + $0x170] sm:$0xff]
    %v3119 = vld [vmem:[%s3071 + $0x178] sm:$0xff]
    %v3120 = vld [vmem:[%s3071 + $0x180] sm:$0xff]
    %v3121 = vld [vmem:[%s3071 + $0x188] sm:$0xff]
    %v3122 = vld [vmem:[%s3071 + $0x190] sm:$0xff]
    %v3123 = vld [vmem:[%s3071 + $0x198] sm:$0xff]
    %v3124 = vld [vmem:[%s3071 + $0x1a0] sm:$0xff]
    %v3125 = vld [vmem:[%s3071 + $0x1a8] sm:$0xff]
    %v3126 = vld [vmem:[%s3071 + $0x1b0] sm:$0xff]
    %v3127 = vld [vmem:[%s3071 + $0x1b8] sm:$0xff]
    %v3128 = vld [vmem:[%s3071 + $0x1c0] sm:$0xff]
    %v3129 = vld [vmem:[%s3071 + $0x1c8] sm:$0xff]
    %v3130 = vld [vmem:[%s3071 + $0x1d0] sm:$0xff]
    %v3131 = vld [vmem:[%s3071 + $0x1d8] sm:$0xff]
    %v3132 = vld [vmem:[%s3071 + $0x1e0] sm:$0xff]
    %v3133 = vld [vmem:[%s3071 + $0x1e8] sm:$0xff]
    %v3134 = vld [vmem:[%s3071 + $0x1f0] sm:$0xff]
    %v3135 = vld [vmem:[%s3071 + $0x1f8] sm:$0xff]
    %v3136 = vld [vmem:[%s3071 + $0x200] sm:$0xff]
    %v3137 = vld [vmem:[%s3071 + $0x208] sm:$0xff]
    %v3138 = vld [vmem:[%s3071 + $0x210] sm:$0xff]
    %v3139 = vld [vmem:[%s3071 + $0x218] sm:$0xff]
    %v3140 = vld [vmem:[%s3071 + $0x220] sm:$0xff]
    %v3141 = vld [vmem:[%s3071 + $0x228] sm:$0xff]
    %v3142 = vld [vmem:[%s3071 + $0x230] sm:$0xff]
    %v3143 = vld [vmem:[%s3071 + $0x238] sm:$0xff]
    %v3144 = vld [vmem:[%s3071 + $0x240] sm:$0xff]
    %v3145 = vld [vmem:[%s3071 + $0x248] sm:$0xff]
    %v3146 = vld [vmem:[%s3071 + $0x250] sm:$0xff]
    %v3147 = vld [vmem:[%s3071 + $0x258] sm:$0xff]
    %v3148 = vld [vmem:[%s3071 + $0x260] sm:$0xff]
    %v3149 = vld [vmem:[%s3071 + $0x268] sm:$0xff]
    %v3150 = vld [vmem:[%s3071 + $0x270] sm:$0xff]
    %v3151 = vld [vmem:[%s3071 + $0x278] sm:$0xff]
    %v3152 = vld [vmem:[%s3071 + $0x280] sm:$0xff]
    %v3153 = vld [vmem:[%s3071 + $0x288] sm:$0xff]
    %v3154 = vld [vmem:[%s3071 + $0x290] sm:$0xff]
    %v3155 = vld [vmem:[%s3071 + $0x298] sm:$0xff]
    %v3156 = vld [vmem:[%s3071 + $0x2a0] sm:$0xff]
    %v3157 = vld [vmem:[%s3071 + $0x2a8] sm:$0xff]
    %v3158 = vld [vmem:[%s3071 + $0x2b0] sm:$0xff]
    %v3159 = vld [vmem:[%s3071 + $0x2b8] sm:$0xff]
    %v3160 = vld [vmem:[%s3071 + $0x2c0] sm:$0xff]
    %v3161 = vld [vmem:[%s3071 + $0x2c8] sm:$0xff]
    %v3162 = vld [vmem:[%s3071 + $0x2d0] sm:$0xff]
    %v3163 = vld [vmem:[%s3071 + $0x2d8] sm:$0xff]
    %v3164 = vld [vmem:[%s3071 + $0x2e0] sm:$0xff]
    %v3165 = vld [vmem:[%s3071 + $0x2e8] sm:$0xff]
    %v3166 = vld [vmem:[%s3071 + $0x2f0] sm:$0xff]
    %v3167 = vld [vmem:[%s3071 + $0x2f8] sm:$0xff]
    %v3168 = vld [vmem:[%s3071 + $0x300] sm:$0xff]
    %v3169 = vld [vmem:[%s3071 + $0x308] sm:$0xff]
    %v3268 = vunpack.c.l.b16 %v3072
    %v3269 = vunpack.c.h.b16 %v3072
    %v3270 = vunpack.c.l.b16 %v3073
    %v3271 = vunpack.c.h.b16 %v3073
    %v3272 = vunpack.c.l.b16 %v3074
    %v3273 = vunpack.c.h.b16 %v3074
    %v3274 = vunpack.c.l.b16 %v3075
    %v3275 = vunpack.c.h.b16 %v3075
    %v3276 = vunpack.c.l.b16 %v3076
    %v3277 = vunpack.c.h.b16 %v3076
    %v3278 = vunpack.c.l.b16 %v3077
    %v3279 = vunpack.c.h.b16 %v3077
    %v3280 = vunpack.c.l.b16 %v3078
    %v3281 = vunpack.c.h.b16 %v3078
    %v3282 = vunpack.c.l.b16 %v3079
    %v3283 = vunpack.c.h.b16 %v3079
    %v3284 = vunpack.c.l.b16 %v3080
    %v3285 = vunpack.c.h.b16 %v3080
    %v3286 = vunpack.c.l.b16 %v3081
    %v3287 = vunpack.c.h.b16 %v3081
    %v3288 = vunpack.c.l.b16 %v3082
    %v3289 = vunpack.c.h.b16 %v3082
    %v3290 = vunpack.c.l.b16 %v3083
    %v3291 = vunpack.c.h.b16 %v3083
    %v3292 = vunpack.c.l.b16 %v3084
    %v3293 = vunpack.c.h.b16 %v3084
    %v3294 = vunpack.c.l.b16 %v3085
    %v3295 = vunpack.c.h.b16 %v3085
    %v3296 = vunpack.c.l.b16 %v3086
    %v3297 = vunpack.c.h.b16 %v3086
    %v3298 = vunpack.c.l.b16 %v3087
    %v3299 = vunpack.c.h.b16 %v3087
    %v3300 = vunpack.c.l.b16 %v3088
    %v3301 = vunpack.c.h.b16 %v3088
    %v3302 = vunpack.c.l.b16 %v3089
    %v3303 = vunpack.c.h.b16 %v3089
    %v3304 = vunpack.c.l.b16 %v3090
    %v3305 = vunpack.c.h.b16 %v3090
    %v3306 = vunpack.c.l.b16 %v3091
    %v3307 = vunpack.c.h.b16 %v3091
    %v3308 = vunpack.c.l.b16 %v3092
    %v3309 = vunpack.c.h.b16 %v3092
    %v3310 = vunpack.c.l.b16 %v3093
    %v3311 = vunpack.c.h.b16 %v3093
    %v3312 = vunpack.c.l.b16 %v3094
    %v3313 = vunpack.c.h.b16 %v3094
    %v3314 = vunpack.c.l.b16 %v3095
    %v3315 = vunpack.c.h.b16 %v3095
    %v3316 = vunpack.c.l.b16 %v3096
    %v3317 = vunpack.c.h.b16 %v3096
    %v3318 = vunpack.c.l.b16 %v3097
    %v3319 = vunpack.c.h.b16 %v3097
    %v3320 = vunpack.c.l.b16 %v3098
    %v3321 = vunpack.c.h.b16 %v3098
    %v3322 = vunpack.c.l.b16 %v3099
    %v3323 = vunpack.c.h.b16 %v3099
    %v3324 = vunpack.c.l.b16 %v3100
    %v3325 = vunpack.c.h.b16 %v3100
    %v3326 = vunpack.c.l.b16 %v3101
    %v3327 = vunpack.c.h.b16 %v3101
    %v3328 = vunpack.c.l.b16 %v3102
    %v3329 = vunpack.c.h.b16 %v3102
    %v3330 = vunpack.c.l.b16 %v3103
    %v3331 = vunpack.c.h.b16 %v3103
    %v3332 = vunpack.c.l.b16 %v3104
    %v3333 = vunpack.c.h.b16 %v3104
    %v3334 = vunpack.c.l.b16 %v3105
    %v3335 = vunpack.c.h.b16 %v3105
    %v3336 = vunpack.c.l.b16 %v3106
    %v3337 = vunpack.c.h.b16 %v3106
    %v3338 = vunpack.c.l.b16 %v3107
    %v3339 = vunpack.c.h.b16 %v3107
    %v3340 = vunpack.c.l.b16 %v3108
    %v3341 = vunpack.c.h.b16 %v3108
    %v3342 = vunpack.c.l.b16 %v3109
    %v3343 = vunpack.c.h.b16 %v3109
    %v3344 = vunpack.c.l.b16 %v3110
    %v3345 = vunpack.c.h.b16 %v3110
    %v3346 = vunpack.c.l.b16 %v3111
    %v3347 = vunpack.c.h.b16 %v3111
    %v3348 = vunpack.c.l.b16 %v3112
    %v3349 = vunpack.c.h.b16 %v3112
    %v3350 = vunpack.c.l.b16 %v3113
    %v3351 = vunpack.c.h.b16 %v3113
    %v3352 = vunpack.c.l.b16 %v3114
    %v3353 = vunpack.c.h.b16 %v3114
    %v3354 = vunpack.c.l.b16 %v3115
    %v3355 = vunpack.c.h.b16 %v3115
    %v3356 = vunpack.c.l.b16 %v3116
    %v3357 = vunpack.c.h.b16 %v3116
    %v3358 = vunpack.c.l.b16 %v3117
    %v3359 = vunpack.c.h.b16 %v3117
    %v3360 = vunpack.c.l.b16 %v3118
    %v3361 = vunpack.c.h.b16 %v3118
    %v3362 = vunpack.c.l.b16 %v3119
    %v3363 = vunpack.c.h.b16 %v3119
    %v3364 = vunpack.c.l.b16 %v3120
    %v3365 = vunpack.c.h.b16 %v3120
    %v3366 = vunpack.c.l.b16 %v3121
    %v3367 = vunpack.c.h.b16 %v3121
    %v3368 = vunpack.c.l.b16 %v3122
    %v3369 = vunpack.c.h.b16 %v3122
    %v3370 = vunpack.c.l.b16 %v3123
    %v3371 = vunpack.c.h.b16 %v3123
    %v3372 = vunpack.c.l.b16 %v3124
    %v3373 = vunpack.c.h.b16 %v3124
    %v3374 = vunpack.c.l.b16 %v3125
    %v3375 = vunpack.c.h.b16 %v3125
    %v3376 = vunpack.c.l.b16 %v3126
    %v3377 = vunpack.c.h.b16 %v3126
    %v3378 = vunpack.c.l.b16 %v3127
    %v3379 = vunpack.c.h.b16 %v3127
    %v3380 = vunpack.c.l.b16 %v3128
    %v3381 = vunpack.c.h.b16 %v3128
    %v3382 = vunpack.c.l.b16 %v3129
    %v3383 = vunpack.c.h.b16 %v3129
    %v3384 = vunpack.c.l.b16 %v3130
    %v3385 = vunpack.c.h.b16 %v3130
    %v3386 = vunpack.c.l.b16 %v3131
    %v3387 = vunpack.c.h.b16 %v3131
    %v3388 = vunpack.c.l.b16 %v3132
    %v3389 = vunpack.c.h.b16 %v3132
    %v3390 = vunpack.c.l.b16 %v3133
    %v3391 = vunpack.c.h.b16 %v3133
    %v3392 = vunpack.c.l.b16 %v3134
    %v3393 = vunpack.c.h.b16 %v3134
    %v3394 = vunpack.c.l.b16 %v3135
    %v3395 = vunpack.c.h.b16 %v3135
    %v3396 = vunpack.c.l.b16 %v3136
    %v3397 = vunpack.c.h.b16 %v3136
    %v3398 = vunpack.c.l.b16 %v3137
    %v3399 = vunpack.c.h.b16 %v3137
    %v3400 = vunpack.c.l.b16 %v3138
    %v3401 = vunpack.c.h.b16 %v3138
    %v3402 = vunpack.c.l.b16 %v3139
    %v3403 = vunpack.c.h.b16 %v3139
    %v3404 = vunpack.c.l.b16 %v3140
    %v3405 = vunpack.c.h.b16 %v3140
    %v3406 = vunpack.c.l.b16 %v3141
    %v3407 = vunpack.c.h.b16 %v3141
    %v3408 = vunpack.c.l.b16 %v3142
    %v3409 = vunpack.c.h.b16 %v3142
    %v3410 = vunpack.c.l.b16 %v3143
    %v3411 = vunpack.c.h.b16 %v3143
    %v3412 = vunpack.c.l.b16 %v3144
    %v3413 = vunpack.c.h.b16 %v3144
    %v3414 = vunpack.c.l.b16 %v3145
    %v3415 = vunpack.c.h.b16 %v3145
    %v3416 = vunpack.c.l.b16 %v3146
    %v3417 = vunpack.c.h.b16 %v3146
    %v3418 = vunpack.c.l.b16 %v3147
    %v3419 = vunpack.c.h.b16 %v3147
    %v3420 = vunpack.c.l.b16 %v3148
    %v3421 = vunpack.c.h.b16 %v3148
    %v3422 = vunpack.c.l.b16 %v3149
    %v3423 = vunpack.c.h.b16 %v3149
    %v3424 = vunpack.c.l.b16 %v3150
    %v3425 = vunpack.c.h.b16 %v3150
    %v3426 = vunpack.c.l.b16 %v3151
    %v3427 = vunpack.c.h.b16 %v3151
    %v3428 = vunpack.c.l.b16 %v3152
    %v3429 = vunpack.c.h.b16 %v3152
    %v3430 = vunpack.c.l.b16 %v3153
    %v3431 = vunpack.c.h.b16 %v3153
    %v3432 = vunpack.c.l.b16 %v3154
    %v3433 = vunpack.c.h.b16 %v3154
    %v3434 = vunpack.c.l.b16 %v3155
    %v3435 = vunpack.c.h.b16 %v3155
    %v3436 = vunpack.c.l.b16 %v3156
    %v3437 = vunpack.c.h.b16 %v3156
    %v3438 = vunpack.c.l.b16 %v3157
    %v3439 = vunpack.c.h.b16 %v3157
    %v3440 = vunpack.c.l.b16 %v3158
    %v3441 = vunpack.c.h.b16 %v3158
    %v3442 = vunpack.c.l.b16 %v3159
    %v3443 = vunpack.c.h.b16 %v3159
    %v3444 = vunpack.c.l.b16 %v3160
    %v3445 = vunpack.c.h.b16 %v3160
    %v3446 = vunpack.c.l.b16 %v3161
    %v3447 = vunpack.c.h.b16 %v3161
    %v3448 = vunpack.c.l.b16 %v3162
    %v3449 = vunpack.c.h.b16 %v3162
    %v3450 = vunpack.c.l.b16 %v3163
    %v3451 = vunpack.c.h.b16 %v3163
    %v3452 = vunpack.c.l.b16 %v3164
    %v3453 = vunpack.c.h.b16 %v3164
    %v3454 = vunpack.c.l.b16 %v3165
    %v3455 = vunpack.c.h.b16 %v3165
    %v3456 = vunpack.c.l.b16 %v3166
    %v3457 = vunpack.c.h.b16 %v3166
    %v3458 = vunpack.c.l.b16 %v3167
    %v3459 = vunpack.c.h.b16 %v3167
    %v3460 = vunpack.c.l.b16 %v3168
    %v3461 = vunpack.c.h.b16 %v3168
    %v3462 = vunpack.c.l.b16 %v3169
    %v3463 = vunpack.c.h.b16 %v3169
    %v3464 = vpack.c.b16 %v3270, %v3268
    %v3465 = vpack.c.b16 %v3271, %v3269
    %v3466 = vpack.c.b16 %v3274, %v3272
    %v3467 = vpack.c.b16 %v3275, %v3273
    %v3468 = vpack.c.b16 %v3278, %v3276
    %v3469 = vpack.c.b16 %v3279, %v3277
    %v3470 = vpack.c.b16 %v3282, %v3280
    %v3471 = vpack.c.b16 %v3283, %v3281
    %v3472 = vpack.c.b16 %v3286, %v3284
    %v3473 = vpack.c.b16 %v3287, %v3285
    %v3474 = vpack.c.b16 %v3290, %v3288
    %v3475 = vpack.c.b16 %v3291, %v3289
    %v3476 = vpack.c.b16 %v3294, %v3292
    %v3477 = vpack.c.b16 %v3295, %v3293
    %v3478 = vpack.c.b16 %v3298, %v3296
    %v3479 = vpack.c.b16 %v3299, %v3297
    %v3480 = vpack.c.b16 %v3302, %v3300
    %v3481 = vpack.c.b16 %v3303, %v3301
    %v3482 = vpack.c.b16 %v3306, %v3304
    %v3483 = vpack.c.b16 %v3307, %v3305
    %v3484 = vpack.c.b16 %v3310, %v3308
    %v3485 = vpack.c.b16 %v3311, %v3309
    %v3486 = vpack.c.b16 %v3314, %v3312
    %v3487 = vpack.c.b16 %v3315, %v3313
    %v3488 = vpack.c.b16 %v3318, %v3316
    %v3489 = vpack.c.b16 %v3319, %v3317
    %v3490 = vpack.c.b16 %v3322, %v3320
    %v3491 = vpack.c.b16 %v3323, %v3321
    %v3492 = vpack.c.b16 %v3326, %v3324
    %v3493 = vpack.c.b16 %v3327, %v3325
    %v3494 = vpack.c.b16 %v3330, %v3328
    %v3495 = vpack.c.b16 %v3331, %v3329
    %v3496 = vpack.c.b16 %v3334, %v3332
    %v3497 = vpack.c.b16 %v3335, %v3333
    %v3498 = vpack.c.b16 %v3338, %v3336
    %v3499 = vpack.c.b16 %v3339, %v3337
    %v3500 = vpack.c.b16 %v3342, %v3340
    %v3501 = vpack.c.b16 %v3343, %v3341
    %v3502 = vpack.c.b16 %v3346, %v3344
    %v3503 = vpack.c.b16 %v3347, %v3345
    %v3504 = vpack.c.b16 %v3350, %v3348
    %v3505 = vpack.c.b16 %v3351, %v3349
    %v3506 = vpack.c.b16 %v3354, %v3352
    %v3507 = vpack.c.b16 %v3355, %v3353
    %v3508 = vpack.c.b16 %v3358, %v3356
    %v3509 = vpack.c.b16 %v3359, %v3357
    %v3510 = vpack.c.b16 %v3362, %v3360
    %v3511 = vpack.c.b16 %v3363, %v3361
    %v3512 = vpack.c.b16 %v3366, %v3364
    %v3513 = vpack.c.b16 %v3367, %v3365
    %v3514 = vpack.c.b16 %v3370, %v3368
    %v3515 = vpack.c.b16 %v3371, %v3369
    %v3516 = vpack.c.b16 %v3374, %v3372
    %v3517 = vpack.c.b16 %v3375, %v3373
    %v3518 = vpack.c.b16 %v3378, %v3376
    %v3519 = vpack.c.b16 %v3379, %v3377
    %v3520 = vpack.c.b16 %v3382, %v3380
    %v3521 = vpack.c.b16 %v3383, %v3381
    %v3522 = vpack.c.b16 %v3386, %v3384
    %v3523 = vpack.c.b16 %v3387, %v3385
    %v3524 = vpack.c.b16 %v3390, %v3388
    %v3525 = vpack.c.b16 %v3391, %v3389
    %v3526 = vpack.c.b16 %v3394, %v3392
    %v3527 = vpack.c.b16 %v3395, %v3393
    %v3528 = vpack.c.b16 %v3398, %v3396
    %v3529 = vpack.c.b16 %v3399, %v3397
    %v3530 = vpack.c.b16 %v3402, %v3400
    %v3531 = vpack.c.b16 %v3403, %v3401
    %v3532 = vpack.c.b16 %v3406, %v3404
    %v3533 = vpack.c.b16 %v3407, %v3405
    %v3534 = vpack.c.b16 %v3410, %v3408
    %v3535 = vpack.c.b16 %v3411, %v3409
    %v3536 = vpack.c.b16 %v3414, %v3412
    %v3537 = vpack.c.b16 %v3415, %v3413
    %v3538 = vpack.c.b16 %v3418, %v3416
    %v3539 = vpack.c.b16 %v3419, %v3417
    %v3540 = vpack.c.b16 %v3422, %v3420
    %v3541 = vpack.c.b16 %v3423, %v3421
    %v3542 = vpack.c.b16 %v3426, %v3424
    %v3543 = vpack.c.b16 %v3427, %v3425
    %v3544 = vpack.c.b16 %v3430, %v3428
    %v3545 = vpack.c.b16 %v3431, %v3429
    %v3546 = vpack.c.b16 %v3434, %v3432
    %v3547 = vpack.c.b16 %v3435, %v3433
    %v3548 = vpack.c.b16 %v3438, %v3436
    %v3549 = vpack.c.b16 %v3439, %v3437
    %v3550 = vpack.c.b16 %v3442, %v3440
    %v3551 = vpack.c.b16 %v3443, %v3441
    %v3552 = vpack.c.b16 %v3446, %v3444
    %v3553 = vpack.c.b16 %v3447, %v3445
    %v3554 = vpack.c.b16 %v3450, %v3448
    %v3555 = vpack.c.b16 %v3451, %v3449
    %v3556 = vpack.c.b16 %v3454, %v3452
    %v3557 = vpack.c.b16 %v3455, %v3453
    %v3558 = vpack.c.b16 %v3458, %v3456
    %v3559 = vpack.c.b16 %v3459, %v3457
    %v3560 = vpack.c.b16 %v3462, %v3460
    %v3561 = vpack.c.b16 %v3463, %v3461
    %3660 = vmatprep.subr.bf16.mxu0 %v3465
    %3661 = vmatpush1.bf16.msra.mxu0 %v3464
    %3662 = vmatprep.subr.bf16.mxu0 %v3467
    %3663 = vmatpush1.bf16.msra.mxu0 %v3466
    %3664 = vmatprep.subr.bf16.mxu0 %v3469
    %3665 = vmatpush1.bf16.msra.mxu0 %v3468
    %3666 = vmatprep.subr.bf16.mxu0 %v3471
    %3667 = vmatpush1.bf16.msra.mxu0 %v3470
    %3668 = vmatprep.subr.bf16.mxu0 %v3473
    %3669 = vmatpush1.bf16.msra.mxu0 %v3472
    %3670 = vmatprep.subr.bf16.mxu0 %v3475
    %3671 = vmatpush1.bf16.msra.mxu0 %v3474
    %3672 = vmatprep.subr.bf16.mxu0 %v3477
    %3673 = vmatpush1.bf16.msra.mxu0 %v3476
    %3674 = vmatprep.subr.bf16.mxu0 %v3479
    %3675 = vmatpush1.bf16.msra.mxu0 %v3478
    %3676 = vmatprep.subr.bf16.mxu0 %v3481
    %3677 = vmatpush1.bf16.msra.mxu0 %v3480
    %3678 = vmatprep.subr.bf16.mxu0 %v3483
    %3679 = vmatpush1.bf16.msra.mxu0 %v3482
    %3680 = vmatprep.subr.bf16.mxu0 %v3485
    %3681 = vmatpush1.bf16.msra.mxu0 %v3484
    %3682 = vmatprep.subr.bf16.mxu0 %v3487
    %3683 = vmatpush1.bf16.msra.mxu0 %v3486
    %3684 = vmatprep.subr.bf16.mxu0 %v3489
    %3685 = vmatpush1.bf16.msra.mxu0 %v3488
    %3686 = vmatprep.subr.bf16.mxu0 %v3491
    %3687 = vmatpush1.bf16.msra.mxu0 %v3490
    %3688 = vmatprep.subr.bf16.mxu0 %v3493
    %3689 = vmatpush1.bf16.msra.mxu0 %v3492
    %3690 = vmatprep.subr.bf16.mxu0 %v3495
    %3691 = vmatpush1.bf16.msra.mxu0 %v3494
    %3692 = vmatprep.mubr.bf16.mxu0 %v136
    %3693 = vmatmul.mubr.bf16.gmra.mrb[0].mxu0 %v135
    %v3694 = vpop.f32.mrb[0].mxu0
    %v3695 = vadd.f32 0.0, %v3694
    %v3696 = vpop.f32.mrb[0].mxu0
    %v3697 = vadd.f32 0.0, %v3696
    %v3698 = vpop.f32.mrb[0].mxu0
    %v3699 = vpop.f32.mrb[0].mxu0
    %3700 = vdwg.mxu0
    %3701 = vmatprep.subr.bf16.mxu0 %v3497
    %3702 = vmatpush1.bf16.msra.mxu0 %v3496
    %3703 = vmatprep.subr.bf16.mxu0 %v3499
    %3704 = vmatpush1.bf16.msra.mxu0 %v3498
    %3705 = vmatprep.subr.bf16.mxu0 %v3501
    %3706 = vmatpush1.bf16.msra.mxu0 %v3500
    %3707 = vmatprep.subr.bf16.mxu0 %v3503
    %3708 = vmatpush1.bf16.msra.mxu0 %v3502
    %3709 = vmatprep.subr.bf16.mxu0 %v3505
    %3710 = vmatpush1.bf16.msra.mxu0 %v3504
    %3711 = vmatprep.subr.bf16.mxu0 %v3507
    %3712 = vmatpush1.bf16.msra.mxu0 %v3506
    %3713 = vmatprep.subr.bf16.mxu0 %v3509
    %3714 = vmatpush1.bf16.msra.mxu0 %v3508
    %3715 = vmatprep.subr.bf16.mxu0 %v3511
    %3716 = vmatpush1.bf16.msra.mxu0 %v3510
    %3717 = vmatprep.subr.bf16.mxu0 %v3513
    %3718 = vmatpush1.bf16.msra.mxu0 %v3512
    %3719 = vmatprep.subr.bf16.mxu0 %v3515
    %3720 = vmatpush1.bf16.msra.mxu0 %v3514
    %3721 = vmatprep.subr.bf16.mxu0 %v3517
    %3722 = vmatpush1.bf16.msra.mxu0 %v3516
    %3723 = vmatprep.subr.bf16.mxu0 %v3519
    %3724 = vmatpush1.bf16.msra.mxu0 %v3518
    %3725 = vmatprep.subr.bf16.mxu0 %v3521
    %3726 = vmatpush1.bf16.msra.mxu0 %v3520
    %3727 = vmatprep.subr.bf16.mxu0 %v3523
    %3728 = vmatpush1.bf16.msra.mxu0 %v3522
    %3729 = vmatprep.subr.bf16.mxu0 %v3525
    %3730 = vmatpush1.bf16.msra.mxu0 %v3524
    %3731 = vmatprep.subr.bf16.mxu0 %v3527
    %3732 = vmatpush1.bf16.msra.mxu0 %v3526
    %3733 = vmatprep.mubr.bf16.mxu0 %v138
    %3734 = vmatmul.mubr.bf16.gmra.mrb[0].mxu0 %v137
    %v3735 = vpop.f32.mrb[0].mxu0
    %v3736 = vadd.f32 %v3695, %v3735
    %v3737 = vpop.f32.mrb[0].mxu0
    %v3738 = vadd.f32 %v3697, %v3737
    %v3739 = vpop.f32.mrb[0].mxu0
    %v3740 = vpop.f32.mrb[0].mxu0
    %3741 = vdwg.mxu0
    %3742 = vmatprep.subr.bf16.mxu0 %v3529
    %3743 = vmatpush1.bf16.msra.mxu0 %v3528
    %3744 = vmatprep.subr.bf16.mxu0 %v3531
    %3745 = vmatpush1.bf16.msra.mxu0 %v3530
    %3746 = vmatprep.subr.bf16.mxu0 %v3533
    %3747 = vmatpush1.bf16.msra.mxu0 %v3532
    %3748 = vmatprep.subr.bf16.mxu0 %v3535
    %3749 = vmatpush1.bf16.msra.mxu0 %v3534
    %3750 = vmatprep.subr.bf16.mxu0 %v3537
    %3751 = vmatpush1.bf16.msra.mxu0 %v3536
    %3752 = vmatprep.subr.bf16.mxu0 %v3539
    %3753 = vmatpush1.bf16.msra.mxu0 %v3538
    %3754 = vmatprep.subr.bf16.mxu0 %v3541
    %3755 = vmatpush1.bf16.msra.mxu0 %v3540
    %3756 = vmatprep.subr.bf16.mxu0 %v3543
    %3757 = vmatpush1.bf16.msra.mxu0 %v3542
    %3758 = vmatprep.subr.bf16.mxu0 %v3545
    %3759 = vmatpush1.bf16.msra.mxu0 %v3544
    %3760 = vmatprep.subr.bf16.mxu0 %v3547
    %3761 = vmatpush1.bf16.msra.mxu0 %v3546
    %3762 = vmatprep.subr.bf16.mxu0 %v3549
    %3763 = vmatpush1.bf16.msra.mxu0 %v3548
    %3764 = vmatprep.subr.bf16.mxu0 %v3551
    %3765 = vmatpush1.bf16.msra.mxu0 %v3550
    %3766 = vmatprep.subr.bf16.mxu0 %v3553
    %3767 = vmatpush1.bf16.msra.mxu0 %v3552
    %3768 = vmatprep.subr.bf16.mxu0 %v3555
    %3769 = vmatpush1.bf16.msra.mxu0 %v3554
    %3770 = vmatprep.subr.bf16.mxu0 %v3557
    %3771 = vmatpush1.bf16.msra.mxu0 %v3556
    %3772 = vmatprep.subr.bf16.mxu0 %v3559
    %3773 = vmatpush1.bf16.msra.mxu0 %v3558
    %3774 = vmatprep.mubr.bf16.mxu0 %v140
    %3775 = vmatmul.mubr.bf16.gmra.mrb[0].mxu0 %v139
    %v3776 = vpop.f32.mrb[0].mxu0
    %v3777 = vadd.f32 %v3736, %v3776
    %v3778 = vpop.f32.mrb[0].mxu0
    %v3779 = vadd.f32 %v3738, %v3778
    %v3780 = vpop.f32.mrb[0].mxu0
    %v3781 = vpop.f32.mrb[0].mxu0
    %3782 = vdwg.mxu0
    %3783 = vmatprep.subr.bf16.mxu0 %v3561
    %3784 = vmatpush1.bf16.msra.mxu0 %v3560
    %3785 = vmatprep.subr.bf16.mxu0 0
    %3786 = vmatpush1.bf16.msra.mxu0 0
    %3787 = vmatprep.subr.bf16.mxu0 0
    %3788 = vmatpush1.bf16.msra.mxu0 0
    %3789 = vmatprep.subr.bf16.mxu0 0
    %3790 = vmatpush1.bf16.msra.mxu0 0
    %3791 = vmatprep.subr.bf16.mxu0 0
    %3792 = vmatpush1.bf16.msra.mxu0 0
    %3793 = vmatprep.subr.bf16.mxu0 0
    %3794 = vmatpush1.bf16.msra.mxu0 0
    %3795 = vmatprep.subr.bf16.mxu0 0
    %3796 = vmatpush1.bf16.msra.mxu0 0
    %3797 = vmatprep.subr.bf16.mxu0 0
    %3798 = vmatpush1.bf16.msra.mxu0 0
    %3799 = vmatprep.subr.bf16.mxu0 0
    %3800 = vmatpush1.bf16.msra.mxu0 0
    %3801 = vmatprep.subr.bf16.mxu0 0
    %3802 = vmatpush1.bf16.msra.mxu0 0
    %3803 = vmatprep.subr.bf16.mxu0 0
    %3804 = vmatpush1.bf16.msra.mxu0 0
    %3805 = vmatprep.subr.bf16.mxu0 0
    %3806 = vmatpush1.bf16.msra.mxu0 0
    %3807 = vmatprep.subr.bf16.mxu0 0
    %3808 = vmatpush1.bf16.msra.mxu0 0
    %3809 = vmatprep.subr.bf16.mxu0 0
    %3810 = vmatpush1.bf16.msra.mxu0 0
    %3811 = vmatprep.subr.bf16.mxu0 0
    %3812 = vmatpush1.bf16.msra.mxu0 0
    %3813 = vmatprep.subr.bf16.mxu0 0
    %3814 = vmatpush1.bf16.msra.mxu0 0
    %3815 = vmatprep.mubr.bf16.mxu0 0
    %3816 = vmatmul.mubr.bf16.gmra.mrb[0].mxu0 %v640
    %v3817 = vpop.f32.mrb[0].mxu0
    %v3818 = vadd.f32 %v3777, %v3817
    %v3819 = vpop.f32.mrb[0].mxu0
    %v3820 = vadd.f32 %v3779, %v3819
    %v3821 = vpop.f32.mrb[0].mxu0
    %v3822 = vpop.f32.mrb[0].mxu0
    %3823 = vdwg.mxu0
    %v3824 = vmax.f32 %v3069, %v3818
    %v3825 = vmax.f32 %v3070, %v3820
    %s3826 = scalar_lea.vmem %s1, 3920
    %v3827 = vld [vmem:[%s3826] sm:$0xff]
    %v3828 = vld [vmem:[%s3826 + $0x8] sm:$0xff]
    %v3829 = vld [vmem:[%s3826 + $0x10] sm:$0xff]
    %v3830 = vld [vmem:[%s3826 + $0x18] sm:$0xff]
    %v3831 = vld [vmem:[%s3826 + $0x20] sm:$0xff]
    %v3832 = vld [vmem:[%s3826 + $0x28] sm:$0xff]
    %v3833 = vld [vmem:[%s3826 + $0x30] sm:$0xff]
    %v3834 = vld [vmem:[%s3826 + $0x38] sm:$0xff]
    %v3835 = vld [vmem:[%s3826 + $0x40] sm:$0xff]
    %v3836 = vld [vmem:[%s3826 + $0x48] sm:$0xff]
    %v3837 = vld [vmem:[%s3826 + $0x50] sm:$0xff]
    %v3838 = vld [vmem:[%s3826 + $0x58] sm:$0xff]
    %v3839 = vld [vmem:[%s3826 + $0x60] sm:$0xff]
    %v3840 = vld [vmem:[%s3826 + $0x68] sm:$0xff]
    %v3841 = vld [vmem:[%s3826 + $0x70] sm:$0xff]
    %v3842 = vld [vmem:[%s3826 + $0x78] sm:$0xff]
    %v3843 = vld [vmem:[%s3826 + $0x80] sm:$0xff]
    %v3844 = vld [vmem:[%s3826 + $0x88] sm:$0xff]
    %v3845 = vld [vmem:[%s3826 + $0x90] sm:$0xff]
    %v3846 = vld [vmem:[%s3826 + $0x98] sm:$0xff]
    %v3847 = vld [vmem:[%s3826 + $0xa0] sm:$0xff]
    %v3848 = vld [vmem:[%s3826 + $0xa8] sm:$0xff]
    %v3849 = vld [vmem:[%s3826 + $0xb0] sm:$0xff]
    %v3850 = vld [vmem:[%s3826 + $0xb8] sm:$0xff]
    %v3851 = vld [vmem:[%s3826 + $0xc0] sm:$0xff]
    %v3852 = vld [vmem:[%s3826 + $0xc8] sm:$0xff]
    %v3853 = vld [vmem:[%s3826 + $0xd0] sm:$0xff]
    %v3854 = vld [vmem:[%s3826 + $0xd8] sm:$0xff]
    %v3855 = vld [vmem:[%s3826 + $0xe0] sm:$0xff]
    %v3856 = vld [vmem:[%s3826 + $0xe8] sm:$0xff]
    %v3857 = vld [vmem:[%s3826 + $0xf0] sm:$0xff]
    %v3858 = vld [vmem:[%s3826 + $0xf8] sm:$0xff]
    %v3859 = vld [vmem:[%s3826 + $0x100] sm:$0xff]
    %v3860 = vld [vmem:[%s3826 + $0x108] sm:$0xff]
    %v3861 = vld [vmem:[%s3826 + $0x110] sm:$0xff]
    %v3862 = vld [vmem:[%s3826 + $0x118] sm:$0xff]
    %v3863 = vld [vmem:[%s3826 + $0x120] sm:$0xff]
    %v3864 = vld [vmem:[%s3826 + $0x128] sm:$0xff]
    %v3865 = vld [vmem:[%s3826 + $0x130] sm:$0xff]
    %v3866 = vld [vmem:[%s3826 + $0x138] sm:$0xff]
    %v3867 = vld [vmem:[%s3826 + $0x140] sm:$0xff]
    %v3868 = vld [vmem:[%s3826 + $0x148] sm:$0xff]
    %v3869 = vld [vmem:[%s3826 + $0x150] sm:$0xff]
    %v3870 = vld [vmem:[%s3826 + $0x158] sm:$0xff]
    %v3871 = vld [vmem:[%s3826 + $0x160] sm:$0xff]
    %v3872 = vld [vmem:[%s3826 + $0x168] sm:$0xff]
    %v3873 = vld [vmem:[%s3826 + $0x170] sm:$0xff]
    %v3874 = vld [vmem:[%s3826 + $0x178] sm:$0xff]
    %v3875 = vld [vmem:[%s3826 + $0x180] sm:$0xff]
    %v3876 = vld [vmem:[%s3826 + $0x188] sm:$0xff]
    %v3877 = vld [vmem:[%s3826 + $0x190] sm:$0xff]
    %v3878 = vld [vmem:[%s3826 + $0x198] sm:$0xff]
    %v3879 = vld [vmem:[%s3826 + $0x1a0] sm:$0xff]
    %v3880 = vld [vmem:[%s3826 + $0x1a8] sm:$0xff]
    %v3881 = vld [vmem:[%s3826 + $0x1b0] sm:$0xff]
    %v3882 = vld [vmem:[%s3826 + $0x1b8] sm:$0xff]
    %v3883 = vld [vmem:[%s3826 + $0x1c0] sm:$0xff]
    %v3884 = vld [vmem:[%s3826 + $0x1c8] sm:$0xff]
    %v3885 = vld [vmem:[%s3826 + $0x1d0] sm:$0xff]
    %v3886 = vld [vmem:[%s3826 + $0x1d8] sm:$0xff]
    %v3887 = vld [vmem:[%s3826 + $0x1e0] sm:$0xff]
    %v3888 = vld [vmem:[%s3826 + $0x1e8] sm:$0xff]
    %v3889 = vld [vmem:[%s3826 + $0x1f0] sm:$0xff]
    %v3890 = vld [vmem:[%s3826 + $0x1f8] sm:$0xff]
    %v3891 = vld [vmem:[%s3826 + $0x200] sm:$0xff]
    %v3892 = vld [vmem:[%s3826 + $0x208] sm:$0xff]
    %v3893 = vld [vmem:[%s3826 + $0x210] sm:$0xff]
    %v3894 = vld [vmem:[%s3826 + $0x218] sm:$0xff]
    %v3895 = vld [vmem:[%s3826 + $0x220] sm:$0xff]
    %v3896 = vld [vmem:[%s3826 + $0x228] sm:$0xff]
    %v3897 = vld [vmem:[%s3826 + $0x230] sm:$0xff]
    %v3898 = vld [vmem:[%s3826 + $0x238] sm:$0xff]
    %v3899 = vld [vmem:[%s3826 + $0x240] sm:$0xff]
    %v3900 = vld [vmem:[%s3826 + $0x248] sm:$0xff]
    %v3901 = vld [vmem:[%s3826 + $0x250] sm:$0xff]
    %v3902 = vld [vmem:[%s3826 + $0x258] sm:$0xff]
    %v3903 = vld [vmem:[%s3826 + $0x260] sm:$0xff]
    %v3904 = vld [vmem:[%s3826 + $0x268] sm:$0xff]
    %v3905 = vld [vmem:[%s3826 + $0x270] sm:$0xff]
    %v3906 = vld [vmem:[%s3826 + $0x278] sm:$0xff]
    %v3907 = vld [vmem:[%s3826 + $0x280] sm:$0xff]
    %v3908 = vld [vmem:[%s3826 + $0x288] sm:$0xff]
    %v3909 = vld [vmem:[%s3826 + $0x290] sm:$0xff]
    %v3910 = vld [vmem:[%s3826 + $0x298] sm:$0xff]
    %v3911 = vld [vmem:[%s3826 + $0x2a0] sm:$0xff]
    %v3912 = vld [vmem:[%s3826 + $0x2a8] sm:$0xff]
    %v3913 = vld [vmem:[%s3826 + $0x2b0] sm:$0xff]
    %v3914 = vld [vmem:[%s3826 + $0x2b8] sm:$0xff]
    %v3915 = vld [vmem:[%s3826 + $0x2c0] sm:$0xff]
    %v3916 = vld [vmem:[%s3826 + $0x2c8] sm:$0xff]
    %v3917 = vld [vmem:[%s3826 + $0x2d0] sm:$0xff]
    %v3918 = vld [vmem:[%s3826 + $0x2d8] sm:$0xff]
    %v3919 = vld [vmem:[%s3826 + $0x2e0] sm:$0xff]
    %v3920 = vld [vmem:[%s3826 + $0x2e8] sm:$0xff]
    %v3921 = vld [vmem:[%s3826 + $0x2f0] sm:$0xff]
    %v3922 = vld [vmem:[%s3826 + $0x2f8] sm:$0xff]
    %v3923 = vld [vmem:[%s3826 + $0x300] sm:$0xff]
    %v3924 = vld [vmem:[%s3826 + $0x308] sm:$0xff]
    %v4023 = vunpack.c.l.b16 %v3827
    %v4024 = vunpack.c.h.b16 %v3827
    %v4025 = vunpack.c.l.b16 %v3828
    %v4026 = vunpack.c.h.b16 %v3828
    %v4027 = vunpack.c.l.b16 %v3829
    %v4028 = vunpack.c.h.b16 %v3829
    %v4029 = vunpack.c.l.b16 %v3830
    %v4030 = vunpack.c.h.b16 %v3830
    %v4031 = vunpack.c.l.b16 %v3831
    %v4032 = vunpack.c.h.b16 %v3831
    %v4033 = vunpack.c.l.b16 %v3832
    %v4034 = vunpack.c.h.b16 %v3832
    %v4035 = vunpack.c.l.b16 %v3833
    %v4036 = vunpack.c.h.b16 %v3833
    %v4037 = vunpack.c.l.b16 %v3834
    %v4038 = vunpack.c.h.b16 %v3834
    %v4039 = vunpack.c.l.b16 %v3835
    %v4040 = vunpack.c.h.b16 %v3835
    %v4041 = vunpack.c.l.b16 %v3836
    %v4042 = vunpack.c.h.b16 %v3836
    %v4043 = vunpack.c.l.b16 %v3837
    %v4044 = vunpack.c.h.b16 %v3837
    %v4045 = vunpack.c.l.b16 %v3838
    %v4046 = vunpack.c.h.b16 %v3838
    %v4047 = vunpack.c.l.b16 %v3839
    %v4048 = vunpack.c.h.b16 %v3839
    %v4049 = vunpack.c.l.b16 %v3840
    %v4050 = vunpack.c.h.b16 %v3840
    %v4051 = vunpack.c.l.b16 %v3841
    %v4052 = vunpack.c.h.b16 %v3841
    %v4053 = vunpack.c.l.b16 %v3842
    %v4054 = vunpack.c.h.b16 %v3842
    %v4055 = vunpack.c.l.b16 %v3843
    %v4056 = vunpack.c.h.b16 %v3843
    %v4057 = vunpack.c.l.b16 %v3844
    %v4058 = vunpack.c.h.b16 %v3844
    %v4059 = vunpack.c.l.b16 %v3845
    %v4060 = vunpack.c.h.b16 %v3845
    %v4061 = vunpack.c.l.b16 %v3846
    %v4062 = vunpack.c.h.b16 %v3846
    %v4063 = vunpack.c.l.b16 %v3847
    %v4064 = vunpack.c.h.b16 %v3847
    %v4065 = vunpack.c.l.b16 %v3848
    %v4066 = vunpack.c.h.b16 %v3848
    %v4067 = vunpack.c.l.b16 %v3849
    %v4068 = vunpack.c.h.b16 %v3849
    %v4069 = vunpack.c.l.b16 %v3850
    %v4070 = vunpack.c.h.b16 %v3850
    %v4071 = vunpack.c.l.b16 %v3851
    %v4072 = vunpack.c.h.b16 %v3851
    %v4073 = vunpack.c.l.b16 %v3852
    %v4074 = vunpack.c.h.b16 %v3852
    %v4075 = vunpack.c.l.b16 %v3853
    %v4076 = vunpack.c.h.b16 %v3853
    %v4077 = vunpack.c.l.b16 %v3854
    %v4078 = vunpack.c.h.b16 %v3854
    %v4079 = vunpack.c.l.b16 %v3855
    %v4080 = vunpack.c.h.b16 %v3855
    %v4081 = vunpack.c.l.b16 %v3856
    %v4082 = vunpack.c.h.b16 %v3856
    %v4083 = vunpack.c.l.b16 %v3857
    %v4084 = vunpack.c.h.b16 %v3857
    %v4085 = vunpack.c.l.b16 %v3858
    %v4086 = vunpack.c.h.b16 %v3858
    %v4087 = vunpack.c.l.b16 %v3859
    %v4088 = vunpack.c.h.b16 %v3859
    %v4089 = vunpack.c.l.b16 %v3860
    %v4090 = vunpack.c.h.b16 %v3860
    %v4091 = vunpack.c.l.b16 %v3861
    %v4092 = vunpack.c.h.b16 %v3861
    %v4093 = vunpack.c.l.b16 %v3862
    %v4094 = vunpack.c.h.b16 %v3862
    %v4095 = vunpack.c.l.b16 %v3863
    %v4096 = vunpack.c.h.b16 %v3863
    %v4097 = vunpack.c.l.b16 %v3864
    %v4098 = vunpack.c.h.b16 %v3864
    %v4099 = vunpack.c.l.b16 %v3865
    %v4100 = vunpack.c.h.b16 %v3865
    %v4101 = vunpack.c.l.b16 %v3866
    %v4102 = vunpack.c.h.b16 %v3866
    %v4103 = vunpack.c.l.b16 %v3867
    %v4104 = vunpack.c.h.b16 %v3867
    %v4105 = vunpack.c.l.b16 %v3868
    %v4106 = vunpack.c.h.b16 %v3868
    %v4107 = vunpack.c.l.b16 %v3869
    %v4108 = vunpack.c.h.b16 %v3869
    %v4109 = vunpack.c.l.b16 %v3870
    %v4110 = vunpack.c.h.b16 %v3870
    %v4111 = vunpack.c.l.b16 %v3871
    %v4112 = vunpack.c.h.b16 %v3871
    %v4113 = vunpack.c.l.b16 %v3872
    %v4114 = vunpack.c.h.b16 %v3872
    %v4115 = vunpack.c.l.b16 %v3873
    %v4116 = vunpack.c.h.b16 %v3873
    %v4117 = vunpack.c.l.b16 %v3874
    %v4118 = vunpack.c.h.b16 %v3874
    %v4119 = vunpack.c.l.b16 %v3875
    %v4120 = vunpack.c.h.b16 %v3875
    %v4121 = vunpack.c.l.b16 %v3876
    %v4122 = vunpack.c.h.b16 %v3876
    %v4123 = vunpack.c.l.b16 %v3877
    %v4124 = vunpack.c.h.b16 %v3877
    %v4125 = vunpack.c.l.b16 %v3878
    %v4126 = vunpack.c.h.b16 %v3878
    %v4127 = vunpack.c.l.b16 %v3879
    %v4128 = vunpack.c.h.b16 %v3879
    %v4129 = vunpack.c.l.b16 %v3880
    %v4130 = vunpack.c.h.b16 %v3880
    %v4131 = vunpack.c.l.b16 %v3881
    %v4132 = vunpack.c.h.b16 %v3881
    %v4133 = vunpack.c.l.b16 %v3882
    %v4134 = vunpack.c.h.b16 %v3882
    %v4135 = vunpack.c.l.b16 %v3883
    %v4136 = vunpack.c.h.b16 %v3883
    %v4137 = vunpack.c.l.b16 %v3884
    %v4138 = vunpack.c.h.b16 %v3884
    %v4139 = vunpack.c.l.b16 %v3885
    %v4140 = vunpack.c.h.b16 %v3885
    %v4141 = vunpack.c.l.b16 %v3886
    %v4142 = vunpack.c.h.b16 %v3886
    %v4143 = vunpack.c.l.b16 %v3887
    %v4144 = vunpack.c.h.b16 %v3887
    %v4145 = vunpack.c.l.b16 %v3888
    %v4146 = vunpack.c.h.b16 %v3888
    %v4147 = vunpack.c.l.b16 %v3889
    %v4148 = vunpack.c.h.b16 %v3889
    %v4149 = vunpack.c.l.b16 %v3890
    %v4150 = vunpack.c.h.b16 %v3890
    %v4151 = vunpack.c.l.b16 %v3891
    %v4152 = vunpack.c.h.b16 %v3891
    %v4153 = vunpack.c.l.b16 %v3892
    %v4154 = vunpack.c.h.b16 %v3892
    %v4155 = vunpack.c.l.b16 %v3893
    %v4156 = vunpack.c.h.b16 %v3893
    %v4157 = vunpack.c.l.b16 %v3894
    %v4158 = vunpack.c.h.b16 %v3894
    %v4159 = vunpack.c.l.b16 %v3895
    %v4160 = vunpack.c.h.b16 %v3895
    %v4161 = vunpack.c.l.b16 %v3896
    %v4162 = vunpack.c.h.b16 %v3896
    %v4163 = vunpack.c.l.b16 %v3897
    %v4164 = vunpack.c.h.b16 %v3897
    %v4165 = vunpack.c.l.b16 %v3898
    %v4166 = vunpack.c.h.b16 %v3898
    %v4167 = vunpack.c.l.b16 %v3899
    %v4168 = vunpack.c.h.b16 %v3899
    %v4169 = vunpack.c.l.b16 %v3900
    %v4170 = vunpack.c.h.b16 %v3900
    %v4171 = vunpack.c.l.b16 %v3901
    %v4172 = vunpack.c.h.b16 %v3901
    %v4173 = vunpack.c.l.b16 %v3902
    %v4174 = vunpack.c.h.b16 %v3902
    %v4175 = vunpack.c.l.b16 %v3903
    %v4176 = vunpack.c.h.b16 %v3903
    %v4177 = vunpack.c.l.b16 %v3904
    %v4178 = vunpack.c.h.b16 %v3904
    %v4179 = vunpack.c.l.b16 %v3905
    %v4180 = vunpack.c.h.b16 %v3905
    %v4181 = vunpack.c.l.b16 %v3906
    %v4182 = vunpack.c.h.b16 %v3906
    %v4183 = vunpack.c.l.b16 %v3907
    %v4184 = vunpack.c.h.b16 %v3907
    %v4185 = vunpack.c.l.b16 %v3908
    %v4186 = vunpack.c.h.b16 %v3908
    %v4187 = vunpack.c.l.b16 %v3909
    %v4188 = vunpack.c.h.b16 %v3909
    %v4189 = vunpack.c.l.b16 %v3910
    %v4190 = vunpack.c.h.b16 %v3910
    %v4191 = vunpack.c.l.b16 %v3911
    %v4192 = vunpack.c.h.b16 %v3911
    %v4193 = vunpack.c.l.b16 %v3912
    %v4194 = vunpack.c.h.b16 %v3912
    %v4195 = vunpack.c.l.b16 %v3913
    %v4196 = vunpack.c.h.b16 %v3913
    %v4197 = vunpack.c.l.b16 %v3914
    %v4198 = vunpack.c.h.b16 %v3914
    %v4199 = vunpack.c.l.b16 %v3915
    %v4200 = vunpack.c.h.b16 %v3915
    %v4201 = vunpack.c.l.b16 %v3916
    %v4202 = vunpack.c.h.b16 %v3916
    %v4203 = vunpack.c.l.b16 %v3917
    %v4204 = vunpack.c.h.b16 %v3917
    %v4205 = vunpack.c.l.b16 %v3918
    %v4206 = vunpack.c.h.b16 %v3918
    %v4207 = vunpack.c.l.b16 %v3919
    %v4208 = vunpack.c.h.b16 %v3919
    %v4209 = vunpack.c.l.b16 %v3920
    %v4210 = vunpack.c.h.b16 %v3920
    %v4211 = vunpack.c.l.b16 %v3921
    %v4212 = vunpack.c.h.b16 %v3921
    %v4213 = vunpack.c.l.b16 %v3922
    %v4214 = vunpack.c.h.b16 %v3922
    %v4215 = vunpack.c.l.b16 %v3923
    %v4216 = vunpack.c.h.b16 %v3923
    %v4217 = vunpack.c.l.b16 %v3924
    %v4218 = vunpack.c.h.b16 %v3924
    %v4219 = vpack.c.b16 %v4025, %v4023
    %v4220 = vpack.c.b16 %v4026, %v4024
    %v4221 = vpack.c.b16 %v4029, %v4027
    %v4222 = vpack.c.b16 %v4030, %v4028
    %v4223 = vpack.c.b16 %v4033, %v4031
    %v4224 = vpack.c.b16 %v4034, %v4032
    %v4225 = vpack.c.b16 %v4037, %v4035
    %v4226 = vpack.c.b16 %v4038, %v4036
    %v4227 = vpack.c.b16 %v4041, %v4039
    %v4228 = vpack.c.b16 %v4042, %v4040
    %v4229 = vpack.c.b16 %v4045, %v4043
    %v4230 = vpack.c.b16 %v4046, %v4044
    %v4231 = vpack.c.b16 %v4049, %v4047
    %v4232 = vpack.c.b16 %v4050, %v4048
    %v4233 = vpack.c.b16 %v4053, %v4051
    %v4234 = vpack.c.b16 %v4054, %v4052
    %v4235 = vpack.c.b16 %v4057, %v4055
    %v4236 = vpack.c.b16 %v4058, %v4056
    %v4237 = vpack.c.b16 %v4061, %v4059
    %v4238 = vpack.c.b16 %v4062, %v4060
    %v4239 = vpack.c.b16 %v4065, %v4063
    %v4240 = vpack.c.b16 %v4066, %v4064
    %v4241 = vpack.c.b16 %v4069, %v4067
    %v4242 = vpack.c.b16 %v4070, %v4068
    %v4243 = vpack.c.b16 %v4073, %v4071
    %v4244 = vpack.c.b16 %v4074, %v4072
    %v4245 = vpack.c.b16 %v4077, %v4075
    %v4246 = vpack.c.b16 %v4078, %v4076
    %v4247 = vpack.c.b16 %v4081, %v4079
    %v4248 = vpack.c.b16 %v4082, %v4080
    %v4249 = vpack.c.b16 %v4085, %v4083
    %v4250 = vpack.c.b16 %v4086, %v4084
    %v4251 = vpack.c.b16 %v4089, %v4087
    %v4252 = vpack.c.b16 %v4090, %v4088
    %v4253 = vpack.c.b16 %v4093, %v4091
    %v4254 = vpack.c.b16 %v4094, %v4092
    %v4255 = vpack.c.b16 %v4097, %v4095
    %v4256 = vpack.c.b16 %v4098, %v4096
    %v4257 = vpack.c.b16 %v4101, %v4099
    %v4258 = vpack.c.b16 %v4102, %v4100
    %v4259 = vpack.c.b16 %v4105, %v4103
    %v4260 = vpack.c.b16 %v4106, %v4104
    %v4261 = vpack.c.b16 %v4109, %v4107
    %v4262 = vpack.c.b16 %v4110, %v4108
    %v4263 = vpack.c.b16 %v4113, %v4111
    %v4264 = vpack.c.b16 %v4114, %v4112
    %v4265 = vpack.c.b16 %v4117, %v4115
    %v4266 = vpack.c.b16 %v4118, %v4116
    %v4267 = vpack.c.b16 %v4121, %v4119
    %v4268 = vpack.c.b16 %v4122, %v4120
    %v4269 = vpack.c.b16 %v4125, %v4123
    %v4270 = vpack.c.b16 %v4126, %v4124
    %v4271 = vpack.c.b16 %v4129, %v4127
    %v4272 = vpack.c.b16 %v4130, %v4128
    %v4273 = vpack.c.b16 %v4133, %v4131
    %v4274 = vpack.c.b16 %v4134, %v4132
    %v4275 = vpack.c.b16 %v4137, %v4135
    %v4276 = vpack.c.b16 %v4138, %v4136
    %v4277 = vpack.c.b16 %v4141, %v4139
    %v4278 = vpack.c.b16 %v4142, %v4140
    %v4279 = vpack.c.b16 %v4145, %v4143
    %v4280 = vpack.c.b16 %v4146, %v4144
    %v4281 = vpack.c.b16 %v4149, %v4147
    %v4282 = vpack.c.b16 %v4150, %v4148
    %v4283 = vpack.c.b16 %v4153, %v4151
    %v4284 = vpack.c.b16 %v4154, %v4152
    %v4285 = vpack.c.b16 %v4157, %v4155
    %v4286 = vpack.c.b16 %v4158, %v4156
    %v4287 = vpack.c.b16 %v4161, %v4159
    %v4288 = vpack.c.b16 %v4162, %v4160
    %v4289 = vpack.c.b16 %v4165, %v4163
    %v4290 = vpack.c.b16 %v4166, %v4164
    %v4291 = vpack.c.b16 %v4169, %v4167
    %v4292 = vpack.c.b16 %v4170, %v4168
    %v4293 = vpack.c.b16 %v4173, %v4171
    %v4294 = vpack.c.b16 %v4174, %v4172
    %v4295 = vpack.c.b16 %v4177, %v4175
    %v4296 = vpack.c.b16 %v4178, %v4176
    %v4297 = vpack.c.b16 %v4181, %v4179
    %v4298 = vpack.c.b16 %v4182, %v4180
    %v4299 = vpack.c.b16 %v4185, %v4183
    %v4300 = vpack.c.b16 %v4186, %v4184
    %v4301 = vpack.c.b16 %v4189, %v4187
    %v4302 = vpack.c.b16 %v4190, %v4188
    %v4303 = vpack.c.b16 %v4193, %v4191
    %v4304 = vpack.c.b16 %v4194, %v4192
    %v4305 = vpack.c.b16 %v4197, %v4195
    %v4306 = vpack.c.b16 %v4198, %v4196
    %v4307 = vpack.c.b16 %v4201, %v4199
    %v4308 = vpack.c.b16 %v4202, %v4200
    %v4309 = vpack.c.b16 %v4205, %v4203
    %v4310 = vpack.c.b16 %v4206, %v4204
    %v4311 = vpack.c.b16 %v4209, %v4207
    %v4312 = vpack.c.b16 %v4210, %v4208
    %v4313 = vpack.c.b16 %v4213, %v4211
    %v4314 = vpack.c.b16 %v4214, %v4212
    %v4315 = vpack.c.b16 %v4217, %v4215
    %v4316 = vpack.c.b16 %v4218, %v4216
    %4415 = vmatprep.subr.bf16.mxu0 %v4220
    %4416 = vmatpush1.bf16.msra.mxu0 %v4219
    %4417 = vmatprep.subr.bf16.mxu0 %v4222
    %4418 = vmatpush1.bf16.msra.mxu0 %v4221
    %4419 = vmatprep.subr.bf16.mxu0 %v4224
    %4420 = vmatpush1.bf16.msra.mxu0 %v4223
    %4421 = vmatprep.subr.bf16.mxu0 %v4226
    %4422 = vmatpush1.bf16.msra.mxu0 %v4225
    %4423 = vmatprep.subr.bf16.mxu0 %v4228
    %4424 = vmatpush1.bf16.msra.mxu0 %v4227
    %4425 = vmatprep.subr.bf16.mxu0 %v4230
    %4426 = vmatpush1.bf16.msra.mxu0 %v4229
    %4427 = vmatprep.subr.bf16.mxu0 %v4232
    %4428 = vmatpush1.bf16.msra.mxu0 %v4231
    %4429 = vmatprep.subr.bf16.mxu0 %v4234
    %4430 = vmatpush1.bf16.msra.mxu0 %v4233
    %4431 = vmatprep.subr.bf16.mxu0 %v4236
    %4432 = vmatpush1.bf16.msra.mxu0 %v4235
    %4433 = vmatprep.subr.bf16.mxu0 %v4238
    %4434 = vmatpush1.bf16.msra.mxu0 %v4237
    %4435 = vmatprep.subr.bf16.mxu0 %v4240
    %4436 = vmatpush1.bf16.msra.mxu0 %v4239
    %4437 = vmatprep.subr.bf16.mxu0 %v4242
    %4438 = vmatpush1.bf16.msra.mxu0 %v4241
    %4439 = vmatprep.subr.bf16.mxu0 %v4244
    %4440 = vmatpush1.bf16.msra.mxu0 %v4243
    %4441 = vmatprep.subr.bf16.mxu0 %v4246
    %4442 = vmatpush1.bf16.msra.mxu0 %v4245
    %4443 = vmatprep.subr.bf16.mxu0 %v4248
    %4444 = vmatpush1.bf16.msra.mxu0 %v4247
    %4445 = vmatprep.subr.bf16.mxu0 %v4250
    %4446 = vmatpush1.bf16.msra.mxu0 %v4249
    %4447 = vmatprep.mubr.bf16.mxu0 %v136
    %4448 = vmatmul.mubr.bf16.gmra.mrb[0].mxu0 %v135
    %v4449 = vpop.f32.mrb[0].mxu0
    %v4450 = vadd.f32 0.0, %v4449
    %v4451 = vpop.f32.mrb[0].mxu0
    %v4452 = vadd.f32 0.0, %v4451
    %v4453 = vpop.f32.mrb[0].mxu0
    %v4454 = vpop.f32.mrb[0].mxu0
    %4455 = vdwg.mxu0
    %4456 = vmatprep.subr.bf16.mxu0 %v4252
    %4457 = vmatpush1.bf16.msra.mxu0 %v4251
    %4458 = vmatprep.subr.bf16.mxu0 %v4254
    %4459 = vmatpush1.bf16.msra.mxu0 %v4253
    %4460 = vmatprep.subr.bf16.mxu0 %v4256
    %4461 = vmatpush1.bf16.msra.mxu0 %v4255
    %4462 = vmatprep.subr.bf16.mxu0 %v4258
    %4463 = vmatpush1.bf16.msra.mxu0 %v4257
    %4464 = vmatprep.subr.bf16.mxu0 %v4260
    %4465 = vmatpush1.bf16.msra.mxu0 %v4259
    %4466 = vmatprep.subr.bf16.mxu0 %v4262
    %4467 = vmatpush1.bf16.msra.mxu0 %v4261
    %4468 = vmatprep.subr.bf16.mxu0 %v4264
    %4469 = vmatpush1.bf16.msra.mxu0 %v4263
    %4470 = vmatprep.subr.bf16.mxu0 %v4266
    %4471 = vmatpush1.bf16.msra.mxu0 %v4265
    %4472 = vmatprep.subr.bf16.mxu0 %v4268
    %4473 = vmatpush1.bf16.msra.mxu0 %v4267
    %4474 = vmatprep.subr.bf16.mxu0 %v4270
    %4475 = vmatpush1.bf16.msra.mxu0 %v4269
    %4476 = vmatprep.subr.bf16.mxu0 %v4272
    %4477 = vmatpush1.bf16.msra.mxu0 %v4271
    %4478 = vmatprep.subr.bf16.mxu0 %v4274
    %4479 = vmatpush1.bf16.msra.mxu0 %v4273
    %4480 = vmatprep.subr.bf16.mxu0 %v4276
    %4481 = vmatpush1.bf16.msra.mxu0 %v4275
    %4482 = vmatprep.subr.bf16.mxu0 %v4278
    %4483 = vmatpush1.bf16.msra.mxu0 %v4277
    %4484 = vmatprep.subr.bf16.mxu0 %v4280
    %4485 = vmatpush1.bf16.msra.mxu0 %v4279
    %4486 = vmatprep.subr.bf16.mxu0 %v4282
    %4487 = vmatpush1.bf16.msra.mxu0 %v4281
    %4488 = vmatprep.mubr.bf16.mxu0 %v138
    %4489 = vmatmul.mubr.bf16.gmra.mrb[0].mxu0 %v137
    %v4490 = vpop.f32.mrb[0].mxu0
    %v4491 = vadd.f32 %v4450, %v4490
    %v4492 = vpop.f32.mrb[0].mxu0
    %v4493 = vadd.f32 %v4452, %v4492
    %v4494 = vpop.f32.mrb[0].mxu0
    %v4495 = vpop.f32.mrb[0].mxu0
    %4496 = vdwg.mxu0
    %4497 = vmatprep.subr.bf16.mxu0 %v4284
    %4498 = vmatpush1.bf16.msra.mxu0 %v4283
    %4499 = vmatprep.subr.bf16.mxu0 %v4286
    %4500 = vmatpush1.bf16.msra.mxu0 %v4285
    %4501 = vmatprep.subr.bf16.mxu0 %v4288
    %4502 = vmatpush1.bf16.msra.mxu0 %v4287
    %4503 = vmatprep.subr.bf16.mxu0 %v4290
    %4504 = vmatpush1.bf16.msra.mxu0 %v4289
    %4505 = vmatprep.subr.bf16.mxu0 %v4292
    %4506 = vmatpush1.bf16.msra.mxu0 %v4291
    %4507 = vmatprep.subr.bf16.mxu0 %v4294
    %4508 = vmatpush1.bf16.msra.mxu0 %v4293
    %4509 = vmatprep.subr.bf16.mxu0 %v4296
    %4510 = vmatpush1.bf16.msra.mxu0 %v4295
    %4511 = vmatprep.subr.bf16.mxu0 %v4298
    %4512 = vmatpush1.bf16.msra.mxu0 %v4297
    %4513 = vmatprep.subr.bf16.mxu0 %v4300
    %4514 = vmatpush1.bf16.msra.mxu0 %v4299
    %4515 = vmatprep.subr.bf16.mxu0 %v4302
    %4516 = vmatpush1.bf16.msra.mxu0 %v4301
    %4517 = vmatprep.subr.bf16.mxu0 %v4304
    %4518 = vmatpush1.bf16.msra.mxu0 %v4303
    %4519 = vmatprep.subr.bf16.mxu0 %v4306
    %4520 = vmatpush1.bf16.msra.mxu0 %v4305
    %4521 = vmatprep.subr.bf16.mxu0 %v4308
    %4522 = vmatpush1.bf16.msra.mxu0 %v4307
    %4523 = vmatprep.subr.bf16.mxu0 %v4310
    %4524 = vmatpush1.bf16.msra.mxu0 %v4309
    %4525 = vmatprep.subr.bf16.mxu0 %v4312
    %4526 = vmatpush1.bf16.msra.mxu0 %v4311
    %4527 = vmatprep.subr.bf16.mxu0 %v4314
    %4528 = vmatpush1.bf16.msra.mxu0 %v4313
    %4529 = vmatprep.mubr.bf16.mxu0 %v140
    %4530 = vmatmul.mubr.bf16.gmra.mrb[0].mxu0 %v139
    %v4531 = vpop.f32.mrb[0].mxu0
    %v4532 = vadd.f32 %v4491, %v4531
    %v4533 = vpop.f32.mrb[0].mxu0
    %v4534 = vadd.f32 %v4493, %v4533
    %v4535 = vpop.f32.mrb[0].mxu0
    %v4536 = vpop.f32.mrb[0].mxu0
    %4537 = vdwg.mxu0
    %4538 = vmatprep.subr.bf16.mxu0 %v4316
    %4539 = vmatpush1.bf16.msra.mxu0 %v4315
    %4540 = vmatprep.subr.bf16.mxu0 0
    %4541 = vmatpush1.bf16.msra.mxu0 0
    %4542 = vmatprep.subr.bf16.mxu0 0
    %4543 = vmatpush1.bf16.msra.mxu0 0
    %4544 = vmatprep.subr.bf16.mxu0 0
    %4545 = vmatpush1.bf16.msra.mxu0 0
    %4546 = vmatprep.subr.bf16.mxu0 0
    %4547 = vmatpush1.bf16.msra.mxu0 0
    %4548 = vmatprep.subr.bf16.mxu0 0
    %4549 = vmatpush1.bf16.msra.mxu0 0
    %4550 = vmatprep.subr.bf16.mxu0 0
    %4551 = vmatpush1.bf16.msra.mxu0 0
    %4552 = vmatprep.subr.bf16.mxu0 0
    %4553 = vmatpush1.bf16.msra.mxu0 0
    %4554 = vmatprep.subr.bf16.mxu0 0
    %4555 = vmatpush1.bf16.msra.mxu0 0
    %4556 = vmatprep.subr.bf16.mxu0 0
    %4557 = vmatpush1.bf16.msra.mxu0 0
    %4558 = vmatprep.subr.bf16.mxu0 0
    %4559 = vmatpush1.bf16.msra.mxu0 0
    %4560 = vmatprep.subr.bf16.mxu0 0
    %4561 = vmatpush1.bf16.msra.mxu0 0
    %4562 = vmatprep.subr.bf16.mxu0 0
    %4563 = vmatpush1.bf16.msra.mxu0 0
    %4564 = vmatprep.subr.bf16.mxu0 0
    %4565 = vmatpush1.bf16.msra.mxu0 0
    %4566 = vmatprep.subr.bf16.mxu0 0
    %4567 = vmatpush1.bf16.msra.mxu0 0
    %4568 = vmatprep.subr.bf16.mxu0 0
    %4569 = vmatpush1.bf16.msra.mxu0 0
    %4570 = vmatprep.mubr.bf16.mxu0 0
    %4571 = vmatmul.mubr.bf16.gmra.mrb[0].mxu0 %v640
    %v4572 = vpop.f32.mrb[0].mxu0
    %v4573 = vadd.f32 %v4532, %v4572
    %v4574 = vpop.f32.mrb[0].mxu0
    %v4575 = vadd.f32 %v4534, %v4574
    %v4576 = vpop.f32.mrb[0].mxu0
    %v4577 = vpop.f32.mrb[0].mxu0
    %4578 = vdwg.mxu0
    %v4579 = vmax.f32 %v3824, %v4573
    %v4580 = vmax.f32 %v3825, %v4575
    %s4581 = scalar_lea.vmem %s1, 4704
    %v4582 = vld [vmem:[%s4581] sm:$0xff]
    %v4583 = vld [vmem:[%s4581 + $0x8] sm:$0xff]
    %v4584 = vld [vmem:[%s4581 + $0x10] sm:$0xff]
    %v4585 = vld [vmem:[%s4581 + $0x18] sm:$0xff]
    %v4586 = vld [vmem:[%s4581 + $0x20] sm:$0xff]
    %v4587 = vld [vmem:[%s4581 + $0x28] sm:$0xff]
    %v4588 = vld [vmem:[%s4581 + $0x30] sm:$0xff]
    %v4589 = vld [vmem:[%s4581 + $0x38] sm:$0xff]
    %v4590 = vld [vmem:[%s4581 + $0x40] sm:$0xff]
    %v4591 = vld [vmem:[%s4581 + $0x48] sm:$0xff]
    %v4592 = vld [vmem:[%s4581 + $0x50] sm:$0xff]
    %v4593 = vld [vmem:[%s4581 + $0x58] sm:$0xff]
    %v4594 = vld [vmem:[%s4581 + $0x60] sm:$0xff]
    %v4595 = vld [vmem:[%s4581 + $0x68] sm:$0xff]
    %v4596 = vld [vmem:[%s4581 + $0x70] sm:$0xff]
    %v4597 = vld [vmem:[%s4581 + $0x78] sm:$0xff]
    %v4598 = vld [vmem:[%s4581 + $0x80] sm:$0xff]
    %v4599 = vld [vmem:[%s4581 + $0x88] sm:$0xff]
    %v4600 = vld [vmem:[%s4581 + $0x90] sm:$0xff]
    %v4601 = vld [vmem:[%s4581 + $0x98] sm:$0xff]
    %v4602 = vld [vmem:[%s4581 + $0xa0] sm:$0xff]
    %v4603 = vld [vmem:[%s4581 + $0xa8] sm:$0xff]
    %v4604 = vld [vmem:[%s4581 + $0xb0] sm:$0xff]
    %v4605 = vld [vmem:[%s4581 + $0xb8] sm:$0xff]
    %v4606 = vld [vmem:[%s4581 + $0xc0] sm:$0xff]
    %v4607 = vld [vmem:[%s4581 + $0xc8] sm:$0xff]
    %v4608 = vld [vmem:[%s4581 + $0xd0] sm:$0xff]
    %v4609 = vld [vmem:[%s4581 + $0xd8] sm:$0xff]
    %v4610 = vld [vmem:[%s4581 + $0xe0] sm:$0xff]
    %v4611 = vld [vmem:[%s4581 + $0xe8] sm:$0xff]
    %v4612 = vld [vmem:[%s4581 + $0xf0] sm:$0xff]
    %v4613 = vld [vmem:[%s4581 + $0xf8] sm:$0xff]
    %v4614 = vld [vmem:[%s4581 + $0x100] sm:$0xff]
    %v4615 = vld [vmem:[%s4581 + $0x108] sm:$0xff]
    %v4616 = vld [vmem:[%s4581 + $0x110] sm:$0xff]
    %v4617 = vld [vmem:[%s4581 + $0x118] sm:$0xff]
    %v4618 = vld [vmem:[%s4581 + $0x120] sm:$0xff]
    %v4619 = vld [vmem:[%s4581 + $0x128] sm:$0xff]
    %v4620 = vld [vmem:[%s4581 + $0x130] sm:$0xff]
    %v4621 = vld [vmem:[%s4581 + $0x138] sm:$0xff]
    %v4622 = vld [vmem:[%s4581 + $0x140] sm:$0xff]
    %v4623 = vld [vmem:[%s4581 + $0x148] sm:$0xff]
    %v4624 = vld [vmem:[%s4581 + $0x150] sm:$0xff]
    %v4625 = vld [vmem:[%s4581 + $0x158] sm:$0xff]
    %v4626 = vld [vmem:[%s4581 + $0x160] sm:$0xff]
    %v4627 = vld [vmem:[%s4581 + $0x168] sm:$0xff]
    %v4628 = vld [vmem:[%s4581 + $0x170] sm:$0xff]
    %v4629 = vld [vmem:[%s4581 + $0x178] sm:$0xff]
    %v4630 = vld [vmem:[%s4581 + $0x180] sm:$0xff]
    %v4631 = vld [vmem:[%s4581 + $0x188] sm:$0xff]
    %v4632 = vld [vmem:[%s4581 + $0x190] sm:$0xff]
    %v4633 = vld [vmem:[%s4581 + $0x198] sm:$0xff]
    %v4634 = vld [vmem:[%s4581 + $0x1a0] sm:$0xff]
    %v4635 = vld [vmem:[%s4581 + $0x1a8] sm:$0xff]
    %v4636 = vld [vmem:[%s4581 + $0x1b0] sm:$0xff]
    %v4637 = vld [vmem:[%s4581 + $0x1b8] sm:$0xff]
    %v4638 = vld [vmem:[%s4581 + $0x1c0] sm:$0xff]
    %v4639 = vld [vmem:[%s4581 + $0x1c8] sm:$0xff]
    %v4640 = vld [vmem:[%s4581 + $0x1d0] sm:$0xff]
    %v4641 = vld [vmem:[%s4581 + $0x1d8] sm:$0xff]
    %v4642 = vld [vmem:[%s4581 + $0x1e0] sm:$0xff]
    %v4643 = vld [vmem:[%s4581 + $0x1e8] sm:$0xff]
    %v4644 = vld [vmem:[%s4581 + $0x1f0] sm:$0xff]
    %v4645 = vld [vmem:[%s4581 + $0x1f8] sm:$0xff]
    %v4646 = vld [vmem:[%s4581 + $0x200] sm:$0xff]
    %v4647 = vld [vmem:[%s4581 + $0x208] sm:$0xff]
    %v4648 = vld [vmem:[%s4581 + $0x210] sm:$0xff]
    %v4649 = vld [vmem:[%s4581 + $0x218] sm:$0xff]
    %v4650 = vld [vmem:[%s4581 + $0x220] sm:$0xff]
    %v4651 = vld [vmem:[%s4581 + $0x228] sm:$0xff]
    %v4652 = vld [vmem:[%s4581 + $0x230] sm:$0xff]
    %v4653 = vld [vmem:[%s4581 + $0x238] sm:$0xff]
    %v4654 = vld [vmem:[%s4581 + $0x240] sm:$0xff]
    %v4655 = vld [vmem:[%s4581 + $0x248] sm:$0xff]
    %v4656 = vld [vmem:[%s4581 + $0x250] sm:$0xff]
    %v4657 = vld [vmem:[%s4581 + $0x258] sm:$0xff]
    %v4658 = vld [vmem:[%s4581 + $0x260] sm:$0xff]
    %v4659 = vld [vmem:[%s4581 + $0x268] sm:$0xff]
    %v4660 = vld [vmem:[%s4581 + $0x270] sm:$0xff]
    %v4661 = vld [vmem:[%s4581 + $0x278] sm:$0xff]
    %v4662 = vld [vmem:[%s4581 + $0x280] sm:$0xff]
    %v4663 = vld [vmem:[%s4581 + $0x288] sm:$0xff]
    %v4664 = vld [vmem:[%s4581 + $0x290] sm:$0xff]
    %v4665 = vld [vmem:[%s4581 + $0x298] sm:$0xff]
    %v4666 = vld [vmem:[%s4581 + $0x2a0] sm:$0xff]
    %v4667 = vld [vmem:[%s4581 + $0x2a8] sm:$0xff]
    %v4668 = vld [vmem:[%s4581 + $0x2b0] sm:$0xff]
    %v4669 = vld [vmem:[%s4581 + $0x2b8] sm:$0xff]
    %v4670 = vld [vmem:[%s4581 + $0x2c0] sm:$0xff]
    %v4671 = vld [vmem:[%s4581 + $0x2c8] sm:$0xff]
    %v4672 = vld [vmem:[%s4581 + $0x2d0] sm:$0xff]
    %v4673 = vld [vmem:[%s4581 + $0x2d8] sm:$0xff]
    %v4674 = vld [vmem:[%s4581 + $0x2e0] sm:$0xff]
    %v4675 = vld [vmem:[%s4581 + $0x2e8] sm:$0xff]
    %v4676 = vld [vmem:[%s4581 + $0x2f0] sm:$0xff]
    %v4677 = vld [vmem:[%s4581 + $0x2f8] sm:$0xff]
    %v4678 = vld [vmem:[%s4581 + $0x300] sm:$0xff]
    %v4679 = vld [vmem:[%s4581 + $0x308] sm:$0xff]
    %v4778 = vunpack.c.l.b16 %v4582
    %v4779 = vunpack.c.h.b16 %v4582
    %v4780 = vunpack.c.l.b16 %v4583
    %v4781 = vunpack.c.h.b16 %v4583
    %v4782 = vunpack.c.l.b16 %v4584
    %v4783 = vunpack.c.h.b16 %v4584
    %v4784 = vunpack.c.l.b16 %v4585
    %v4785 = vunpack.c.h.b16 %v4585
    %v4786 = vunpack.c.l.b16 %v4586
    %v4787 = vunpack.c.h.b16 %v4586
    %v4788 = vunpack.c.l.b16 %v4587
    %v4789 = vunpack.c.h.b16 %v4587
    %v4790 = vunpack.c.l.b16 %v4588
    %v4791 = vunpack.c.h.b16 %v4588
    %v4792 = vunpack.c.l.b16 %v4589
    %v4793 = vunpack.c.h.b16 %v4589
    %v4794 = vunpack.c.l.b16 %v4590
    %v4795 = vunpack.c.h.b16 %v4590
    %v4796 = vunpack.c.l.b16 %v4591
    %v4797 = vunpack.c.h.b16 %v4591
    %v4798 = vunpack.c.l.b16 %v4592
    %v4799 = vunpack.c.h.b16 %v4592
    %v4800 = vunpack.c.l.b16 %v4593
    %v4801 = vunpack.c.h.b16 %v4593
    %v4802 = vunpack.c.l.b16 %v4594
    %v4803 = vunpack.c.h.b16 %v4594
    %v4804 = vunpack.c.l.b16 %v4595
    %v4805 = vunpack.c.h.b16 %v4595
    %v4806 = vunpack.c.l.b16 %v4596
    %v4807 = vunpack.c.h.b16 %v4596
    %v4808 = vunpack.c.l.b16 %v4597
    %v4809 = vunpack.c.h.b16 %v4597
    %v4810 = vunpack.c.l.b16 %v4598
    %v4811 = vunpack.c.h.b16 %v4598
    %v4812 = vunpack.c.l.b16 %v4599
    %v4813 = vunpack.c.h.b16 %v4599
    %v4814 = vunpack.c.l.b16 %v4600
    %v4815 = vunpack.c.h.b16 %v4600
    %v4816 = vunpack.c.l.b16 %v4601
    %v4817 = vunpack.c.h.b16 %v4601
    %v4818 = vunpack.c.l.b16 %v4602
    %v4819 = vunpack.c.h.b16 %v4602
    %v4820 = vunpack.c.l.b16 %v4603
    %v4821 = vunpack.c.h.b16 %v4603
    %v4822 = vunpack.c.l.b16 %v4604
    %v4823 = vunpack.c.h.b16 %v4604
    %v4824 = vunpack.c.l.b16 %v4605
    %v4825 = vunpack.c.h.b16 %v4605
    %v4826 = vunpack.c.l.b16 %v4606
    %v4827 = vunpack.c.h.b16 %v4606
    %v4828 = vunpack.c.l.b16 %v4607
    %v4829 = vunpack.c.h.b16 %v4607
    %v4830 = vunpack.c.l.b16 %v4608
    %v4831 = vunpack.c.h.b16 %v4608
    %v4832 = vunpack.c.l.b16 %v4609
    %v4833 = vunpack.c.h.b16 %v4609
    %v4834 = vunpack.c.l.b16 %v4610
    %v4835 = vunpack.c.h.b16 %v4610
    %v4836 = vunpack.c.l.b16 %v4611
    %v4837 = vunpack.c.h.b16 %v4611
    %v4838 = vunpack.c.l.b16 %v4612
    %v4839 = vunpack.c.h.b16 %v4612
    %v4840 = vunpack.c.l.b16 %v4613
    %v4841 = vunpack.c.h.b16 %v4613
    %v4842 = vunpack.c.l.b16 %v4614
    %v4843 = vunpack.c.h.b16 %v4614
    %v4844 = vunpack.c.l.b16 %v4615
    %v4845 = vunpack.c.h.b16 %v4615
    %v4846 = vunpack.c.l.b16 %v4616
    %v4847 = vunpack.c.h.b16 %v4616
    %v4848 = vunpack.c.l.b16 %v4617
    %v4849 = vunpack.c.h.b16 %v4617
    %v4850 = vunpack.c.l.b16 %v4618
    %v4851 = vunpack.c.h.b16 %v4618
    %v4852 = vunpack.c.l.b16 %v4619
    %v4853 = vunpack.c.h.b16 %v4619
    %v4854 = vunpack.c.l.b16 %v4620
    %v4855 = vunpack.c.h.b16 %v4620
    %v4856 = vunpack.c.l.b16 %v4621
    %v4857 = vunpack.c.h.b16 %v4621
    %v4858 = vunpack.c.l.b16 %v4622
    %v4859 = vunpack.c.h.b16 %v4622
    %v4860 = vunpack.c.l.b16 %v4623
    %v4861 = vunpack.c.h.b16 %v4623
    %v4862 = vunpack.c.l.b16 %v4624
    %v4863 = vunpack.c.h.b16 %v4624
    %v4864 = vunpack.c.l.b16 %v4625
    %v4865 = vunpack.c.h.b16 %v4625
    %v4866 = vunpack.c.l.b16 %v4626
    %v4867 = vunpack.c.h.b16 %v4626
    %v4868 = vunpack.c.l.b16 %v4627
    %v4869 = vunpack.c.h.b16 %v4627
    %v4870 = vunpack.c.l.b16 %v4628
    %v4871 = vunpack.c.h.b16 %v4628
    %v4872 = vunpack.c.l.b16 %v4629
    %v4873 = vunpack.c.h.b16 %v4629
    %v4874 = vunpack.c.l.b16 %v4630
    %v4875 = vunpack.c.h.b16 %v4630
    %v4876 = vunpack.c.l.b16 %v4631
    %v4877 = vunpack.c.h.b16 %v4631
    %v4878 = vunpack.c.l.b16 %v4632
    %v4879 = vunpack.c.h.b16 %v4632
    %v4880 = vunpack.c.l.b16 %v4633
    %v4881 = vunpack.c.h.b16 %v4633
    %v4882 = vunpack.c.l.b16 %v4634
    %v4883 = vunpack.c.h.b16 %v4634
    %v4884 = vunpack.c.l.b16 %v4635
    %v4885 = vunpack.c.h.b16 %v4635
    %v4886 = vunpack.c.l.b16 %v4636
    %v4887 = vunpack.c.h.b16 %v4636
    %v4888 = vunpack.c.l.b16 %v4637
    %v4889 = vunpack.c.h.b16 %v4637
    %v4890 = vunpack.c.l.b16 %v4638
    %v4891 = vunpack.c.h.b16 %v4638
    %v4892 = vunpack.c.l.b16 %v4639
    %v4893 = vunpack.c.h.b16 %v4639
    %v4894 = vunpack.c.l.b16 %v4640
    %v4895 = vunpack.c.h.b16 %v4640
    %v4896 = vunpack.c.l.b16 %v4641
    %v4897 = vunpack.c.h.b16 %v4641
    %v4898 = vunpack.c.l.b16 %v4642
    %v4899 = vunpack.c.h.b16 %v4642
    %v4900 = vunpack.c.l.b16 %v4643
    %v4901 = vunpack.c.h.b16 %v4643
    %v4902 = vunpack.c.l.b16 %v4644
    %v4903 = vunpack.c.h.b16 %v4644
    %v4904 = vunpack.c.l.b16 %v4645
    %v4905 = vunpack.c.h.b16 %v4645
    %v4906 = vunpack.c.l.b16 %v4646
    %v4907 = vunpack.c.h.b16 %v4646
    %v4908 = vunpack.c.l.b16 %v4647
    %v4909 = vunpack.c.h.b16 %v4647
    %v4910 = vunpack.c.l.b16 %v4648
    %v4911 = vunpack.c.h.b16 %v4648
    %v4912 = vunpack.c.l.b16 %v4649
    %v4913 = vunpack.c.h.b16 %v4649
    %v4914 = vunpack.c.l.b16 %v4650
    %v4915 = vunpack.c.h.b16 %v4650
    %v4916 = vunpack.c.l.b16 %v4651
    %v4917 = vunpack.c.h.b16 %v4651
    %v4918 = vunpack.c.l.b16 %v4652
    %v4919 = vunpack.c.h.b16 %v4652
    %v4920 = vunpack.c.l.b16 %v4653
    %v4921 = vunpack.c.h.b16 %v4653
    %v4922 = vunpack.c.l.b16 %v4654
    %v4923 = vunpack.c.h.b16 %v4654
    %v4924 = vunpack.c.l.b16 %v4655
    %v4925 = vunpack.c.h.b16 %v4655
    %v4926 = vunpack.c.l.b16 %v4656
    %v4927 = vunpack.c.h.b16 %v4656
    %v4928 = vunpack.c.l.b16 %v4657
    %v4929 = vunpack.c.h.b16 %v4657
    %v4930 = vunpack.c.l.b16 %v4658
    %v4931 = vunpack.c.h.b16 %v4658
    %v4932 = vunpack.c.l.b16 %v4659
    %v4933 = vunpack.c.h.b16 %v4659
    %v4934 = vunpack.c.l.b16 %v4660
    %v4935 = vunpack.c.h.b16 %v4660
    %v4936 = vunpack.c.l.b16 %v4661
    %v4937 = vunpack.c.h.b16 %v4661
    %v4938 = vunpack.c.l.b16 %v4662
    %v4939 = vunpack.c.h.b16 %v4662
    %v4940 = vunpack.c.l.b16 %v4663
    %v4941 = vunpack.c.h.b16 %v4663
    %v4942 = vunpack.c.l.b16 %v4664
    %v4943 = vunpack.c.h.b16 %v4664
    %v4944 = vunpack.c.l.b16 %v4665
    %v4945 = vunpack.c.h.b16 %v4665
    %v4946 = vunpack.c.l.b16 %v4666
    %v4947 = vunpack.c.h.b16 %v4666
    %v4948 = vunpack.c.l.b16 %v4667
    %v4949 = vunpack.c.h.b16 %v4667
    %v4950 = vunpack.c.l.b16 %v4668
    %v4951 = vunpack.c.h.b16 %v4668
    %v4952 = vunpack.c.l.b16 %v4669
    %v4953 = vunpack.c.h.b16 %v4669
    %v4954 = vunpack.c.l.b16 %v4670
    %v4955 = vunpack.c.h.b16 %v4670
    %v4956 = vunpack.c.l.b16 %v4671
    %v4957 = vunpack.c.h.b16 %v4671
    %v4958 = vunpack.c.l.b16 %v4672
    %v4959 = vunpack.c.h.b16 %v4672
    %v4960 = vunpack.c.l.b16 %v4673
    %v4961 = vunpack.c.h.b16 %v4673
    %v4962 = vunpack.c.l.b16 %v4674
    %v4963 = vunpack.c.h.b16 %v4674
    %v4964 = vunpack.c.l.b16 %v4675
    %v4965 = vunpack.c.h.b16 %v4675
    %v4966 = vunpack.c.l.b16 %v4676
    %v4967 = vunpack.c.h.b16 %v4676
    %v4968 = vunpack.c.l.b16 %v4677
    %v4969 = vunpack.c.h.b16 %v4677
    %v4970 = vunpack.c.l.b16 %v4678
    %v4971 = vunpack.c.h.b16 %v4678
    %v4972 = vunpack.c.l.b16 %v4679
    %v4973 = vunpack.c.h.b16 %v4679
    %v4974 = vpack.c.b16 %v4780, %v4778
    %v4975 = vpack.c.b16 %v4781, %v4779
    %v4976 = vpack.c.b16 %v4784, %v4782
    %v4977 = vpack.c.b16 %v4785, %v4783
    %v4978 = vpack.c.b16 %v4788, %v4786
    %v4979 = vpack.c.b16 %v4789, %v4787
    %v4980 = vpack.c.b16 %v4792, %v4790
    %v4981 = vpack.c.b16 %v4793, %v4791
    %v4982 = vpack.c.b16 %v4796, %v4794
    %v4983 = vpack.c.b16 %v4797, %v4795
    %v4984 = vpack.c.b16 %v4800, %v4798
    %v4985 = vpack.c.b16 %v4801, %v4799
    %v4986 = vpack.c.b16 %v4804, %v4802
    %v4987 = vpack.c.b16 %v4805, %v4803
    %v4988 = vpack.c.b16 %v4808, %v4806
    %v4989 = vpack.c.b16 %v4809, %v4807
    %v4990 = vpack.c.b16 %v4812, %v4810
    %v4991 = vpack.c.b16 %v4813, %v4811
    %v4992 = vpack.c.b16 %v4816, %v4814
    %v4993 = vpack.c.b16 %v4817, %v4815
    %v4994 = vpack.c.b16 %v4820, %v4818
    %v4995 = vpack.c.b16 %v4821, %v4819
    %v4996 = vpack.c.b16 %v4824, %v4822
    %v4997 = vpack.c.b16 %v4825, %v4823
    %v4998 = vpack.c.b16 %v4828, %v4826
    %v4999 = vpack.c.b16 %v4829, %v4827
    %v5000 = vpack.c.b16 %v4832, %v4830
    %v5001 = vpack.c.b16 %v4833, %v4831
    %v5002 = vpack.c.b16 %v4836, %v4834
    %v5003 = vpack.c.b16 %v4837, %v4835
    %v5004 = vpack.c.b16 %v4840, %v4838
    %v5005 = vpack.c.b16 %v4841, %v4839
    %v5006 = vpack.c.b16 %v4844, %v4842
    %v5007 = vpack.c.b16 %v4845, %v4843
    %v5008 = vpack.c.b16 %v4848, %v4846
    %v5009 = vpack.c.b16 %v4849, %v4847
    %v5010 = vpack.c.b16 %v4852, %v4850
    %v5011 = vpack.c.b16 %v4853, %v4851
    %v5012 = vpack.c.b16 %v4856, %v4854
    %v5013 = vpack.c.b16 %v4857, %v4855
    %v5014 = vpack.c.b16 %v4860, %v4858
    %v5015 = vpack.c.b16 %v4861, %v4859
    %v5016 = vpack.c.b16 %v4864, %v4862
    %v5017 = vpack.c.b16 %v4865, %v4863
    %v5018 = vpack.c.b16 %v4868, %v4866
    %v5019 = vpack.c.b16 %v4869, %v4867
    %v5020 = vpack.c.b16 %v4872, %v4870
    %v5021 = vpack.c.b16 %v4873, %v4871
    %v5022 = vpack.c.b16 %v4876, %v4874
    %v5023 = vpack.c.b16 %v4877, %v4875
    %v5024 = vpack.c.b16 %v4880, %v4878
    %v5025 = vpack.c.b16 %v4881, %v4879
    %v5026 = vpack.c.b16 %v4884, %v4882
    %v5027 = vpack.c.b16 %v4885, %v4883
    %v5028 = vpack.c.b16 %v4888, %v4886
    %v5029 = vpack.c.b16 %v4889, %v4887
    %v5030 = vpack.c.b16 %v4892, %v4890
    %v5031 = vpack.c.b16 %v4893, %v4891
    %v5032 = vpack.c.b16 %v4896, %v4894
    %v5033 = vpack.c.b16 %v4897, %v4895
    %v5034 = vpack.c.b16 %v4900, %v4898
    %v5035 = vpack.c.b16 %v4901, %v4899
    %v5036 = vpack.c.b16 %v4904, %v4902
    %v5037 = vpack.c.b16 %v4905, %v4903
    %v5038 = vpack.c.b16 %v4908, %v4906
    %v5039 = vpack.c.b16 %v4909, %v4907
    %v5040 = vpack.c.b16 %v4912, %v4910
    %v5041 = vpack.c.b16 %v4913, %v4911
    %v5042 = vpack.c.b16 %v4916, %v4914
    %v5043 = vpack.c.b16 %v4917, %v4915
    %v5044 = vpack.c.b16 %v4920, %v4918
    %v5045 = vpack.c.b16 %v4921, %v4919
    %v5046 = vpack.c.b16 %v4924, %v4922
    %v5047 = vpack.c.b16 %v4925, %v4923
    %v5048 = vpack.c.b16 %v4928, %v4926
    %v5049 = vpack.c.b16 %v4929, %v4927
    %v5050 = vpack.c.b16 %v4932, %v4930
    %v5051 = vpack.c.b16 %v4933, %v4931
    %v5052 = vpack.c.b16 %v4936, %v4934
    %v5053 = vpack.c.b16 %v4937, %v4935
    %v5054 = vpack.c.b16 %v4940, %v4938
    %v5055 = vpack.c.b16 %v4941, %v4939
    %v5056 = vpack.c.b16 %v4944, %v4942
    %v5057 = vpack.c.b16 %v4945, %v4943
    %v5058 = vpack.c.b16 %v4948, %v4946
    %v5059 = vpack.c.b16 %v4949, %v4947
    %v5060 = vpack.c.b16 %v4952, %v4950
    %v5061 = vpack.c.b16 %v4953, %v4951
    %v5062 = vpack.c.b16 %v4956, %v4954
    %v5063 = vpack.c.b16 %v4957, %v4955
    %v5064 = vpack.c.b16 %v4960, %v4958
    %v5065 = vpack.c.b16 %v4961, %v4959
    %v5066 = vpack.c.b16 %v4964, %v4962
    %v5067 = vpack.c.b16 %v4965, %v4963
    %v5068 = vpack.c.b16 %v4968, %v4966
    %v5069 = vpack.c.b16 %v4969, %v4967
    %v5070 = vpack.c.b16 %v4972, %v4970
    %v5071 = vpack.c.b16 %v4973, %v4971
    %5170 = vmatprep.subr.bf16.mxu0 %v4975
    %5171 = vmatpush1.bf16.msra.mxu0 %v4974
    %5172 = vmatprep.subr.bf16.mxu0 %v4977
    %5173 = vmatpush1.bf16.msra.mxu0 %v4976
    %5174 = vmatprep.subr.bf16.mxu0 %v4979
    %5175 = vmatpush1.bf16.msra.mxu0 %v4978
    %5176 = vmatprep.subr.bf16.mxu0 %v4981
    %5177 = vmatpush1.bf16.msra.mxu0 %v4980
    %5178 = vmatprep.subr.bf16.mxu0 %v4983
    %5179 = vmatpush1.bf16.msra.mxu0 %v4982
    %5180 = vmatprep.subr.bf16.mxu0 %v4985
    %5181 = vmatpush1.bf16.msra.mxu0 %v4984
    %5182 = vmatprep.subr.bf16.mxu0 %v4987
    %5183 = vmatpush1.bf16.msra.mxu0 %v4986
    %5184 = vmatprep.subr.bf16.mxu0 %v4989
    %5185 = vmatpush1.bf16.msra.mxu0 %v4988
    %5186 = vmatprep.subr.bf16.mxu0 %v4991
    %5187 = vmatpush1.bf16.msra.mxu0 %v4990
    %5188 = vmatprep.subr.bf16.mxu0 %v4993
    %5189 = vmatpush1.bf16.msra.mxu0 %v4992
    %5190 = vmatprep.subr.bf16.mxu0 %v4995
    %5191 = vmatpush1.bf16.msra.mxu0 %v4994
    %5192 = vmatprep.subr.bf16.mxu0 %v4997
    %5193 = vmatpush1.bf16.msra.mxu0 %v4996
    %5194 = vmatprep.subr.bf16.mxu0 %v4999
    %5195 = vmatpush1.bf16.msra.mxu0 %v4998
    %5196 = vmatprep.subr.bf16.mxu0 %v5001
    %5197 = vmatpush1.bf16.msra.mxu0 %v5000
    %5198 = vmatprep.subr.bf16.mxu0 %v5003
    %5199 = vmatpush1.bf16.msra.mxu0 %v5002
    %5200 = vmatprep.subr.bf16.mxu0 %v5005
    %5201 = vmatpush1.bf16.msra.mxu0 %v5004
    %5202 = vmatprep.mubr.bf16.mxu0 %v136
    %5203 = vmatmul.mubr.bf16.gmra.mrb[0].mxu0 %v135
    %v5204 = vpop.f32.mrb[0].mxu0
    %v5205 = vadd.f32 0.0, %v5204
    %v5206 = vpop.f32.mrb[0].mxu0
    %v5207 = vadd.f32 0.0, %v5206
    %v5208 = vpop.f32.mrb[0].mxu0
    %v5209 = vpop.f32.mrb[0].mxu0
    %5210 = vdwg.mxu0
    %5211 = vmatprep.subr.bf16.mxu0 %v5007
    %5212 = vmatpush1.bf16.msra.mxu0 %v5006
    %5213 = vmatprep.subr.bf16.mxu0 %v5009
    %5214 = vmatpush1.bf16.msra.mxu0 %v5008
    %5215 = vmatprep.subr.bf16.mxu0 %v5011
    %5216 = vmatpush1.bf16.msra.mxu0 %v5010
    %5217 = vmatprep.subr.bf16.mxu0 %v5013
    %5218 = vmatpush1.bf16.msra.mxu0 %v5012
    %5219 = vmatprep.subr.bf16.mxu0 %v5015
    %5220 = vmatpush1.bf16.msra.mxu0 %v5014
    %5221 = vmatprep.subr.bf16.mxu0 %v5017
    %5222 = vmatpush1.bf16.msra.mxu0 %v5016
    %5223 = vmatprep.subr.bf16.mxu0 %v5019
    %5224 = vmatpush1.bf16.msra.mxu0 %v5018
    %5225 = vmatprep.subr.bf16.mxu0 %v5021
    %5226 = vmatpush1.bf16.msra.mxu0 %v5020
    %5227 = vmatprep.subr.bf16.mxu0 %v5023
    %5228 = vmatpush1.bf16.msra.mxu0 %v5022
    %5229 = vmatprep.subr.bf16.mxu0 %v5025
    %5230 = vmatpush1.bf16.msra.mxu0 %v5024
    %5231 = vmatprep.subr.bf16.mxu0 %v5027
    %5232 = vmatpush1.bf16.msra.mxu0 %v5026
    %5233 = vmatprep.subr.bf16.mxu0 %v5029
    %5234 = vmatpush1.bf16.msra.mxu0 %v5028
    %5235 = vmatprep.subr.bf16.mxu0 %v5031
    %5236 = vmatpush1.bf16.msra.mxu0 %v5030
    %5237 = vmatprep.subr.bf16.mxu0 %v5033
    %5238 = vmatpush1.bf16.msra.mxu0 %v5032
    %5239 = vmatprep.subr.bf16.mxu0 %v5035
    %5240 = vmatpush1.bf16.msra.mxu0 %v5034
    %5241 = vmatprep.subr.bf16.mxu0 %v5037
    %5242 = vmatpush1.bf16.msra.mxu0 %v5036
    %5243 = vmatprep.mubr.bf16.mxu0 %v138
    %5244 = vmatmul.mubr.bf16.gmra.mrb[0].mxu0 %v137
    %v5245 = vpop.f32.mrb[0].mxu0
    %v5246 = vadd.f32 %v5205, %v5245
    %v5247 = vpop.f32.mrb[0].mxu0
    %v5248 = vadd.f32 %v5207, %v5247
    %v5249 = vpop.f32.mrb[0].mxu0
    %v5250 = vpop.f32.mrb[0].mxu0
    %5251 = vdwg.mxu0
    %5252 = vmatprep.subr.bf16.mxu0 %v5039
    %5253 = vmatpush1.bf16.msra.mxu0 %v5038
    %5254 = vmatprep.subr.bf16.mxu0 %v5041
    %5255 = vmatpush1.bf16.msra.mxu0 %v5040
    %5256 = vmatprep.subr.bf16.mxu0 %v5043
    %5257 = vmatpush1.bf16.msra.mxu0 %v5042
    %5258 = vmatprep.subr.bf16.mxu0 %v5045
    %5259 = vmatpush1.bf16.msra.mxu0 %v5044
    %5260 = vmatprep.subr.bf16.mxu0 %v5047
    %5261 = vmatpush1.bf16.msra.mxu0 %v5046
    %5262 = vmatprep.subr.bf16.mxu0 %v5049
    %5263 = vmatpush1.bf16.msra.mxu0 %v5048
    %5264 = vmatprep.subr.bf16.mxu0 %v5051
    %5265 = vmatpush1.bf16.msra.mxu0 %v5050
    %5266 = vmatprep.subr.bf16.mxu0 %v5053
    %5267 = vmatpush1.bf16.msra.mxu0 %v5052
    %5268 = vmatprep.subr.bf16.mxu0 %v5055
    %5269 = vmatpush1.bf16.msra.mxu0 %v5054
    %5270 = vmatprep.subr.bf16.mxu0 %v5057
    %5271 = vmatpush1.bf16.msra.mxu0 %v5056
    %5272 = vmatprep.subr.bf16.mxu0 %v5059
    %5273 = vmatpush1.bf16.msra.mxu0 %v5058
    %5274 = vmatprep.subr.bf16.mxu0 %v5061
    %5275 = vmatpush1.bf16.msra.mxu0 %v5060
    %5276 = vmatprep.subr.bf16.mxu0 %v5063
    %5277 = vmatpush1.bf16.msra.mxu0 %v5062
    %5278 = vmatprep.subr.bf16.mxu0 %v5065
    %5279 = vmatpush1.bf16.msra.mxu0 %v5064
    %5280 = vmatprep.subr.bf16.mxu0 %v5067
    %5281 = vmatpush1.bf16.msra.mxu0 %v5066
    %5282 = vmatprep.subr.bf16.mxu0 %v5069
    %5283 = vmatpush1.bf16.msra.mxu0 %v5068
    %5284 = vmatprep.mubr.bf16.mxu0 %v140
    %5285 = vmatmul.mubr.bf16.gmra.mrb[0].mxu0 %v139
    %v5286 = vpop.f32.mrb[0].mxu0
    %v5287 = vadd.f32 %v5246, %v5286
    %v5288 = vpop.f32.mrb[0].mxu0
    %v5289 = vadd.f32 %v5248, %v5288
    %v5290 = vpop.f32.mrb[0].mxu0
    %v5291 = vpop.f32.mrb[0].mxu0
    %5292 = vdwg.mxu0
    %5293 = vmatprep.subr.bf16.mxu0 %v5071
    %5294 = vmatpush1.bf16.msra.mxu0 %v5070
    %5295 = vmatprep.subr.bf16.mxu0 0
    %5296 = vmatpush1.bf16.msra.mxu0 0
    %5297 = vmatprep.subr.bf16.mxu0 0
    %5298 = vmatpush1.bf16.msra.mxu0 0
    %5299 = vmatprep.subr.bf16.mxu0 0
    %5300 = vmatpush1.bf16.msra.mxu0 0
    %5301 = vmatprep.subr.bf16.mxu0 0
    %5302 = vmatpush1.bf16.msra.mxu0 0
    %5303 = vmatprep.subr.bf16.mxu0 0
    %5304 = vmatpush1.bf16.msra.mxu0 0
    %5305 = vmatprep.subr.bf16.mxu0 0
    %5306 = vmatpush1.bf16.msra.mxu0 0
    %5307 = vmatprep.subr.bf16.mxu0 0
    %5308 = vmatpush1.bf16.msra.mxu0 0
    %5309 = vmatprep.subr.bf16.mxu0 0
    %5310 = vmatpush1.bf16.msra.mxu0 0
    %5311 = vmatprep.subr.bf16.mxu0 0
    %5312 = vmatpush1.bf16.msra.mxu0 0
    %5313 = vmatprep.subr.bf16.mxu0 0
    %5314 = vmatpush1.bf16.msra.mxu0 0
    %5315 = vmatprep.subr.bf16.mxu0 0
    %5316 = vmatpush1.bf16.msra.mxu0 0
    %5317 = vmatprep.subr.bf16.mxu0 0
    %5318 = vmatpush1.bf16.msra.mxu0 0
    %5319 = vmatprep.subr.bf16.mxu0 0
    %5320 = vmatpush1.bf16.msra.mxu0 0
    %5321 = vmatprep.subr.bf16.mxu0 0
    %5322 = vmatpush1.bf16.msra.mxu0 0
    %5323 = vmatprep.subr.bf16.mxu0 0
    %5324 = vmatpush1.bf16.msra.mxu0 0
    %5325 = vmatprep.mubr.bf16.mxu0 0
    %5326 = vmatmul.mubr.bf16.gmra.mrb[0].mxu0 %v640
    %v5327 = vpop.f32.mrb[0].mxu0
    %v5328 = vadd.f32 %v5287, %v5327
    %v5329 = vpop.f32.mrb[0].mxu0
    %v5330 = vadd.f32 %v5289, %v5329
    %v5331 = vpop.f32.mrb[0].mxu0
    %v5332 = vpop.f32.mrb[0].mxu0
    %5333 = vdwg.mxu0
    %v5334 = vmax.f32 %v4579, %v5328
    %v5335 = vmax.f32 %v4580, %v5330
    %s5336 = scalar_lea.vmem %s1, 5488
    %v5337 = vld [vmem:[%s5336] sm:$0xff]
    %v5338 = vld [vmem:[%s5336 + $0x8] sm:$0xff]
    %v5339 = vld [vmem:[%s5336 + $0x10] sm:$0xff]
    %v5340 = vld [vmem:[%s5336 + $0x18] sm:$0xff]
    %v5341 = vld [vmem:[%s5336 + $0x20] sm:$0xff]
    %v5342 = vld [vmem:[%s5336 + $0x28] sm:$0xff]
    %v5343 = vld [vmem:[%s5336 + $0x30] sm:$0xff]
    %v5344 = vld [vmem:[%s5336 + $0x38] sm:$0xff]
    %v5345 = vld [vmem:[%s5336 + $0x40] sm:$0xff]
    %v5346 = vld [vmem:[%s5336 + $0x48] sm:$0xff]
    %v5347 = vld [vmem:[%s5336 + $0x50] sm:$0xff]
    %v5348 = vld [vmem:[%s5336 + $0x58] sm:$0xff]
    %v5349 = vld [vmem:[%s5336 + $0x60] sm:$0xff]
    %v5350 = vld [vmem:[%s5336 + $0x68] sm:$0xff]
    %v5351 = vld [vmem:[%s5336 + $0x70] sm:$0xff]
    %v5352 = vld [vmem:[%s5336 + $0x78] sm:$0xff]
    %v5353 = vld [vmem:[%s5336 + $0x80] sm:$0xff]
    %v5354 = vld [vmem:[%s5336 + $0x88] sm:$0xff]
    %v5355 = vld [vmem:[%s5336 + $0x90] sm:$0xff]
    %v5356 = vld [vmem:[%s5336 + $0x98] sm:$0xff]
    %v5357 = vld [vmem:[%s5336 + $0xa0] sm:$0xff]
    %v5358 = vld [vmem:[%s5336 + $0xa8] sm:$0xff]
    %v5359 = vld [vmem:[%s5336 + $0xb0] sm:$0xff]
    %v5360 = vld [vmem:[%s5336 + $0xb8] sm:$0xff]
    %v5361 = vld [vmem:[%s5336 + $0xc0] sm:$0xff]
    %v5362 = vld [vmem:[%s5336 + $0xc8] sm:$0xff]
    %v5363 = vld [vmem:[%s5336 + $0xd0] sm:$0xff]
    %v5364 = vld [vmem:[%s5336 + $0xd8] sm:$0xff]
    %v5365 = vld [vmem:[%s5336 + $0xe0] sm:$0xff]
    %v5366 = vld [vmem:[%s5336 + $0xe8] sm:$0xff]
    %v5367 = vld [vmem:[%s5336 + $0xf0] sm:$0xff]
    %v5368 = vld [vmem:[%s5336 + $0xf8] sm:$0xff]
    %v5369 = vld [vmem:[%s5336 + $0x100] sm:$0xff]
    %v5370 = vld [vmem:[%s5336 + $0x108] sm:$0xff]
    %v5371 = vld [vmem:[%s5336 + $0x110] sm:$0xff]
    %v5372 = vld [vmem:[%s5336 + $0x118] sm:$0xff]
    %v5373 = vld [vmem:[%s5336 + $0x120] sm:$0xff]
    %v5374 = vld [vmem:[%s5336 + $0x128] sm:$0xff]
    %v5375 = vld [vmem:[%s5336 + $0x130] sm:$0xff]
    %v5376 = vld [vmem:[%s5336 + $0x138] sm:$0xff]
    %v5377 = vld [vmem:[%s5336 + $0x140] sm:$0xff]
    %v5378 = vld [vmem:[%s5336 + $0x148] sm:$0xff]
    %v5379 = vld [vmem:[%s5336 + $0x150] sm:$0xff]
    %v5380 = vld [vmem:[%s5336 + $0x158] sm:$0xff]
    %v5381 = vld [vmem:[%s5336 + $0x160] sm:$0xff]
    %v5382 = vld [vmem:[%s5336 + $0x168] sm:$0xff]
    %v5383 = vld [vmem:[%s5336 + $0x170] sm:$0xff]
    %v5384 = vld [vmem:[%s5336 + $0x178] sm:$0xff]
    %v5385 = vld [vmem:[%s5336 + $0x180] sm:$0xff]
    %v5386 = vld [vmem:[%s5336 + $0x188] sm:$0xff]
    %v5387 = vld [vmem:[%s5336 + $0x190] sm:$0xff]
    %v5388 = vld [vmem:[%s5336 + $0x198] sm:$0xff]
    %v5389 = vld [vmem:[%s5336 + $0x1a0] sm:$0xff]
    %v5390 = vld [vmem:[%s5336 + $0x1a8] sm:$0xff]
    %v5391 = vld [vmem:[%s5336 + $0x1b0] sm:$0xff]
    %v5392 = vld [vmem:[%s5336 + $0x1b8] sm:$0xff]
    %v5393 = vld [vmem:[%s5336 + $0x1c0] sm:$0xff]
    %v5394 = vld [vmem:[%s5336 + $0x1c8] sm:$0xff]
    %v5395 = vld [vmem:[%s5336 + $0x1d0] sm:$0xff]
    %v5396 = vld [vmem:[%s5336 + $0x1d8] sm:$0xff]
    %v5397 = vld [vmem:[%s5336 + $0x1e0] sm:$0xff]
    %v5398 = vld [vmem:[%s5336 + $0x1e8] sm:$0xff]
    %v5399 = vld [vmem:[%s5336 + $0x1f0] sm:$0xff]
    %v5400 = vld [vmem:[%s5336 + $0x1f8] sm:$0xff]
    %v5401 = vld [vmem:[%s5336 + $0x200] sm:$0xff]
    %v5402 = vld [vmem:[%s5336 + $0x208] sm:$0xff]
    %v5403 = vld [vmem:[%s5336 + $0x210] sm:$0xff]
    %v5404 = vld [vmem:[%s5336 + $0x218] sm:$0xff]
    %v5405 = vld [vmem:[%s5336 + $0x220] sm:$0xff]
    %v5406 = vld [vmem:[%s5336 + $0x228] sm:$0xff]
    %v5407 = vld [vmem:[%s5336 + $0x230] sm:$0xff]
    %v5408 = vld [vmem:[%s5336 + $0x238] sm:$0xff]
    %v5409 = vld [vmem:[%s5336 + $0x240] sm:$0xff]
    %v5410 = vld [vmem:[%s5336 + $0x248] sm:$0xff]
    %v5411 = vld [vmem:[%s5336 + $0x250] sm:$0xff]
    %v5412 = vld [vmem:[%s5336 + $0x258] sm:$0xff]
    %v5413 = vld [vmem:[%s5336 + $0x260] sm:$0xff]
    %v5414 = vld [vmem:[%s5336 + $0x268] sm:$0xff]
    %v5415 = vld [vmem:[%s5336 + $0x270] sm:$0xff]
    %v5416 = vld [vmem:[%s5336 + $0x278] sm:$0xff]
    %v5417 = vld [vmem:[%s5336 + $0x280] sm:$0xff]
    %v5418 = vld [vmem:[%s5336 + $0x288] sm:$0xff]
    %v5419 = vld [vmem:[%s5336 + $0x290] sm:$0xff]
    %v5420 = vld [vmem:[%s5336 + $0x298] sm:$0xff]
    %v5421 = vld [vmem:[%s5336 + $0x2a0] sm:$0xff]
    %v5422 = vld [vmem:[%s5336 + $0x2a8] sm:$0xff]
    %v5423 = vld [vmem:[%s5336 + $0x2b0] sm:$0xff]
    %v5424 = vld [vmem:[%s5336 + $0x2b8] sm:$0xff]
    %v5425 = vld [vmem:[%s5336 + $0x2c0] sm:$0xff]
    %v5426 = vld [vmem:[%s5336 + $0x2c8] sm:$0xff]
    %v5427 = vld [vmem:[%s5336 + $0x2d0] sm:$0xff]
    %v5428 = vld [vmem:[%s5336 + $0x2d8] sm:$0xff]
    %v5429 = vld [vmem:[%s5336 + $0x2e0] sm:$0xff]
    %v5430 = vld [vmem:[%s5336 + $0x2e8] sm:$0xff]
    %v5431 = vld [vmem:[%s5336 + $0x2f0] sm:$0xff]
    %v5432 = vld [vmem:[%s5336 + $0x2f8] sm:$0xff]
    %v5433 = vld [vmem:[%s5336 + $0x300] sm:$0xff]
    %v5434 = vld [vmem:[%s5336 + $0x308] sm:$0xff]
    %v5533 = vunpack.c.l.b16 %v5337
    %v5534 = vunpack.c.h.b16 %v5337
    %v5535 = vunpack.c.l.b16 %v5338
    %v5536 = vunpack.c.h.b16 %v5338
    %v5537 = vunpack.c.l.b16 %v5339
    %v5538 = vunpack.c.h.b16 %v5339
    %v5539 = vunpack.c.l.b16 %v5340
    %v5540 = vunpack.c.h.b16 %v5340
    %v5541 = vunpack.c.l.b16 %v5341
    %v5542 = vunpack.c.h.b16 %v5341
    %v5543 = vunpack.c.l.b16 %v5342
    %v5544 = vunpack.c.h.b16 %v5342
    %v5545 = vunpack.c.l.b16 %v5343
    %v5546 = vunpack.c.h.b16 %v5343
    %v5547 = vunpack.c.l.b16 %v5344
    %v5548 = vunpack.c.h.b16 %v5344
    %v5549 = vunpack.c.l.b16 %v5345
    %v5550 = vunpack.c.h.b16 %v5345
    %v5551 = vunpack.c.l.b16 %v5346
    %v5552 = vunpack.c.h.b16 %v5346
    %v5553 = vunpack.c.l.b16 %v5347
    %v5554 = vunpack.c.h.b16 %v5347
    %v5555 = vunpack.c.l.b16 %v5348
    %v5556 = vunpack.c.h.b16 %v5348
    %v5557 = vunpack.c.l.b16 %v5349
    %v5558 = vunpack.c.h.b16 %v5349
    %v5559 = vunpack.c.l.b16 %v5350
    %v5560 = vunpack.c.h.b16 %v5350
    %v5561 = vunpack.c.l.b16 %v5351
    %v5562 = vunpack.c.h.b16 %v5351
    %v5563 = vunpack.c.l.b16 %v5352
    %v5564 = vunpack.c.h.b16 %v5352
    %v5565 = vunpack.c.l.b16 %v5353
    %v5566 = vunpack.c.h.b16 %v5353
    %v5567 = vunpack.c.l.b16 %v5354
    %v5568 = vunpack.c.h.b16 %v5354
    %v5569 = vunpack.c.l.b16 %v5355
    %v5570 = vunpack.c.h.b16 %v5355
    %v5571 = vunpack.c.l.b16 %v5356
    %v5572 = vunpack.c.h.b16 %v5356
    %v5573 = vunpack.c.l.b16 %v5357
    %v5574 = vunpack.c.h.b16 %v5357
    %v5575 = vunpack.c.l.b16 %v5358
    %v5576 = vunpack.c.h.b16 %v5358
    %v5577 = vunpack.c.l.b16 %v5359
    %v5578 = vunpack.c.h.b16 %v5359
    %v5579 = vunpack.c.l.b16 %v5360
    %v5580 = vunpack.c.h.b16 %v5360
    %v5581 = vunpack.c.l.b16 %v5361
    %v5582 = vunpack.c.h.b16 %v5361
    %v5583 = vunpack.c.l.b16 %v5362
    %v5584 = vunpack.c.h.b16 %v5362
    %v5585 = vunpack.c.l.b16 %v5363
    %v5586 = vunpack.c.h.b16 %v5363
    %v5587 = vunpack.c.l.b16 %v5364
    %v5588 = vunpack.c.h.b16 %v5364
    %v5589 = vunpack.c.l.b16 %v5365
    %v5590 = vunpack.c.h.b16 %v5365
    %v5591 = vunpack.c.l.b16 %v5366
    %v5592 = vunpack.c.h.b16 %v5366
    %v5593 = vunpack.c.l.b16 %v5367
    %v5594 = vunpack.c.h.b16 %v5367
    %v5595 = vunpack.c.l.b16 %v5368
    %v5596 = vunpack.c.h.b16 %v5368
    %v5597 = vunpack.c.l.b16 %v5369
    %v5598 = vunpack.c.h.b16 %v5369
    %v5599 = vunpack.c.l.b16 %v5370
    %v5600 = vunpack.c.h.b16 %v5370
    %v5601 = vunpack.c.l.b16 %v5371
    %v5602 = vunpack.c.h.b16 %v5371
    %v5603 = vunpack.c.l.b16 %v5372
    %v5604 = vunpack.c.h.b16 %v5372
    %v5605 = vunpack.c.l.b16 %v5373
    %v5606 = vunpack.c.h.b16 %v5373
    %v5607 = vunpack.c.l.b16 %v5374
    %v5608 = vunpack.c.h.b16 %v5374
    %v5609 = vunpack.c.l.b16 %v5375
    %v5610 = vunpack.c.h.b16 %v5375
    %v5611 = vunpack.c.l.b16 %v5376
    %v5612 = vunpack.c.h.b16 %v5376
    %v5613 = vunpack.c.l.b16 %v5377
    %v5614 = vunpack.c.h.b16 %v5377
    %v5615 = vunpack.c.l.b16 %v5378
    %v5616 = vunpack.c.h.b16 %v5378
    %v5617 = vunpack.c.l.b16 %v5379
    %v5618 = vunpack.c.h.b16 %v5379
    %v5619 = vunpack.c.l.b16 %v5380
    %v5620 = vunpack.c.h.b16 %v5380
    %v5621 = vunpack.c.l.b16 %v5381
    %v5622 = vunpack.c.h.b16 %v5381
    %v5623 = vunpack.c.l.b16 %v5382
    %v5624 = vunpack.c.h.b16 %v5382
    %v5625 = vunpack.c.l.b16 %v5383
    %v5626 = vunpack.c.h.b16 %v5383
    %v5627 = vunpack.c.l.b16 %v5384
    %v5628 = vunpack.c.h.b16 %v5384
    %v5629 = vunpack.c.l.b16 %v5385
    %v5630 = vunpack.c.h.b16 %v5385
    %v5631 = vunpack.c.l.b16 %v5386
    %v5632 = vunpack.c.h.b16 %v5386
    %v5633 = vunpack.c.l.b16 %v5387
    %v5634 = vunpack.c.h.b16 %v5387
    %v5635 = vunpack.c.l.b16 %v5388
    %v5636 = vunpack.c.h.b16 %v5388
    %v5637 = vunpack.c.l.b16 %v5389
    %v5638 = vunpack.c.h.b16 %v5389
    %v5639 = vunpack.c.l.b16 %v5390
    %v5640 = vunpack.c.h.b16 %v5390
    %v5641 = vunpack.c.l.b16 %v5391
    %v5642 = vunpack.c.h.b16 %v5391
    %v5643 = vunpack.c.l.b16 %v5392
    %v5644 = vunpack.c.h.b16 %v5392
    %v5645 = vunpack.c.l.b16 %v5393
    %v5646 = vunpack.c.h.b16 %v5393
    %v5647 = vunpack.c.l.b16 %v5394
    %v5648 = vunpack.c.h.b16 %v5394
    %v5649 = vunpack.c.l.b16 %v5395
    %v5650 = vunpack.c.h.b16 %v5395
    %v5651 = vunpack.c.l.b16 %v5396
    %v5652 = vunpack.c.h.b16 %v5396
    %v5653 = vunpack.c.l.b16 %v5397
    %v5654 = vunpack.c.h.b16 %v5397
    %v5655 = vunpack.c.l.b16 %v5398
    %v5656 = vunpack.c.h.b16 %v5398
    %v5657 = vunpack.c.l.b16 %v5399
    %v5658 = vunpack.c.h.b16 %v5399
    %v5659 = vunpack.c.l.b16 %v5400
    %v5660 = vunpack.c.h.b16 %v5400
    %v5661 = vunpack.c.l.b16 %v5401
    %v5662 = vunpack.c.h.b16 %v5401
    %v5663 = vunpack.c.l.b16 %v5402
    %v5664 = vunpack.c.h.b16 %v5402
    %v5665 = vunpack.c.l.b16 %v5403
    %v5666 = vunpack.c.h.b16 %v5403
    %v5667 = vunpack.c.l.b16 %v5404
    %v5668 = vunpack.c.h.b16 %v5404
    %v5669 = vunpack.c.l.b16 %v5405
    %v5670 = vunpack.c.h.b16 %v5405
    %v5671 = vunpack.c.l.b16 %v5406
    %v5672 = vunpack.c.h.b16 %v5406
    %v5673 = vunpack.c.l.b16 %v5407
    %v5674 = vunpack.c.h.b16 %v5407
    %v5675 = vunpack.c.l.b16 %v5408
    %v5676 = vunpack.c.h.b16 %v5408
    %v5677 = vunpack.c.l.b16 %v5409
    %v5678 = vunpack.c.h.b16 %v5409
    %v5679 = vunpack.c.l.b16 %v5410
    %v5680 = vunpack.c.h.b16 %v5410
    %v5681 = vunpack.c.l.b16 %v5411
    %v5682 = vunpack.c.h.b16 %v5411
    %v5683 = vunpack.c.l.b16 %v5412
    %v5684 = vunpack.c.h.b16 %v5412
    %v5685 = vunpack.c.l.b16 %v5413
    %v5686 = vunpack.c.h.b16 %v5413
    %v5687 = vunpack.c.l.b16 %v5414
    %v5688 = vunpack.c.h.b16 %v5414
    %v5689 = vunpack.c.l.b16 %v5415
    %v5690 = vunpack.c.h.b16 %v5415
    %v5691 = vunpack.c.l.b16 %v5416
    %v5692 = vunpack.c.h.b16 %v5416
    %v5693 = vunpack.c.l.b16 %v5417
    %v5694 = vunpack.c.h.b16 %v5417
    %v5695 = vunpack.c.l.b16 %v5418
    %v5696 = vunpack.c.h.b16 %v5418
    %v5697 = vunpack.c.l.b16 %v5419
    %v5698 = vunpack.c.h.b16 %v5419
    %v5699 = vunpack.c.l.b16 %v5420
    %v5700 = vunpack.c.h.b16 %v5420
    %v5701 = vunpack.c.l.b16 %v5421
    %v5702 = vunpack.c.h.b16 %v5421
    %v5703 = vunpack.c.l.b16 %v5422
    %v5704 = vunpack.c.h.b16 %v5422
    %v5705 = vunpack.c.l.b16 %v5423
    %v5706 = vunpack.c.h.b16 %v5423
    %v5707 = vunpack.c.l.b16 %v5424
    %v5708 = vunpack.c.h.b16 %v5424
    %v5709 = vunpack.c.l.b16 %v5425
    %v5710 = vunpack.c.h.b16 %v5425
    %v5711 = vunpack.c.l.b16 %v5426
    %v5712 = vunpack.c.h.b16 %v5426
    %v5713 = vunpack.c.l.b16 %v5427
    %v5714 = vunpack.c.h.b16 %v5427
    %v5715 = vunpack.c.l.b16 %v5428
    %v5716 = vunpack.c.h.b16 %v5428
    %v5717 = vunpack.c.l.b16 %v5429
    %v5718 = vunpack.c.h.b16 %v5429
    %v5719 = vunpack.c.l.b16 %v5430
    %v5720 = vunpack.c.h.b16 %v5430
    %v5721 = vunpack.c.l.b16 %v5431
    %v5722 = vunpack.c.h.b16 %v5431
    %v5723 = vunpack.c.l.b16 %v5432
    %v5724 = vunpack.c.h.b16 %v5432
    %v5725 = vunpack.c.l.b16 %v5433
    %v5726 = vunpack.c.h.b16 %v5433
    %v5727 = vunpack.c.l.b16 %v5434
    %v5728 = vunpack.c.h.b16 %v5434
    %v5729 = vpack.c.b16 %v5535, %v5533
    %v5730 = vpack.c.b16 %v5536, %v5534
    %v5731 = vpack.c.b16 %v5539, %v5537
    %v5732 = vpack.c.b16 %v5540, %v5538
    %v5733 = vpack.c.b16 %v5543, %v5541
    %v5734 = vpack.c.b16 %v5544, %v5542
    %v5735 = vpack.c.b16 %v5547, %v5545
    %v5736 = vpack.c.b16 %v5548, %v5546
    %v5737 = vpack.c.b16 %v5551, %v5549
    %v5738 = vpack.c.b16 %v5552, %v5550
    %v5739 = vpack.c.b16 %v5555, %v5553
    %v5740 = vpack.c.b16 %v5556, %v5554
    %v5741 = vpack.c.b16 %v5559, %v5557
    %v5742 = vpack.c.b16 %v5560, %v5558
    %v5743 = vpack.c.b16 %v5563, %v5561
    %v5744 = vpack.c.b16 %v5564, %v5562
    %v5745 = vpack.c.b16 %v5567, %v5565
    %v5746 = vpack.c.b16 %v5568, %v5566
    %v5747 = vpack.c.b16 %v5571, %v5569
    %v5748 = vpack.c.b16 %v5572, %v5570
    %v5749 = vpack.c.b16 %v5575, %v5573
    %v5750 = vpack.c.b16 %v5576, %v5574
    %v5751 = vpack.c.b16 %v5579, %v5577
    %v5752 = vpack.c.b16 %v5580, %v5578
    %v5753 = vpack.c.b16 %v5583, %v5581
    %v5754 = vpack.c.b16 %v5584, %v5582
    %v5755 = vpack.c.b16 %v5587, %v5585
    %v5756 = vpack.c.b16 %v5588, %v5586
    %v5757 = vpack.c.b16 %v5591, %v5589
    %v5758 = vpack.c.b16 %v5592, %v5590
    %v5759 = vpack.c.b16 %v5595, %v5593
    %v5760 = vpack.c.b16 %v5596, %v5594
    %v5761 = vpack.c.b16 %v5599, %v5597
    %v5762 = vpack.c.b16 %v5600, %v5598
    %v5763 = vpack.c.b16 %v5603, %v5601
    %v5764 = vpack.c.b16 %v5604, %v5602
    %v5765 = vpack.c.b16 %v5607, %v5605
    %v5766 = vpack.c.b16 %v5608, %v5606
    %v5767 = vpack.c.b16 %v5611, %v5609
    %v5768 = vpack.c.b16 %v5612, %v5610
    %v5769 = vpack.c.b16 %v5615, %v5613
    %v5770 = vpack.c.b16 %v5616, %v5614
    %v5771 = vpack.c.b16 %v5619, %v5617
    %v5772 = vpack.c.b16 %v5620, %v5618
    %v5773 = vpack.c.b16 %v5623, %v5621
    %v5774 = vpack.c.b16 %v5624, %v5622
    %v5775 = vpack.c.b16 %v5627, %v5625
    %v5776 = vpack.c.b16 %v5628, %v5626
    %v5777 = vpack.c.b16 %v5631, %v5629
    %v5778 = vpack.c.b16 %v5632, %v5630
    %v5779 = vpack.c.b16 %v5635, %v5633
    %v5780 = vpack.c.b16 %v5636, %v5634
    %v5781 = vpack.c.b16 %v5639, %v5637
    %v5782 = vpack.c.b16 %v5640, %v5638
    %v5783 = vpack.c.b16 %v5643, %v5641
    %v5784 = vpack.c.b16 %v5644, %v5642
    %v5785 = vpack.c.b16 %v5647, %v5645
    %v5786 = vpack.c.b16 %v5648, %v5646
    %v5787 = vpack.c.b16 %v5651, %v5649
    %v5788 = vpack.c.b16 %v5652, %v5650
    %v5789 = vpack.c.b16 %v5655, %v5653
    %v5790 = vpack.c.b16 %v5656, %v5654
    %v5791 = vpack.c.b16 %v5659, %v5657
    %v5792 = vpack.c.b16 %v5660, %v5658
    %v5793 = vpack.c.b16 %v5663, %v5661
    %v5794 = vpack.c.b16 %v5664, %v5662
    %v5795 = vpack.c.b16 %v5667, %v5665
    %v5796 = vpack.c.b16 %v5668, %v5666
    %v5797 = vpack.c.b16 %v5671, %v5669
    %v5798 = vpack.c.b16 %v5672, %v5670
    %v5799 = vpack.c.b16 %v5675, %v5673
    %v5800 = vpack.c.b16 %v5676, %v5674
    %v5801 = vpack.c.b16 %v5679, %v5677
    %v5802 = vpack.c.b16 %v5680, %v5678
    %v5803 = vpack.c.b16 %v5683, %v5681
    %v5804 = vpack.c.b16 %v5684, %v5682
    %v5805 = vpack.c.b16 %v5687, %v5685
    %v5806 = vpack.c.b16 %v5688, %v5686
    %v5807 = vpack.c.b16 %v5691, %v5689
    %v5808 = vpack.c.b16 %v5692, %v5690
    %v5809 = vpack.c.b16 %v5695, %v5693
    %v5810 = vpack.c.b16 %v5696, %v5694
    %v5811 = vpack.c.b16 %v5699, %v5697
    %v5812 = vpack.c.b16 %v5700, %v5698
    %v5813 = vpack.c.b16 %v5703, %v5701
    %v5814 = vpack.c.b16 %v5704, %v5702
    %v5815 = vpack.c.b16 %v5707, %v5705
    %v5816 = vpack.c.b16 %v5708, %v5706
    %v5817 = vpack.c.b16 %v5711, %v5709
    %v5818 = vpack.c.b16 %v5712, %v5710
    %v5819 = vpack.c.b16 %v5715, %v5713
    %v5820 = vpack.c.b16 %v5716, %v5714
    %v5821 = vpack.c.b16 %v5719, %v5717
    %v5822 = vpack.c.b16 %v5720, %v5718
    %v5823 = vpack.c.b16 %v5723, %v5721
    %v5824 = vpack.c.b16 %v5724, %v5722
    %v5825 = vpack.c.b16 %v5727, %v5725
    %v5826 = vpack.c.b16 %v5728, %v5726
    %5925 = vmatprep.subr.bf16.mxu0 %v5730
    %5926 = vmatpush1.bf16.msra.mxu0 %v5729
    %5927 = vmatprep.subr.bf16.mxu0 %v5732
    %5928 = vmatpush1.bf16.msra.mxu0 %v5731
    %5929 = vmatprep.subr.bf16.mxu0 %v5734
    %5930 = vmatpush1.bf16.msra.mxu0 %v5733
    %5931 = vmatprep.subr.bf16.mxu0 %v5736
    %5932 = vmatpush1.bf16.msra.mxu0 %v5735
    %5933 = vmatprep.subr.bf16.mxu0 %v5738
    %5934 = vmatpush1.bf16.msra.mxu0 %v5737
    %5935 = vmatprep.subr.bf16.mxu0 %v5740
    %5936 = vmatpush1.bf16.msra.mxu0 %v5739
    %5937 = vmatprep.subr.bf16.mxu0 %v5742
    %5938 = vmatpush1.bf16.msra.mxu0 %v5741
    %5939 = vmatprep.subr.bf16.mxu0 %v5744
    %5940 = vmatpush1.bf16.msra.mxu0 %v5743
    %5941 = vmatprep.subr.bf16.mxu0 %v5746
    %5942 = vmatpush1.bf16.msra.mxu0 %v5745
    %5943 = vmatprep.subr.bf16.mxu0 %v5748
    %5944 = vmatpush1.bf16.msra.mxu0 %v5747
    %5945 = vmatprep.subr.bf16.mxu0 %v5750
    %5946 = vmatpush1.bf16.msra.mxu0 %v5749
    %5947 = vmatprep.subr.bf16.mxu0 %v5752
    %5948 = vmatpush1.bf16.msra.mxu0 %v5751
    %5949 = vmatprep.subr.bf16.mxu0 %v5754
    %5950 = vmatpush1.bf16.msra.mxu0 %v5753
    %5951 = vmatprep.subr.bf16.mxu0 %v5756
    %5952 = vmatpush1.bf16.msra.mxu0 %v5755
    %5953 = vmatprep.subr.bf16.mxu0 %v5758
    %5954 = vmatpush1.bf16.msra.mxu0 %v5757
    %5955 = vmatprep.subr.bf16.mxu0 %v5760
    %5956 = vmatpush1.bf16.msra.mxu0 %v5759
    %5957 = vmatprep.mubr.bf16.mxu0 %v136
    %5958 = vmatmul.mubr.bf16.gmra.mrb[0].mxu0 %v135
    %v5959 = vpop.f32.mrb[0].mxu0
    %v5960 = vadd.f32 0.0, %v5959
    %v5961 = vpop.f32.mrb[0].mxu0
    %v5962 = vadd.f32 0.0, %v5961
    %v5963 = vpop.f32.mrb[0].mxu0
    %v5964 = vpop.f32.mrb[0].mxu0
    %5965 = vdwg.mxu0
    %5966 = vmatprep.subr.bf16.mxu0 %v5762
    %5967 = vmatpush1.bf16.msra.mxu0 %v5761
    %5968 = vmatprep.subr.bf16.mxu0 %v5764
    %5969 = vmatpush1.bf16.msra.mxu0 %v5763
    %5970 = vmatprep.subr.bf16.mxu0 %v5766
    %5971 = vmatpush1.bf16.msra.mxu0 %v5765
    %5972 = vmatprep.subr.bf16.mxu0 %v5768
    %5973 = vmatpush1.bf16.msra.mxu0 %v5767
    %5974 = vmatprep.subr.bf16.mxu0 %v5770
    %5975 = vmatpush1.bf16.msra.mxu0 %v5769
    %5976 = vmatprep.subr.bf16.mxu0 %v5772
    %5977 = vmatpush1.bf16.msra.mxu0 %v5771
    %5978 = vmatprep.subr.bf16.mxu0 %v5774
    %5979 = vmatpush1.bf16.msra.mxu0 %v5773
    %5980 = vmatprep.subr.bf16.mxu0 %v5776
    %5981 = vmatpush1.bf16.msra.mxu0 %v5775
    %5982 = vmatprep.subr.bf16.mxu0 %v5778
    %5983 = vmatpush1.bf16.msra.mxu0 %v5777
    %5984 = vmatprep.subr.bf16.mxu0 %v5780
    %5985 = vmatpush1.bf16.msra.mxu0 %v5779
    %5986 = vmatprep.subr.bf16.mxu0 %v5782
    %5987 = vmatpush1.bf16.msra.mxu0 %v5781
    %5988 = vmatprep.subr.bf16.mxu0 %v5784
    %5989 = vmatpush1.bf16.msra.mxu0 %v5783
    %5990 = vmatprep.subr.bf16.mxu0 %v5786
    %5991 = vmatpush1.bf16.msra.mxu0 %v5785
    %5992 = vmatprep.subr.bf16.mxu0 %v5788
    %5993 = vmatpush1.bf16.msra.mxu0 %v5787
    %5994 = vmatprep.subr.bf16.mxu0 %v5790
    %5995 = vmatpush1.bf16.msra.mxu0 %v5789
    %5996 = vmatprep.subr.bf16.mxu0 %v5792
    %5997 = vmatpush1.bf16.msra.mxu0 %v5791
    %5998 = vmatprep.mubr.bf16.mxu0 %v138
    %5999 = vmatmul.mubr.bf16.gmra.mrb[0].mxu0 %v137
    %v6000 = vpop.f32.mrb[0].mxu0
    %v6001 = vadd.f32 %v5960, %v6000
    %v6002 = vpop.f32.mrb[0].mxu0
    %v6003 = vadd.f32 %v5962, %v6002
    %v6004 = vpop.f32.mrb[0].mxu0
    %v6005 = vpop.f32.mrb[0].mxu0
    %6006 = vdwg.mxu0
    %6007 = vmatprep.subr.bf16.mxu0 %v5794
    %6008 = vmatpush1.bf16.msra.mxu0 %v5793
    %6009 = vmatprep.subr.bf16.mxu0 %v5796
    %6010 = vmatpush1.bf16.msra.mxu0 %v5795
    %6011 = vmatprep.subr.bf16.mxu0 %v5798
    %6012 = vmatpush1.bf16.msra.mxu0 %v5797
    %6013 = vmatprep.subr.bf16.mxu0 %v5800
    %6014 = vmatpush1.bf16.msra.mxu0 %v5799
    %6015 = vmatprep.subr.bf16.mxu0 %v5802
    %6016 = vmatpush1.bf16.msra.mxu0 %v5801
    %6017 = vmatprep.subr.bf16.mxu0 %v5804
    %6018 = vmatpush1.bf16.msra.mxu0 %v5803
    %6019 = vmatprep.subr.bf16.mxu0 %v5806
    %6020 = vmatpush1.bf16.msra.mxu0 %v5805
    %6021 = vmatprep.subr.bf16.mxu0 %v5808
    %6022 = vmatpush1.bf16.msra.mxu0 %v5807
    %6023 = vmatprep.subr.bf16.mxu0 %v5810
    %6024 = vmatpush1.bf16.msra.mxu0 %v5809
    %6025 = vmatprep.subr.bf16.mxu0 %v5812
    %6026 = vmatpush1.bf16.msra.mxu0 %v5811
    %6027 = vmatprep.subr.bf16.mxu0 %v5814
    %6028 = vmatpush1.bf16.msra.mxu0 %v5813
    %6029 = vmatprep.subr.bf16.mxu0 %v5816
    %6030 = vmatpush1.bf16.msra.mxu0 %v5815
    %6031 = vmatprep.subr.bf16.mxu0 %v5818
    %6032 = vmatpush1.bf16.msra.mxu0 %v5817
    %6033 = vmatprep.subr.bf16.mxu0 %v5820
    %6034 = vmatpush1.bf16.msra.mxu0 %v5819
    %6035 = vmatprep.subr.bf16.mxu0 %v5822
    %6036 = vmatpush1.bf16.msra.mxu0 %v5821
    %6037 = vmatprep.subr.bf16.mxu0 %v5824
    %6038 = vmatpush1.bf16.msra.mxu0 %v5823
    %6039 = vmatprep.mubr.bf16.mxu0 %v140
    %6040 = vmatmul.mubr.bf16.gmra.mrb[0].mxu0 %v139
    %v6041 = vpop.f32.mrb[0].mxu0
    %v6042 = vadd.f32 %v6001, %v6041
    %v6043 = vpop.f32.mrb[0].mxu0
    %v6044 = vadd.f32 %v6003, %v6043
    %v6045 = vpop.f32.mrb[0].mxu0
    %v6046 = vpop.f32.mrb[0].mxu0
    %6047 = vdwg.mxu0
    %6048 = vmatprep.subr.bf16.mxu0 %v5826
    %6049 = vmatpush1.bf16.msra.mxu0 %v5825
    %6050 = vmatprep.subr.bf16.mxu0 0
    %6051 = vmatpush1.bf16.msra.mxu0 0
    %6052 = vmatprep.subr.bf16.mxu0 0
    %6053 = vmatpush1.bf16.msra.mxu0 0
    %6054 = vmatprep.subr.bf16.mxu0 0
    %6055 = vmatpush1.bf16.msra.mxu0 0
    %6056 = vmatprep.subr.bf16.mxu0 0
    %6057 = vmatpush1.bf16.msra.mxu0 0
    %6058 = vmatprep.subr.bf16.mxu0 0
    %6059 = vmatpush1.bf16.msra.mxu0 0
    %6060 = vmatprep.subr.bf16.mxu0 0
    %6061 = vmatpush1.bf16.msra.mxu0 0
    %6062 = vmatprep.subr.bf16.mxu0 0
    %6063 = vmatpush1.bf16.msra.mxu0 0
    %6064 = vmatprep.subr.bf16.mxu0 0
    %6065 = vmatpush1.bf16.msra.mxu0 0
    %6066 = vmatprep.subr.bf16.mxu0 0
    %6067 = vmatpush1.bf16.msra.mxu0 0
    %6068 = vmatprep.subr.bf16.mxu0 0
    %6069 = vmatpush1.bf16.msra.mxu0 0
    %6070 = vmatprep.subr.bf16.mxu0 0
    %6071 = vmatpush1.bf16.msra.mxu0 0
    %6072 = vmatprep.subr.bf16.mxu0 0
    %6073 = vmatpush1.bf16.msra.mxu0 0
    %6074 = vmatprep.subr.bf16.mxu0 0
    %6075 = vmatpush1.bf16.msra.mxu0 0
    %6076 = vmatprep.subr.bf16.mxu0 0
    %6077 = vmatpush1.bf16.msra.mxu0 0
    %6078 = vmatprep.subr.bf16.mxu0 0
    %6079 = vmatpush1.bf16.msra.mxu0 0
    %6080 = vmatprep.mubr.bf16.mxu0 0
    %6081 = vmatmul.mubr.bf16.gmra.mrb[0].mxu0 %v640
    %v6082 = vpop.f32.mrb[0].mxu0
    %v6083 = vadd.f32 %v6042, %v6082
    %v6084 = vpop.f32.mrb[0].mxu0
    %v6085 = vadd.f32 %v6044, %v6084
    %v6086 = vpop.f32.mrb[0].mxu0
    %v6087 = vpop.f32.mrb[0].mxu0
    %6088 = vdwg.mxu0
    %v6089 = vmax.f32 %v5334, %v6083
    %v6090 = vmax.f32 %v5335, %v6085
    %s6091 = scalar_lea.vmem %s1, 6272
    %v6092 = vld [vmem:[%s6091] sm:$0xff]
    %v6093 = vld [vmem:[%s6091 + $0x8] sm:$0xff]
    %v6094 = vld [vmem:[%s6091 + $0x10] sm:$0xff]
    %v6095 = vld [vmem:[%s6091 + $0x18] sm:$0xff]
    %v6096 = vld [vmem:[%s6091 + $0x20] sm:$0xff]
    %v6097 = vld [vmem:[%s6091 + $0x28] sm:$0xff]
    %v6098 = vld [vmem:[%s6091 + $0x30] sm:$0xff]
    %v6099 = vld [vmem:[%s6091 + $0x38] sm:$0xff]
    %v6100 = vld [vmem:[%s6091 + $0x40] sm:$0xff]
    %v6101 = vld [vmem:[%s6091 + $0x48] sm:$0xff]
    %v6102 = vld [vmem:[%s6091 + $0x50] sm:$0xff]
    %v6103 = vld [vmem:[%s6091 + $0x58] sm:$0xff]
    %v6104 = vld [vmem:[%s6091 + $0x60] sm:$0xff]
    %v6105 = vld [vmem:[%s6091 + $0x68] sm:$0xff]
    %v6106 = vld [vmem:[%s6091 + $0x70] sm:$0xff]
    %v6107 = vld [vmem:[%s6091 + $0x78] sm:$0xff]
    %v6108 = vld [vmem:[%s6091 + $0x80] sm:$0xff]
    %v6109 = vld [vmem:[%s6091 + $0x88] sm:$0xff]
    %v6110 = vld [vmem:[%s6091 + $0x90] sm:$0xff]
    %v6111 = vld [vmem:[%s6091 + $0x98] sm:$0xff]
    %v6112 = vld [vmem:[%s6091 + $0xa0] sm:$0xff]
    %v6113 = vld [vmem:[%s6091 + $0xa8] sm:$0xff]
    %v6114 = vld [vmem:[%s6091 + $0xb0] sm:$0xff]
    %v6115 = vld [vmem:[%s6091 + $0xb8] sm:$0xff]
    %v6116 = vld [vmem:[%s6091 + $0xc0] sm:$0xff]
    %v6117 = vld [vmem:[%s6091 + $0xc8] sm:$0xff]
    %v6118 = vld [vmem:[%s6091 + $0xd0] sm:$0xff]
    %v6119 = vld [vmem:[%s6091 + $0xd8] sm:$0xff]
    %v6120 = vld [vmem:[%s6091 + $0xe0] sm:$0xff]
    %v6121 = vld [vmem:[%s6091 + $0xe8] sm:$0xff]
    %v6122 = vld [vmem:[%s6091 + $0xf0] sm:$0xff]
    %v6123 = vld [vmem:[%s6091 + $0xf8] sm:$0xff]
    %v6124 = vld [vmem:[%s6091 + $0x100] sm:$0xff]
    %v6125 = vld [vmem:[%s6091 + $0x108] sm:$0xff]
    %v6126 = vld [vmem:[%s6091 + $0x110] sm:$0xff]
    %v6127 = vld [vmem:[%s6091 + $0x118] sm:$0xff]
    %v6128 = vld [vmem:[%s6091 + $0x120] sm:$0xff]
    %v6129 = vld [vmem:[%s6091 + $0x128] sm:$0xff]
    %v6130 = vld [vmem:[%s6091 + $0x130] sm:$0xff]
    %v6131 = vld [vmem:[%s6091 + $0x138] sm:$0xff]
    %v6132 = vld [vmem:[%s6091 + $0x140] sm:$0xff]
    %v6133 = vld [vmem:[%s6091 + $0x148] sm:$0xff]
    %v6134 = vld [vmem:[%s6091 + $0x150] sm:$0xff]
    %v6135 = vld [vmem:[%s6091 + $0x158] sm:$0xff]
    %v6136 = vld [vmem:[%s6091 + $0x160] sm:$0xff]
    %v6137 = vld [vmem:[%s6091 + $0x168] sm:$0xff]
    %v6138 = vld [vmem:[%s6091 + $0x170] sm:$0xff]
    %v6139 = vld [vmem:[%s6091 + $0x178] sm:$0xff]
    %v6140 = vld [vmem:[%s6091 + $0x180] sm:$0xff]
    %v6141 = vld [vmem:[%s6091 + $0x188] sm:$0xff]
    %v6142 = vld [vmem:[%s6091 + $0x190] sm:$0xff]
    %v6143 = vld [vmem:[%s6091 + $0x198] sm:$0xff]
    %v6144 = vld [vmem:[%s6091 + $0x1a0] sm:$0xff]
    %v6145 = vld [vmem:[%s6091 + $0x1a8] sm:$0xff]
    %v6146 = vld [vmem:[%s6091 + $0x1b0] sm:$0xff]
    %v6147 = vld [vmem:[%s6091 + $0x1b8] sm:$0xff]
    %v6148 = vld [vmem:[%s6091 + $0x1c0] sm:$0xff]
    %v6149 = vld [vmem:[%s6091 + $0x1c8] sm:$0xff]
    %v6150 = vld [vmem:[%s6091 + $0x1d0] sm:$0xff]
    %v6151 = vld [vmem:[%s6091 + $0x1d8] sm:$0xff]
    %v6152 = vld [vmem:[%s6091 + $0x1e0] sm:$0xff]
    %v6153 = vld [vmem:[%s6091 + $0x1e8] sm:$0xff]
    %v6154 = vld [vmem:[%s6091 + $0x1f0] sm:$0xff]
    %v6155 = vld [vmem:[%s6091 + $0x1f8] sm:$0xff]
    %v6156 = vld [vmem:[%s6091 + $0x200] sm:$0xff]
    %v6157 = vld [vmem:[%s6091 + $0x208] sm:$0xff]
    %v6158 = vld [vmem:[%s6091 + $0x210] sm:$0xff]
    %v6159 = vld [vmem:[%s6091 + $0x218] sm:$0xff]
    %v6160 = vld [vmem:[%s6091 + $0x220] sm:$0xff]
    %v6161 = vld [vmem:[%s6091 + $0x228] sm:$0xff]
    %v6162 = vld [vmem:[%s6091 + $0x230] sm:$0xff]
    %v6163 = vld [vmem:[%s6091 + $0x238] sm:$0xff]
    %v6164 = vld [vmem:[%s6091 + $0x240] sm:$0xff]
    %v6165 = vld [vmem:[%s6091 + $0x248] sm:$0xff]
    %v6166 = vld [vmem:[%s6091 + $0x250] sm:$0xff]
    %v6167 = vld [vmem:[%s6091 + $0x258] sm:$0xff]
    %v6168 = vld [vmem:[%s6091 + $0x260] sm:$0xff]
    %v6169 = vld [vmem:[%s6091 + $0x268] sm:$0xff]
    %v6170 = vld [vmem:[%s6091 + $0x270] sm:$0xff]
    %v6171 = vld [vmem:[%s6091 + $0x278] sm:$0xff]
    %v6172 = vld [vmem:[%s6091 + $0x280] sm:$0xff]
    %v6173 = vld [vmem:[%s6091 + $0x288] sm:$0xff]
    %v6174 = vld [vmem:[%s6091 + $0x290] sm:$0xff]
    %v6175 = vld [vmem:[%s6091 + $0x298] sm:$0xff]
    %v6176 = vld [vmem:[%s6091 + $0x2a0] sm:$0xff]
    %v6177 = vld [vmem:[%s6091 + $0x2a8] sm:$0xff]
    %v6178 = vld [vmem:[%s6091 + $0x2b0] sm:$0xff]
    %v6179 = vld [vmem:[%s6091 + $0x2b8] sm:$0xff]
    %v6180 = vld [vmem:[%s6091 + $0x2c0] sm:$0xff]
    %v6181 = vld [vmem:[%s6091 + $0x2c8] sm:$0xff]
    %v6182 = vld [vmem:[%s6091 + $0x2d0] sm:$0xff]
    %v6183 = vld [vmem:[%s6091 + $0x2d8] sm:$0xff]
    %v6184 = vld [vmem:[%s6091 + $0x2e0] sm:$0xff]
    %v6185 = vld [vmem:[%s6091 + $0x2e8] sm:$0xff]
    %v6186 = vld [vmem:[%s6091 + $0x2f0] sm:$0xff]
    %v6187 = vld [vmem:[%s6091 + $0x2f8] sm:$0xff]
    %v6188 = vld [vmem:[%s6091 + $0x300] sm:$0xff]
    %v6189 = vld [vmem:[%s6091 + $0x308] sm:$0xff]
    %v6288 = vunpack.c.l.b16 %v6092
    %v6289 = vunpack.c.h.b16 %v6092
    %v6290 = vunpack.c.l.b16 %v6093
    %v6291 = vunpack.c.h.b16 %v6093
    %v6292 = vunpack.c.l.b16 %v6094
    %v6293 = vunpack.c.h.b16 %v6094
    %v6294 = vunpack.c.l.b16 %v6095
    %v6295 = vunpack.c.h.b16 %v6095
    %v6296 = vunpack.c.l.b16 %v6096
    %v6297 = vunpack.c.h.b16 %v6096
    %v6298 = vunpack.c.l.b16 %v6097
    %v6299 = vunpack.c.h.b16 %v6097
    %v6300 = vunpack.c.l.b16 %v6098
    %v6301 = vunpack.c.h.b16 %v6098
    %v6302 = vunpack.c.l.b16 %v6099
    %v6303 = vunpack.c.h.b16 %v6099
    %v6304 = vunpack.c.l.b16 %v6100
    %v6305 = vunpack.c.h.b16 %v6100
    %v6306 = vunpack.c.l.b16 %v6101
    %v6307 = vunpack.c.h.b16 %v6101
    %v6308 = vunpack.c.l.b16 %v6102
    %v6309 = vunpack.c.h.b16 %v6102
    %v6310 = vunpack.c.l.b16 %v6103
    %v6311 = vunpack.c.h.b16 %v6103
    %v6312 = vunpack.c.l.b16 %v6104
    %v6313 = vunpack.c.h.b16 %v6104
    %v6314 = vunpack.c.l.b16 %v6105
    %v6315 = vunpack.c.h.b16 %v6105
    %v6316 = vunpack.c.l.b16 %v6106
    %v6317 = vunpack.c.h.b16 %v6106
    %v6318 = vunpack.c.l.b16 %v6107
    %v6319 = vunpack.c.h.b16 %v6107
    %v6320 = vunpack.c.l.b16 %v6108
    %v6321 = vunpack.c.h.b16 %v6108
    %v6322 = vunpack.c.l.b16 %v6109
    %v6323 = vunpack.c.h.b16 %v6109
    %v6324 = vunpack.c.l.b16 %v6110
    %v6325 = vunpack.c.h.b16 %v6110
    %v6326 = vunpack.c.l.b16 %v6111
    %v6327 = vunpack.c.h.b16 %v6111
    %v6328 = vunpack.c.l.b16 %v6112
    %v6329 = vunpack.c.h.b16 %v6112
    %v6330 = vunpack.c.l.b16 %v6113
    %v6331 = vunpack.c.h.b16 %v6113
    %v6332 = vunpack.c.l.b16 %v6114
    %v6333 = vunpack.c.h.b16 %v6114
    %v6334 = vunpack.c.l.b16 %v6115
    %v6335 = vunpack.c.h.b16 %v6115
    %v6336 = vunpack.c.l.b16 %v6116
    %v6337 = vunpack.c.h.b16 %v6116
    %v6338 = vunpack.c.l.b16 %v6117
    %v6339 = vunpack.c.h.b16 %v6117
    %v6340 = vunpack.c.l.b16 %v6118
    %v6341 = vunpack.c.h.b16 %v6118
    %v6342 = vunpack.c.l.b16 %v6119
    %v6343 = vunpack.c.h.b16 %v6119
    %v6344 = vunpack.c.l.b16 %v6120
    %v6345 = vunpack.c.h.b16 %v6120
    %v6346 = vunpack.c.l.b16 %v6121
    %v6347 = vunpack.c.h.b16 %v6121
    %v6348 = vunpack.c.l.b16 %v6122
    %v6349 = vunpack.c.h.b16 %v6122
    %v6350 = vunpack.c.l.b16 %v6123
    %v6351 = vunpack.c.h.b16 %v6123
    %v6352 = vunpack.c.l.b16 %v6124
    %v6353 = vunpack.c.h.b16 %v6124
    %v6354 = vunpack.c.l.b16 %v6125
    %v6355 = vunpack.c.h.b16 %v6125
    %v6356 = vunpack.c.l.b16 %v6126
    %v6357 = vunpack.c.h.b16 %v6126
    %v6358 = vunpack.c.l.b16 %v6127
    %v6359 = vunpack.c.h.b16 %v6127
    %v6360 = vunpack.c.l.b16 %v6128
    %v6361 = vunpack.c.h.b16 %v6128
    %v6362 = vunpack.c.l.b16 %v6129
    %v6363 = vunpack.c.h.b16 %v6129
    %v6364 = vunpack.c.l.b16 %v6130
    %v6365 = vunpack.c.h.b16 %v6130
    %v6366 = vunpack.c.l.b16 %v6131
    %v6367 = vunpack.c.h.b16 %v6131
    %v6368 = vunpack.c.l.b16 %v6132
    %v6369 = vunpack.c.h.b16 %v6132
    %v6370 = vunpack.c.l.b16 %v6133
    %v6371 = vunpack.c.h.b16 %v6133
    %v6372 = vunpack.c.l.b16 %v6134
    %v6373 = vunpack.c.h.b16 %v6134
    %v6374 = vunpack.c.l.b16 %v6135
    %v6375 = vunpack.c.h.b16 %v6135
    %v6376 = vunpack.c.l.b16 %v6136
    %v6377 = vunpack.c.h.b16 %v6136
    %v6378 = vunpack.c.l.b16 %v6137
    %v6379 = vunpack.c.h.b16 %v6137
    %v6380 = vunpack.c.l.b16 %v6138
    %v6381 = vunpack.c.h.b16 %v6138
    %v6382 = vunpack.c.l.b16 %v6139
    %v6383 = vunpack.c.h.b16 %v6139
    %v6384 = vunpack.c.l.b16 %v6140
    %v6385 = vunpack.c.h.b16 %v6140
    %v6386 = vunpack.c.l.b16 %v6141
    %v6387 = vunpack.c.h.b16 %v6141
    %v6388 = vunpack.c.l.b16 %v6142
    %v6389 = vunpack.c.h.b16 %v6142
    %v6390 = vunpack.c.l.b16 %v6143
    %v6391 = vunpack.c.h.b16 %v6143
    %v6392 = vunpack.c.l.b16 %v6144
    %v6393 = vunpack.c.h.b16 %v6144
    %v6394 = vunpack.c.l.b16 %v6145
    %v6395 = vunpack.c.h.b16 %v6145
    %v6396 = vunpack.c.l.b16 %v6146
    %v6397 = vunpack.c.h.b16 %v6146
    %v6398 = vunpack.c.l.b16 %v6147
    %v6399 = vunpack.c.h.b16 %v6147
    %v6400 = vunpack.c.l.b16 %v6148
    %v6401 = vunpack.c.h.b16 %v6148
    %v6402 = vunpack.c.l.b16 %v6149
    %v6403 = vunpack.c.h.b16 %v6149
    %v6404 = vunpack.c.l.b16 %v6150
    %v6405 = vunpack.c.h.b16 %v6150
    %v6406 = vunpack.c.l.b16 %v6151
    %v6407 = vunpack.c.h.b16 %v6151
    %v6408 = vunpack.c.l.b16 %v6152
    %v6409 = vunpack.c.h.b16 %v6152
    %v6410 = vunpack.c.l.b16 %v6153
    %v6411 = vunpack.c.h.b16 %v6153
    %v6412 = vunpack.c.l.b16 %v6154
    %v6413 = vunpack.c.h.b16 %v6154
    %v6414 = vunpack.c.l.b16 %v6155
    %v6415 = vunpack.c.h.b16 %v6155
    %v6416 = vunpack.c.l.b16 %v6156
    %v6417 = vunpack.c.h.b16 %v6156
    %v6418 = vunpack.c.l.b16 %v6157
    %v6419 = vunpack.c.h.b16 %v6157
    %v6420 = vunpack.c.l.b16 %v6158
    %v6421 = vunpack.c.h.b16 %v6158
    %v6422 = vunpack.c.l.b16 %v6159
    %v6423 = vunpack.c.h.b16 %v6159
    %v6424 = vunpack.c.l.b16 %v6160
    %v6425 = vunpack.c.h.b16 %v6160
    %v6426 = vunpack.c.l.b16 %v6161
    %v6427 = vunpack.c.h.b16 %v6161
    %v6428 = vunpack.c.l.b16 %v6162
    %v6429 = vunpack.c.h.b16 %v6162
    %v6430 = vunpack.c.l.b16 %v6163
    %v6431 = vunpack.c.h.b16 %v6163
    %v6432 = vunpack.c.l.b16 %v6164
    %v6433 = vunpack.c.h.b16 %v6164
    %v6434 = vunpack.c.l.b16 %v6165
    %v6435 = vunpack.c.h.b16 %v6165
    %v6436 = vunpack.c.l.b16 %v6166
    %v6437 = vunpack.c.h.b16 %v6166
    %v6438 = vunpack.c.l.b16 %v6167
    %v6439 = vunpack.c.h.b16 %v6167
    %v6440 = vunpack.c.l.b16 %v6168
    %v6441 = vunpack.c.h.b16 %v6168
    %v6442 = vunpack.c.l.b16 %v6169
    %v6443 = vunpack.c.h.b16 %v6169
    %v6444 = vunpack.c.l.b16 %v6170
    %v6445 = vunpack.c.h.b16 %v6170
    %v6446 = vunpack.c.l.b16 %v6171
    %v6447 = vunpack.c.h.b16 %v6171
    %v6448 = vunpack.c.l.b16 %v6172
    %v6449 = vunpack.c.h.b16 %v6172
    %v6450 = vunpack.c.l.b16 %v6173
    %v6451 = vunpack.c.h.b16 %v6173
    %v6452 = vunpack.c.l.b16 %v6174
    %v6453 = vunpack.c.h.b16 %v6174
    %v6454 = vunpack.c.l.b16 %v6175
    %v6455 = vunpack.c.h.b16 %v6175
    %v6456 = vunpack.c.l.b16 %v6176
    %v6457 = vunpack.c.h.b16 %v6176
    %v6458 = vunpack.c.l.b16 %v6177
    %v6459 = vunpack.c.h.b16 %v6177
    %v6460 = vunpack.c.l.b16 %v6178
    %v6461 = vunpack.c.h.b16 %v6178
    %v6462 = vunpack.c.l.b16 %v6179
    %v6463 = vunpack.c.h.b16 %v6179
    %v6464 = vunpack.c.l.b16 %v6180
    %v6465 = vunpack.c.h.b16 %v6180
    %v6466 = vunpack.c.l.b16 %v6181
    %v6467 = vunpack.c.h.b16 %v6181
    %v6468 = vunpack.c.l.b16 %v6182
    %v6469 = vunpack.c.h.b16 %v6182
    %v6470 = vunpack.c.l.b16 %v6183
    %v6471 = vunpack.c.h.b16 %v6183
    %v6472 = vunpack.c.l.b16 %v6184
    %v6473 = vunpack.c.h.b16 %v6184
    %v6474 = vunpack.c.l.b16 %v6185
    %v6475 = vunpack.c.h.b16 %v6185
    %v6476 = vunpack.c.l.b16 %v6186
    %v6477 = vunpack.c.h.b16 %v6186
    %v6478 = vunpack.c.l.b16 %v6187
    %v6479 = vunpack.c.h.b16 %v6187
    %v6480 = vunpack.c.l.b16 %v6188
    %v6481 = vunpack.c.h.b16 %v6188
    %v6482 = vunpack.c.l.b16 %v6189
    %v6483 = vunpack.c.h.b16 %v6189
    %v6484 = vpack.c.b16 %v6290, %v6288
    %v6485 = vpack.c.b16 %v6291, %v6289
    %v6486 = vpack.c.b16 %v6294, %v6292
    %v6487 = vpack.c.b16 %v6295, %v6293
    %v6488 = vpack.c.b16 %v6298, %v6296
    %v6489 = vpack.c.b16 %v6299, %v6297
    %v6490 = vpack.c.b16 %v6302, %v6300
    %v6491 = vpack.c.b16 %v6303, %v6301
    %v6492 = vpack.c.b16 %v6306, %v6304
    %v6493 = vpack.c.b16 %v6307, %v6305
    %v6494 = vpack.c.b16 %v6310, %v6308
    %v6495 = vpack.c.b16 %v6311, %v6309
    %v6496 = vpack.c.b16 %v6314, %v6312
    %v6497 = vpack.c.b16 %v6315, %v6313
    %v6498 = vpack.c.b16 %v6318, %v6316
    %v6499 = vpack.c.b16 %v6319, %v6317
    %v6500 = vpack.c.b16 %v6322, %v6320
    %v6501 = vpack.c.b16 %v6323, %v6321
    %v6502 = vpack.c.b16 %v6326, %v6324
    %v6503 = vpack.c.b16 %v6327, %v6325
    %v6504 = vpack.c.b16 %v6330, %v6328
    %v6505 = vpack.c.b16 %v6331, %v6329
    %v6506 = vpack.c.b16 %v6334, %v6332
    %v6507 = vpack.c.b16 %v6335, %v6333
    %v6508 = vpack.c.b16 %v6338, %v6336
    %v6509 = vpack.c.b16 %v6339, %v6337
    %v6510 = vpack.c.b16 %v6342, %v6340
    %v6511 = vpack.c.b16 %v6343, %v6341
    %v6512 = vpack.c.b16 %v6346, %v6344
    %v6513 = vpack.c.b16 %v6347, %v6345
    %v6514 = vpack.c.b16 %v6350, %v6348
    %v6515 = vpack.c.b16 %v6351, %v6349
    %v6516 = vpack.c.b16 %v6354, %v6352
    %v6517 = vpack.c.b16 %v6355, %v6353
    %v6518 = vpack.c.b16 %v6358, %v6356
    %v6519 = vpack.c.b16 %v6359, %v6357
    %v6520 = vpack.c.b16 %v6362, %v6360
    %v6521 = vpack.c.b16 %v6363, %v6361
    %v6522 = vpack.c.b16 %v6366, %v6364
    %v6523 = vpack.c.b16 %v6367, %v6365
    %v6524 = vpack.c.b16 %v6370, %v6368
    %v6525 = vpack.c.b16 %v6371, %v6369
    %v6526 = vpack.c.b16 %v6374, %v6372
    %v6527 = vpack.c.b16 %v6375, %v6373
    %v6528 = vpack.c.b16 %v6378, %v6376
    %v6529 = vpack.c.b16 %v6379, %v6377
    %v6530 = vpack.c.b16 %v6382, %v6380
    %v6531 = vpack.c.b16 %v6383, %v6381
    %v6532 = vpack.c.b16 %v6386, %v6384
    %v6533 = vpack.c.b16 %v6387, %v6385
    %v6534 = vpack.c.b16 %v6390, %v6388
    %v6535 = vpack.c.b16 %v6391, %v6389
    %v6536 = vpack.c.b16 %v6394, %v6392
    %v6537 = vpack.c.b16 %v6395, %v6393
    %v6538 = vpack.c.b16 %v6398, %v6396
    %v6539 = vpack.c.b16 %v6399, %v6397
    %v6540 = vpack.c.b16 %v6402, %v6400
    %v6541 = vpack.c.b16 %v6403, %v6401
    %v6542 = vpack.c.b16 %v6406, %v6404
    %v6543 = vpack.c.b16 %v6407, %v6405
    %v6544 = vpack.c.b16 %v6410, %v6408
    %v6545 = vpack.c.b16 %v6411, %v6409
    %v6546 = vpack.c.b16 %v6414, %v6412
    %v6547 = vpack.c.b16 %v6415, %v6413
    %v6548 = vpack.c.b16 %v6418, %v6416
    %v6549 = vpack.c.b16 %v6419, %v6417
    %v6550 = vpack.c.b16 %v6422, %v6420
    %v6551 = vpack.c.b16 %v6423, %v6421
    %v6552 = vpack.c.b16 %v6426, %v6424
    %v6553 = vpack.c.b16 %v6427, %v6425
    %v6554 = vpack.c.b16 %v6430, %v6428
    %v6555 = vpack.c.b16 %v6431, %v6429
    %v6556 = vpack.c.b16 %v6434, %v6432
    %v6557 = vpack.c.b16 %v6435, %v6433
    %v6558 = vpack.c.b16 %v6438, %v6436
    %v6559 = vpack.c.b16 %v6439, %v6437
    %v6560 = vpack.c.b16 %v6442, %v6440
    %v6561 = vpack.c.b16 %v6443, %v6441
    %v6562 = vpack.c.b16 %v6446, %v6444
    %v6563 = vpack.c.b16 %v6447, %v6445
    %v6564 = vpack.c.b16 %v6450, %v6448
    %v6565 = vpack.c.b16 %v6451, %v6449
    %v6566 = vpack.c.b16 %v6454, %v6452
    %v6567 = vpack.c.b16 %v6455, %v6453
    %v6568 = vpack.c.b16 %v6458, %v6456
    %v6569 = vpack.c.b16 %v6459, %v6457
    %v6570 = vpack.c.b16 %v6462, %v6460
    %v6571 = vpack.c.b16 %v6463, %v6461
    %v6572 = vpack.c.b16 %v6466, %v6464
    %v6573 = vpack.c.b16 %v6467, %v6465
    %v6574 = vpack.c.b16 %v6470, %v6468
    %v6575 = vpack.c.b16 %v6471, %v6469
    %v6576 = vpack.c.b16 %v6474, %v6472
    %v6577 = vpack.c.b16 %v6475, %v6473
    %v6578 = vpack.c.b16 %v6478, %v6476
    %v6579 = vpack.c.b16 %v6479, %v6477
    %v6580 = vpack.c.b16 %v6482, %v6480
    %v6581 = vpack.c.b16 %v6483, %v6481
    %6680 = vmatprep.subr.bf16.mxu0 %v6485
    %6681 = vmatpush1.bf16.msra.mxu0 %v6484
    %6682 = vmatprep.subr.bf16.mxu0 %v6487
    %6683 = vmatpush1.bf16.msra.mxu0 %v6486
    %6684 = vmatprep.subr.bf16.mxu0 %v6489
    %6685 = vmatpush1.bf16.msra.mxu0 %v6488
    %6686 = vmatprep.subr.bf16.mxu0 %v6491
    %6687 = vmatpush1.bf16.msra.mxu0 %v6490
    %6688 = vmatprep.subr.bf16.mxu0 %v6493
    %6689 = vmatpush1.bf16.msra.mxu0 %v6492
    %6690 = vmatprep.subr.bf16.mxu0 %v6495
    %6691 = vmatpush1.bf16.msra.mxu0 %v6494
    %6692 = vmatprep.subr.bf16.mxu0 %v6497
    %6693 = vmatpush1.bf16.msra.mxu0 %v6496
    %6694 = vmatprep.subr.bf16.mxu0 %v6499
    %6695 = vmatpush1.bf16.msra.mxu0 %v6498
    %6696 = vmatprep.subr.bf16.mxu0 %v6501
    %6697 = vmatpush1.bf16.msra.mxu0 %v6500
    %6698 = vmatprep.subr.bf16.mxu0 %v6503
    %6699 = vmatpush1.bf16.msra.mxu0 %v6502
    %6700 = vmatprep.subr.bf16.mxu0 %v6505
    %6701 = vmatpush1.bf16.msra.mxu0 %v6504
    %6702 = vmatprep.subr.bf16.mxu0 %v6507
    %6703 = vmatpush1.bf16.msra.mxu0 %v6506
    %6704 = vmatprep.subr.bf16.mxu0 %v6509
    %6705 = vmatpush1.bf16.msra.mxu0 %v6508
    %6706 = vmatprep.subr.bf16.mxu0 %v6511
    %6707 = vmatpush1.bf16.msra.mxu0 %v6510
    %6708 = vmatprep.subr.bf16.mxu0 %v6513
    %6709 = vmatpush1.bf16.msra.mxu0 %v6512
    %6710 = vmatprep.subr.bf16.mxu0 %v6515
    %6711 = vmatpush1.bf16.msra.mxu0 %v6514
    %6712 = vmatprep.mubr.bf16.mxu0 %v136
    %6713 = vmatmul.mubr.bf16.gmra.mrb[0].mxu0 %v135
    %v6714 = vpop.f32.mrb[0].mxu0
    %v6715 = vadd.f32 0.0, %v6714
    %v6716 = vpop.f32.mrb[0].mxu0
    %v6717 = vadd.f32 0.0, %v6716
    %v6718 = vpop.f32.mrb[0].mxu0
    %v6719 = vpop.f32.mrb[0].mxu0
    %6720 = vdwg.mxu0
    %6721 = vmatprep.subr.bf16.mxu0 %v6517
    %6722 = vmatpush1.bf16.msra.mxu0 %v6516
    %6723 = vmatprep.subr.bf16.mxu0 %v6519
    %6724 = vmatpush1.bf16.msra.mxu0 %v6518
    %6725 = vmatprep.subr.bf16.mxu0 %v6521
    %6726 = vmatpush1.bf16.msra.mxu0 %v6520
    %6727 = vmatprep.subr.bf16.mxu0 %v6523
    %6728 = vmatpush1.bf16.msra.mxu0 %v6522
    %6729 = vmatprep.subr.bf16.mxu0 %v6525
    %6730 = vmatpush1.bf16.msra.mxu0 %v6524
    %6731 = vmatprep.subr.bf16.mxu0 %v6527
    %6732 = vmatpush1.bf16.msra.mxu0 %v6526
    %6733 = vmatprep.subr.bf16.mxu0 %v6529
    %6734 = vmatpush1.bf16.msra.mxu0 %v6528
    %6735 = vmatprep.subr.bf16.mxu0 %v6531
    %6736 = vmatpush1.bf16.msra.mxu0 %v6530
    %6737 = vmatprep.subr.bf16.mxu0 %v6533
    %6738 = vmatpush1.bf16.msra.mxu0 %v6532
    %6739 = vmatprep.subr.bf16.mxu0 %v6535
    %6740 = vmatpush1.bf16.msra.mxu0 %v6534
    %6741 = vmatprep.subr.bf16.mxu0 %v6537
    %6742 = vmatpush1.bf16.msra.mxu0 %v6536
    %6743 = vmatprep.subr.bf16.mxu0 %v6539
    %6744 = vmatpush1.bf16.msra.mxu0 %v6538
    %6745 = vmatprep.subr.bf16.mxu0 %v6541
    %6746 = vmatpush1.bf16.msra.mxu0 %v6540
    %6747 = vmatprep.subr.bf16.mxu0 %v6543
    %6748 = vmatpush1.bf16.msra.mxu0 %v6542
    %6749 = vmatprep.subr.bf16.mxu0 %v6545
    %6750 = vmatpush1.bf16.msra.mxu0 %v6544
    %6751 = vmatprep.subr.bf16.mxu0 %v6547
    %6752 = vmatpush1.bf16.msra.mxu0 %v6546
    %6753 = vmatprep.mubr.bf16.mxu0 %v138
    %6754 = vmatmul.mubr.bf16.gmra.mrb[0].mxu0 %v137
    %v6755 = vpop.f32.mrb[0].mxu0
    %v6756 = vadd.f32 %v6715, %v6755
    %v6757 = vpop.f32.mrb[0].mxu0
    %v6758 = vadd.f32 %v6717, %v6757
    %v6759 = vpop.f32.mrb[0].mxu0
    %v6760 = vpop.f32.mrb[0].mxu0
    %6761 = vdwg.mxu0
    %6762 = vmatprep.subr.bf16.mxu0 %v6549
    %6763 = vmatpush1.bf16.msra.mxu0 %v6548
    %6764 = vmatprep.subr.bf16.mxu0 %v6551
    %6765 = vmatpush1.bf16.msra.mxu0 %v6550
    %6766 = vmatprep.subr.bf16.mxu0 %v6553
    %6767 = vmatpush1.bf16.msra.mxu0 %v6552
    %6768 = vmatprep.subr.bf16.mxu0 %v6555
    %6769 = vmatpush1.bf16.msra.mxu0 %v6554
    %6770 = vmatprep.subr.bf16.mxu0 %v6557
    %6771 = vmatpush1.bf16.msra.mxu0 %v6556
    %6772 = vmatprep.subr.bf16.mxu0 %v6559
    %6773 = vmatpush1.bf16.msra.mxu0 %v6558
    %6774 = vmatprep.subr.bf16.mxu0 %v6561
    %6775 = vmatpush1.bf16.msra.mxu0 %v6560
    %6776 = vmatprep.subr.bf16.mxu0 %v6563
    %6777 = vmatpush1.bf16.msra.mxu0 %v6562
    %6778 = vmatprep.subr.bf16.mxu0 %v6565
    %6779 = vmatpush1.bf16.msra.mxu0 %v6564
    %6780 = vmatprep.subr.bf16.mxu0 %v6567
    %6781 = vmatpush1.bf16.msra.mxu0 %v6566
    %6782 = vmatprep.subr.bf16.mxu0 %v6569
    %6783 = vmatpush1.bf16.msra.mxu0 %v6568
    %6784 = vmatprep.subr.bf16.mxu0 %v6571
    %6785 = vmatpush1.bf16.msra.mxu0 %v6570
    %6786 = vmatprep.subr.bf16.mxu0 %v6573
    %6787 = vmatpush1.bf16.msra.mxu0 %v6572
    %6788 = vmatprep.subr.bf16.mxu0 %v6575
    %6789 = vmatpush1.bf16.msra.mxu0 %v6574
    %6790 = vmatprep.subr.bf16.mxu0 %v6577
    %6791 = vmatpush1.bf16.msra.mxu0 %v6576
    %6792 = vmatprep.subr.bf16.mxu0 %v6579
    %6793 = vmatpush1.bf16.msra.mxu0 %v6578
    %6794 = vmatprep.mubr.bf16.mxu0 %v140
    %6795 = vmatmul.mubr.bf16.gmra.mrb[0].mxu0 %v139
    %v6796 = vpop.f32.mrb[0].mxu0
    %v6797 = vadd.f32 %v6756, %v6796
    %v6798 = vpop.f32.mrb[0].mxu0
    %v6799 = vadd.f32 %v6758, %v6798
    %v6800 = vpop.f32.mrb[0].mxu0
    %v6801 = vpop.f32.mrb[0].mxu0
    %6802 = vdwg.mxu0
    %6803 = vmatprep.subr.bf16.mxu0 %v6581
    %6804 = vmatpush1.bf16.msra.mxu0 %v6580
    %6805 = vmatprep.subr.bf16.mxu0 0
    %6806 = vmatpush1.bf16.msra.mxu0 0
    %6807 = vmatprep.subr.bf16.mxu0 0
    %6808 = vmatpush1.bf16.msra.mxu0 0
    %6809 = vmatprep.subr.bf16.mxu0 0
    %6810 = vmatpush1.bf16.msra.mxu0 0
    %6811 = vmatprep.subr.bf16.mxu0 0
    %6812 = vmatpush1.bf16.msra.mxu0 0
    %6813 = vmatprep.subr.bf16.mxu0 0
    %6814 = vmatpush1.bf16.msra.mxu0 0
    %6815 = vmatprep.subr.bf16.mxu0 0
    %6816 = vmatpush1.bf16.msra.mxu0 0
    %6817 = vmatprep.subr.bf16.mxu0 0
    %6818 = vmatpush1.bf16.msra.mxu0 0
    %6819 = vmatprep.subr.bf16.mxu0 0
    %6820 = vmatpush1.bf16.msra.mxu0 0
    %6821 = vmatprep.subr.bf16.mxu0 0
    %6822 = vmatpush1.bf16.msra.mxu0 0
    %6823 = vmatprep.subr.bf16.mxu0 0
    %6824 = vmatpush1.bf16.msra.mxu0 0
    %6825 = vmatprep.subr.bf16.mxu0 0
    %6826 = vmatpush1.bf16.msra.mxu0 0
    %6827 = vmatprep.subr.bf16.mxu0 0
    %6828 = vmatpush1.bf16.msra.mxu0 0
    %6829 = vmatprep.subr.bf16.mxu0 0
    %6830 = vmatpush1.bf16.msra.mxu0 0
    %6831 = vmatprep.subr.bf16.mxu0 0
    %6832 = vmatpush1.bf16.msra.mxu0 0
    %6833 = vmatprep.subr.bf16.mxu0 0
    %6834 = vmatpush1.bf16.msra.mxu0 0
    %6835 = vmatprep.mubr.bf16.mxu0 0
    %6836 = vmatmul.mubr.bf16.gmra.mrb[0].mxu0 %v640
    %v6837 = vpop.f32.mrb[0].mxu0
    %v6838 = vadd.f32 %v6797, %v6837
    %v6839 = vpop.f32.mrb[0].mxu0
    %v6840 = vadd.f32 %v6799, %v6839
    %v6841 = vpop.f32.mrb[0].mxu0
    %v6842 = vpop.f32.mrb[0].mxu0
    %6843 = vdwg.mxu0
    %v6844 = vmax.f32 %v6089, %v6838
    %v6845 = vmax.f32 %v6090, %v6840
    %v6846 = vld [vmem:[%s2] sm:$0x3]
    %v6848 = vlaneseq
    %v6849 = vshrl.u32 %v6848, 7
    %v6850 = vsub.s32 0, %v6849
    %v6851 = vrot.slane %v6846, %v6850
    %v6852 = vlaneseq
    %v6853 = vshrl.u32 %v6852, 7
    %v6854 = vsub.s32 1, %v6853
    %v6855 = vrot.slane %v6846, %v6854
    %v6858 = vadd.f32 %v6844, %v6851
    %v6859 = vadd.f32 %v6845, %v6855
    %v6860 = vmax.f32 %v6858, 0.0
    %v6861 = vmax.f32 %v6859, 0.0
    %v6862 = vpack.c.bf16 %v6860, %v6860
    %v6863 = vpack.c.bf16 %v6861, %v6861
    %v6864 = vld [vmem:[%s3] sm:$0xf]
    %v6865 = vld [vmem:[%s3 + $0x4] sm:$0xf]
    %v6866 = vld [vmem:[%s3 + $0x8] sm:$0xf]
    %v6867 = vld [vmem:[%s3 + $0xc] sm:$0xf]
    %v6868 = vld [vmem:[%s3 + $0x10] sm:$0xf]
    %v6869 = vld [vmem:[%s3 + $0x14] sm:$0xf]
    %v6870 = vld [vmem:[%s3 + $0x18] sm:$0xf]
    %v6871 = vld [vmem:[%s3 + $0x1c] sm:$0xf]
    %v6872 = vld [vmem:[%s3 + $0x20] sm:$0xf]
    %v6873 = vld [vmem:[%s3 + $0x24] sm:$0xf]
    %v6874 = vld [vmem:[%s3 + $0x28] sm:$0xf]
    %v6875 = vld [vmem:[%s3 + $0x2c] sm:$0xf]
    %v6876 = vld [vmem:[%s3 + $0x30] sm:$0xf]
    %v6877 = vld [vmem:[%s3 + $0x34] sm:$0xf]
    %v6878 = vld [vmem:[%s3 + $0x38] sm:$0xf]
    %v6879 = vld [vmem:[%s3 + $0x3c] sm:$0xf]
    %v6880 = vld [vmem:[%s3 + $0x40] sm:$0xf]
    %v6881 = vld [vmem:[%s3 + $0x44] sm:$0xf]
    %v6882 = vld [vmem:[%s3 + $0x48] sm:$0xf]
    %v6883 = vld [vmem:[%s3 + $0x4c] sm:$0xf]
    %v6884 = vld [vmem:[%s3 + $0x50] sm:$0xf]
    %v6885 = vld [vmem:[%s3 + $0x54] sm:$0xf]
    %v6886 = vld [vmem:[%s3 + $0x58] sm:$0xf]
    %v6887 = vld [vmem:[%s3 + $0x5c] sm:$0xf]
    %v6888 = vld [vmem:[%s4] sm:$0x1]
    %v6890 = vlaneseq
    %v6891 = vshrl.u32 %v6890, 7
    %v6892 = vsub.s32 0, %v6891
    %v6893 = vrot.slane %v6888, %v6892
    %v6919 = vunpack.c.l.b16 %v6864
    %v6920 = vunpack.c.l.b16 %v6865
    %v6921 = vunpack.c.l.b16 %v6866
    %v6922 = vunpack.c.l.b16 %v6867
    %v6923 = vunpack.c.l.b16 %v6868
    %v6924 = vunpack.c.l.b16 %v6869
    %v6925 = vunpack.c.l.b16 %v6870
    %v6926 = vunpack.c.l.b16 %v6871
    %v6927 = vunpack.c.l.b16 %v6872
    %v6928 = vunpack.c.l.b16 %v6873
    %v6929 = vunpack.c.l.b16 %v6874
    %v6930 = vunpack.c.l.b16 %v6875
    %v6931 = vunpack.c.l.b16 %v6876
    %v6932 = vunpack.c.l.b16 %v6877
    %v6933 = vunpack.c.l.b16 %v6878
    %v6934 = vunpack.c.l.b16 %v6879
    %v6935 = vunpack.c.l.b16 %v6880
    %v6936 = vunpack.c.l.b16 %v6881
    %v6937 = vunpack.c.l.b16 %v6882
    %v6938 = vunpack.c.l.b16 %v6883
    %v6939 = vunpack.c.l.b16 %v6884
    %v6940 = vunpack.c.l.b16 %v6885
    %v6941 = vunpack.c.l.b16 %v6886
    %v6942 = vunpack.c.l.b16 %v6887
    %v6943 = vpack.c.b16 %v6920, %v6919
    %v6944 = vpack.c.b16 %v6922, %v6921
    %v6945 = vpack.c.b16 %v6924, %v6923
    %v6946 = vpack.c.b16 %v6926, %v6925
    %v6947 = vpack.c.b16 %v6928, %v6927
    %v6948 = vpack.c.b16 %v6930, %v6929
    %v6949 = vpack.c.b16 %v6932, %v6931
    %v6950 = vpack.c.b16 %v6934, %v6933
    %v6951 = vpack.c.b16 %v6936, %v6935
    %v6952 = vpack.c.b16 %v6938, %v6937
    %v6953 = vpack.c.b16 %v6940, %v6939
    %v6954 = vpack.c.b16 %v6942, %v6941
    %vm6967 = vcmask 523264
    %v6969 = vsel %vm6967, %v6863, 0
    %6971 = vmatprep.subr.bf16.mxu0 0
    %6972 = vmatpush1.bf16.msra.mxu0 %v6943
    %6973 = vmatprep.subr.bf16.mxu0 0
    %6974 = vmatpush1.bf16.msra.mxu0 %v6944
    %6975 = vmatprep.subr.bf16.mxu0 0
    %6976 = vmatpush1.bf16.msra.mxu0 %v6945
    %6977 = vmatprep.subr.bf16.mxu0 0
    %6978 = vmatpush1.bf16.msra.mxu0 %v6946
    %6979 = vmatprep.subr.bf16.mxu0 0
    %6980 = vmatpush1.bf16.msra.mxu0 %v6947
    %6981 = vmatprep.subr.bf16.mxu0 0
    %6982 = vmatpush1.bf16.msra.mxu0 %v6948
    %6983 = vmatprep.subr.bf16.mxu0 0
    %6984 = vmatpush1.bf16.msra.mxu0 %v6949
    %6985 = vmatprep.subr.bf16.mxu0 0
    %6986 = vmatpush1.bf16.msra.mxu0 %v6950
    %6987 = vmatprep.subr.bf16.mxu0 0
    %6988 = vmatpush1.bf16.msra.mxu0 %v6951
    %6989 = vmatprep.subr.bf16.mxu0 0
    %6990 = vmatpush1.bf16.msra.mxu0 %v6952
    %6991 = vmatprep.subr.bf16.mxu0 0
    %6992 = vmatpush1.bf16.msra.mxu0 %v6953
    %6993 = vmatprep.subr.bf16.mxu0 0
    %6994 = vmatpush1.bf16.msra.mxu0 %v6954
    %6995 = vmatprep.subr.bf16.mxu0 0
    %6996 = vmatpush1.bf16.msra.mxu0 0
    %6997 = vmatprep.subr.bf16.mxu0 0
    %6998 = vmatpush1.bf16.msra.mxu0 0
    %6999 = vmatprep.subr.bf16.mxu0 0
    %7000 = vmatpush1.bf16.msra.mxu0 0
    %7001 = vmatprep.subr.bf16.mxu0 0
    %7002 = vmatpush1.bf16.msra.mxu0 0
    %7003 = vmatprep.mubr.bf16.mxu0 %v6969
    %7004 = vmatmul.mubr.bf16.gmra.mrb[0].mxu0 %v6862
    %v7005 = vpop.f32.mrb[0].mxu0
    %v7006 = vadd.f32 %v6893, %v7005
    %v7007 = vpop.f32.mrb[0].mxu0
    %v7008 = vpop.f32.mrb[0].mxu0
    %v7009 = vpop.f32.mrb[0].mxu0
    %7010 = vdwg.mxu0
    %vm7011 = vcmask 80896
    %v7012 = vsel %vm7011, %v7006, -inf
    %7013 = vmax.xlane.f32.xlu0 %v7012
    %v7014 = vpop.xlane.xlu0 %7013
    %v7015 = vsub.f32 %v7006, %v7014
    %v7016 = vmul.f32 %v7015, 1.442695
    %v7017 = vpow.pop %v7016
    %v7018 = vsel %vm7011, %v7017, 0.0
    %7019 = vadd.xlane.f32.xlu0 %v7018
    %v7020 = vpop.xlane.xlu0 %7019
    %v7021 = vlog2.pop %v7020
    %v7022 = vmul.f32 %v7021, 0.6931472
    %v7023 = vsub.f32 %v7015, %v7022
    %7024 = vst.msk [vmem:[#allocation2] sm:$0xff] %vm7011, %v7023
    // Predicated region
    $region22: #{tpu_custom_call.1} parent=1 // pred_check
      _
    $region23: #{tpu_custom_call.1} parent=1 // pred_check_branch
      %7026 = sbr.rel (0) target = $region25
    $region24: #{tpu_custom_call.1} parent=1 // pred_region
      %s7028 = ssub.s32 128, 128
      %7029 = vsyncadd [#allocation3], %s7028
      %s7031 = sshll.u32 [#allocation2], 4
      %s7032 = int_to_ptr.vmem [resolvable:$true] %s7031
      %7034 = dma.vmem_to_hbm [thread:$0]  %s7032, 128, %s5, [#allocation3]
    $region25: #{tpu_custom_call.1} parent=1 // pred_fallthru
      _
    // Predicated region
    $region26: #{tpu_custom_call.1} parent=1 // pred_check
      _
    $region27: #{tpu_custom_call.1} parent=1 // pred_check_branch
      %7036 = sbr.rel (0) target = $region29
    $region28: #{tpu_custom_call.1} parent=1 // pred_region
      %7037 = dma.done [#allocation3], 128
    $region29: #{tpu_custom_call.1} parent=1 // pred_fallthru
      _
    %7038 = vsyncpa [#allocation3], 1

</llo_original>
